<compile_context>
chip_gen: v7x
topology: tpu7x:2x2x1
jax: 0.10.0
libtpu: 0.0.40
codegen_flags: <defaults>
</compile_context>

<pallas_src>
import functools

import jax
import jax.numpy as jnp
from jax.experimental import pallas as pl
from jax.experimental.pallas import tpu as pltpu


def _round_up(x, m):
    return ((x + m - 1) // m) * m


def wordchar_kernel(ids_ref, ww_ref, h_ref, w2_ref, b2l_ref, o_ref):
    """Fused word + char-head embedding for one tile of rows.

    ids_ref : [tn, 1+L] int32   column 0 = word id, columns 1..L = char ids
    ww_ref  : [Vp, Ep]  bf16    word table (bias-free Linear, weight transposed)
    h_ref   : [Cp, Ep]  bf16    H = relu(W1 + b1)  (layer-1 bias+ReLU folded in)
    w2_ref  : [Ep, Ep]  bf16    head layer 2 weight
    b2l_ref : [1, Ep]   f32     L * b2 (hoisted L-sum of the layer-2 bias)
    o_ref   : [tn, Ep]  bf16
    """
    tn = ids_ref.shape[0]
    L = ids_ref.shape[1] - 1
    Vp = ww_ref.shape[0]
    Cp = h_ref.shape[0]

    ids = ids_ref[...]                                                   # [tn, 1+L] int32

    # ---- word path: in-kernel one-hot (no HBM one-hot), bf16 MXU matmul, f32 acc ----
    iota_v = jax.lax.broadcasted_iota(jnp.int32, (tn, Vp), 1)
    w_oh = (iota_v == ids[:, 0:1]).astype(jnp.bfloat16)                  # [tn, Vp]
    word_e = jnp.dot(w_oh, ww_ref[...], preferred_element_type=jnp.float32)   # [tn, Ep] f32

    # ---- char path: per-row character counts @ relu(W1 + b1) ----
    # counts[r, c] = #{l : char_id[r, l] == c}; exact small integers, one reused iota.
    iota_c = jax.lax.broadcasted_iota(jnp.int32, (tn, Cp), 1)
    counts = jnp.zeros((tn, Cp), jnp.float32)
    for l in range(L):                                                    # static, unrolled
        counts = counts + (iota_c == ids[:, l + 1:l + 2]).astype(jnp.float32)

    s = jnp.dot(counts.astype(jnp.bfloat16), h_ref[...],
                preferred_element_type=jnp.float32)                      # [tn, Ep] f32
    char_e = jnp.dot(s.astype(jnp.bfloat16), w2_ref[...],
                     preferred_element_type=jnp.float32) + b2l_ref[...]  # [tn, Ep] f32

    o_ref[...] = (word_e + char_e).astype(o_ref.dtype)


@functools.partial(jax.jit, static_argnames=("tn", "out_dtype"))
def word_char_embed(word_ids, char_ids, params, *, tn=512, out_dtype=jnp.bfloat16):
    """word_ids: int32 [B, S]; char_ids: int32 [B, S, L]; returns [B, S, E] (out_dtype)."""
    ww, w1, b1, w2, b2 = params
    B, S = word_ids.shape
    L = char_ids.shape[-1]
    V, E = ww.shape
    C = w1.shape[0]
    N = B * S

    # Lane-dense padding of feature dims (zero rows/cols contribute exactly 0; sliced off below).
    Ep = _round_up(E, 128)
    Cp = _round_up(C, 128)
    Vp = _round_up(V, 128)

    # Fold layer-1 bias + ReLU into a table: H = relu(W1 + b1). Exact, since the reference
    # applies ReLU per character before the L-sum.
    h = jnp.maximum(w1.astype(jnp.float32) + b1.astype(jnp.float32).reshape(1, E), 0.0)

    ww_p = jnp.zeros((Vp, Ep), jnp.bfloat16).at[:V, :E].set(ww.astype(jnp.bfloat16))
    h_p = jnp.zeros((Cp, Ep), jnp.bfloat16).at[:C, :E].set(h.astype(jnp.bfloat16))
    w2_p = jnp.zeros((Ep, Ep), jnp.bfloat16).at[:E, :E].set(w2.astype(jnp.bfloat16))
    b2l_p = jnp.zeros((1, Ep), jnp.float32).at[:, :E].set(
        float(L) * b2.astype(jnp.float32).reshape(1, E))

    # Row tiling: clamp tn to the (8-aligned) row count, pad the tail (padded rows use id 0
    # and are sliced away). Single fused int32 id buffer: [word_id | char_ids].
    tn_eff = min(tn, max(_round_up(N, 8), 8))
    Np = _round_up(N, tn_eff)
    ids = jnp.zeros((Np, 1 + L), jnp.int32)
    ids = ids.at[:N, 0].set(word_ids.reshape(N).astype(jnp.int32))
    ids = ids.at[:N, 1:].set(char_ids.reshape(N, L).astype(jnp.int32))

    grid = (Np // tn_eff,)
    out = pl.pallas_call(
        wordchar_kernel,
        out_shape=jax.ShapeDtypeStruct((Np, Ep), out_dtype),
        grid_spec=pltpu.PrefetchScalarGridSpec(
            num_scalar_prefetch=0,
            grid=grid,
            in_specs=[
                pl.BlockSpec((tn_eff, 1 + L), lambda i: (i, 0)),   # fused ids
                pl.BlockSpec((Vp, Ep), lambda i: (0, 0)),          # Ww (resident)
                pl.BlockSpec((Cp, Ep), lambda i: (0, 0)),          # H = relu(W1+b1)
                pl.BlockSpec((Ep, Ep), lambda i: (0, 0)),          # W2
                pl.BlockSpec((1, Ep), lambda i: (0, 0)),           # L * b2
            ],
            out_specs=pl.BlockSpec((tn_eff, Ep), lambda i: (i, 0)),
        ),
        compiler_params=pltpu.CompilerParams(
            dimension_semantics=("parallel",),
            vmem_limit_bytes=16 * 1024 * 1024,
        ),
    )(ids, ww_p, h_p, w2_p, b2l_p)

    return out[:N, :E].reshape(B, S, E)


def reference(word_ids, char_ids, params):
    """Pure-JAX f32 reference of the same semantics."""
    ww, w1, b1, w2, b2 = params
    V, E = ww.shape
    C = w1.shape[0]
    wo = jax.nn.one_hot(word_ids, V, dtype=jnp.float32)          # [B, S, V]
    word_e = wo @ ww                                             # [B, S, E]
    co = jax.nn.one_hot(char_ids, C, dtype=jnp.float32)          # [B, S, L, C]
    h = jnp.maximum(co @ w1 + b1[0], 0.0)
    h = h @ w2 + b2[0]
    char_e = h.sum(axis=2)                                       # [B, S, E]
    return word_e + char_e


if __name__ == "__main__":
    # Small, deterministic shapes consistent with the module.
    B, S, L = 4, 64, 8          # batch, words per sentence, chars per word
    V, C, E = 512, 32, 128      # num_words, num_chars, embed_dim

    key = jax.random.PRNGKey(0)
    k_wid, k_cid, k_ww, k_w1, k_b1, k_w2, k_b2 = jax.random.split(key, 7)

    word_ids = jax.random.randint(k_wid, (B, S), 0, V, dtype=jnp.int32)
    char_ids = jax.random.randint(k_cid, (B, S, L), 0, C, dtype=jnp.int32)

    # Parameters stored transposed [in, out] (PyTorch Linear weight is [out, in]).
    ww = jax.random.normal(k_ww, (V, E), jnp.float32) * 0.05   # word Linear, bias=False
    w1 = jax.random.normal(k_w1, (C, E), jnp.float32) * 0.05   # head Linear 1
    b1 = jax.random.normal(k_b1, (1, E), jnp.float32) * 0.05
    w2 = jax.random.normal(k_w2, (E, E), jnp.float32) * 0.05   # head Linear 2
    b2 = jax.random.normal(k_b2, (1, E), jnp.float32) * 0.05
    params = (ww, w1, b1, w2, b2)

    out = word_char_embed(word_ids, char_ids, params, tn=512, out_dtype=jnp.bfloat16)
    out = jax.block_until_ready(out)

    ref = reference(word_ids, char_ids, params)
    assert out.shape == (B, S, E), out.shape
    # bf16 MXU operands + bf16 output + reassociated L-sum => relaxed tolerance.
    assert jnp.allclose(out.astype(jnp.float32), ref, atol=2e-2, rtol=2e-2), \
        "mismatch vs pure-JAX reference"

    print("KERNEL_OK")
</pallas_src>

<mosaic_0001>
module attributes {stable_mosaic.version = 11 : i64} {
  func.func @wordchar_kernel(%arg0: i32, %arg1: memref<256x9xi32, #tpu.memory_space<vmem>>, %arg2: memref<512x128xbf16, #tpu.memory_space<vmem>>, %arg3: memref<128x128xbf16, #tpu.memory_space<vmem>>, %arg4: memref<128x128xbf16, #tpu.memory_space<vmem>>, %arg5: memref<1x128xf32, #tpu.memory_space<vmem>>, %arg6: memref<256x128xbf16, #tpu.memory_space<vmem>>) attributes {dimension_semantics = [#tpu.dimension_semantics<parallel>], iteration_bounds = array<i64: 1>, scalar_prefetch = 0 : i64, scratch_operands = 0 : i64, tpu.core_type = #tpu.core_type<tc>, window_params = [{transform_indices = @transform_0, window_bounds = array<i64: 256, 9>}, {pipeline_mode = #tpu.pipeline_mode<synchronous>, transform_indices = @transform_1, window_bounds = array<i64: 512, 128>}, {pipeline_mode = #tpu.pipeline_mode<synchronous>, transform_indices = @transform_2, window_bounds = array<i64: 128, 128>}, {pipeline_mode = #tpu.pipeline_mode<synchronous>, transform_indices = @transform_3, window_bounds = array<i64: 128, 128>}, {pipeline_mode = #tpu.pipeline_mode<synchronous>, transform_indices = @transform_4, window_bounds = array<i64: 1, 128>}, {transform_indices = @transform_5, window_bounds = array<i64: 256, 128>}]} {
    %c0 = arith.constant 0 : index
    %c0_0 = arith.constant 0 : index
    %0 = vector.load %arg1[%c0, %c0_0] : memref<256x9xi32, #tpu.memory_space<vmem>>, vector<256x9xi32>
    %1 = tpu.iota {dimensions = array<i32: 1>} : vector<256x512xi32>
    %2 = vector.extract_strided_slice %0 {offsets = [0, 0], sizes = [256, 1], strides = [1, 1]} : vector<256x9xi32> to vector<256x1xi32>
    %3 = vector.broadcast %2 : vector<256x1xi32> to vector<256x512xi32>
    %4 = arith.cmpi eq, %1, %3 : vector<256x512xi32>
    %5 = arith.extui %4 : vector<256x512xi1> to vector<256x512xi32>
    %6 = arith.sitofp %5 : vector<256x512xi32> to vector<256x512xf32>
    %7 = arith.truncf %6 : vector<256x512xf32> to vector<256x512xbf16>
    %c0_1 = arith.constant 0 : index
    %c0_2 = arith.constant 0 : index
    %8 = vector.load %arg2[%c0_1, %c0_2] : memref<512x128xbf16, #tpu.memory_space<vmem>>, vector<512x128xbf16>
    %cst = arith.constant dense<0.000000e+00> : vector<256x128xf32>
    %9 = tpu.matmul %7, %8, %cst {dimension_numbers = #tpu.dot_dimension_numbers<[1], [0], [0], [1], [0, 0, 1, 1], [], []>} : vector<256x512xbf16>, vector<512x128xbf16>, vector<256x128xf32> -> vector<256x128xf32>
    %10 = tpu.iota {dimensions = array<i32: 1>} : vector<256x128xi32>
    %cst_3 = arith.constant 0.000000e+00 : f32
    %11 = vector.broadcast %cst_3 : f32 to vector<256x128xf32>
    %12 = vector.extract_strided_slice %0 {offsets = [0, 1], sizes = [256, 1], strides = [1, 1]} : vector<256x9xi32> to vector<256x1xi32>
    %13 = vector.broadcast %12 : vector<256x1xi32> to vector<256x128xi32>
    %14 = arith.cmpi eq, %10, %13 : vector<256x128xi32>
    %15 = arith.extui %14 : vector<256x128xi1> to vector<256x128xi32>
    %16 = arith.sitofp %15 : vector<256x128xi32> to vector<256x128xf32>
    %17 = arith.addf %11, %16 : vector<256x128xf32>
    %18 = vector.extract_strided_slice %0 {offsets = [0, 2], sizes = [256, 1], strides = [1, 1]} : vector<256x9xi32> to vector<256x1xi32>
    %19 = vector.broadcast %18 : vector<256x1xi32> to vector<256x128xi32>
    %20 = arith.cmpi eq, %10, %19 : vector<256x128xi32>
    %21 = arith.extui %20 : vector<256x128xi1> to vector<256x128xi32>
    %22 = arith.sitofp %21 : vector<256x128xi32> to vector<256x128xf32>
    %23 = arith.addf %17, %22 : vector<256x128xf32>
    %24 = vector.extract_strided_slice %0 {offsets = [0, 3], sizes = [256, 1], strides = [1, 1]} : vector<256x9xi32> to vector<256x1xi32>
    %25 = vector.broadcast %24 : vector<256x1xi32> to vector<256x128xi32>
    %26 = arith.cmpi eq, %10, %25 : vector<256x128xi32>
    %27 = arith.extui %26 : vector<256x128xi1> to vector<256x128xi32>
    %28 = arith.sitofp %27 : vector<256x128xi32> to vector<256x128xf32>
    %29 = arith.addf %23, %28 : vector<256x128xf32>
    %30 = vector.extract_strided_slice %0 {offsets = [0, 4], sizes = [256, 1], strides = [1, 1]} : vector<256x9xi32> to vector<256x1xi32>
    %31 = vector.broadcast %30 : vector<256x1xi32> to vector<256x128xi32>
    %32 = arith.cmpi eq, %10, %31 : vector<256x128xi32>
    %33 = arith.extui %32 : vector<256x128xi1> to vector<256x128xi32>
    %34 = arith.sitofp %33 : vector<256x128xi32> to vector<256x128xf32>
    %35 = arith.addf %29, %34 : vector<256x128xf32>
    %36 = vector.extract_strided_slice %0 {offsets = [0, 5], sizes = [256, 1], strides = [1, 1]} : vector<256x9xi32> to vector<256x1xi32>
    %37 = vector.broadcast %36 : vector<256x1xi32> to vector<256x128xi32>
    %38 = arith.cmpi eq, %10, %37 : vector<256x128xi32>
    %39 = arith.extui %38 : vector<256x128xi1> to vector<256x128xi32>
    %40 = arith.sitofp %39 : vector<256x128xi32> to vector<256x128xf32>
    %41 = arith.addf %35, %40 : vector<256x128xf32>
    %42 = vector.extract_strided_slice %0 {offsets = [0, 6], sizes = [256, 1], strides = [1, 1]} : vector<256x9xi32> to vector<256x1xi32>
    %43 = vector.broadcast %42 : vector<256x1xi32> to vector<256x128xi32>
    %44 = arith.cmpi eq, %10, %43 : vector<256x128xi32>
    %45 = arith.extui %44 : vector<256x128xi1> to vector<256x128xi32>
    %46 = arith.sitofp %45 : vector<256x128xi32> to vector<256x128xf32>
    %47 = arith.addf %41, %46 : vector<256x128xf32>
    %48 = vector.extract_strided_slice %0 {offsets = [0, 7], sizes = [256, 1], strides = [1, 1]} : vector<256x9xi32> to vector<256x1xi32>
    %49 = vector.broadcast %48 : vector<256x1xi32> to vector<256x128xi32>
    %50 = arith.cmpi eq, %10, %49 : vector<256x128xi32>
    %51 = arith.extui %50 : vector<256x128xi1> to vector<256x128xi32>
    %52 = arith.sitofp %51 : vector<256x128xi32> to vector<256x128xf32>
    %53 = arith.addf %47, %52 : vector<256x128xf32>
    %54 = vector.extract_strided_slice %0 {offsets = [0, 8], sizes = [256, 1], strides = [1, 1]} : vector<256x9xi32> to vector<256x1xi32>
    %55 = vector.broadcast %54 : vector<256x1xi32> to vector<256x128xi32>
    %56 = arith.cmpi eq, %10, %55 : vector<256x128xi32>
    %57 = arith.extui %56 : vector<256x128xi1> to vector<256x128xi32>
    %58 = arith.sitofp %57 : vector<256x128xi32> to vector<256x128xf32>
    %59 = arith.addf %53, %58 : vector<256x128xf32>
    %60 = arith.truncf %59 : vector<256x128xf32> to vector<256x128xbf16>
    %c0_4 = arith.constant 0 : index
    %c0_5 = arith.constant 0 : index
    %61 = vector.load %arg3[%c0_4, %c0_5] : memref<128x128xbf16, #tpu.memory_space<vmem>>, vector<128x128xbf16>
    %cst_6 = arith.constant dense<0.000000e+00> : vector<256x128xf32>
    %62 = tpu.matmul %60, %61, %cst_6 {dimension_numbers = #tpu.dot_dimension_numbers<[1], [0], [0], [1], [0, 0, 1, 1], [], []>} : vector<256x128xbf16>, vector<128x128xbf16>, vector<256x128xf32> -> vector<256x128xf32>
    %63 = arith.truncf %62 : vector<256x128xf32> to vector<256x128xbf16>
    %c0_7 = arith.constant 0 : index
    %c0_8 = arith.constant 0 : index
    %64 = vector.load %arg4[%c0_7, %c0_8] : memref<128x128xbf16, #tpu.memory_space<vmem>>, vector<128x128xbf16>
    %cst_9 = arith.constant dense<0.000000e+00> : vector<256x128xf32>
    %65 = tpu.matmul %63, %64, %cst_9 {dimension_numbers = #tpu.dot_dimension_numbers<[1], [0], [0], [1], [0, 0, 1, 1], [], []>} : vector<256x128xbf16>, vector<128x128xbf16>, vector<256x128xf32> -> vector<256x128xf32>
    %c0_10 = arith.constant 0 : index
    %c0_11 = arith.constant 0 : index
    %66 = vector.load %arg5[%c0_10, %c0_11] : memref<1x128xf32, #tpu.memory_space<vmem>>, vector<1x128xf32>
    %67 = vector.broadcast %66 : vector<1x128xf32> to vector<256x128xf32>
    %68 = arith.addf %65, %67 : vector<256x128xf32>
    %69 = arith.addf %9, %68 : vector<256x128xf32>
    %70 = arith.truncf %69 : vector<256x128xf32> to vector<256x128xbf16>
    %c0_12 = arith.constant 0 : index
    %c0_13 = arith.constant 0 : index
    %71 = vector.load %arg6[%c0_12, %c0_13] : memref<256x128xbf16, #tpu.memory_space<vmem>>, vector<256x128xbf16>
    tpu.vector_store %arg6[%c0_12, %c0_13], %70 {strides = array<i32>} : memref<256x128xbf16, #tpu.memory_space<vmem>>, vector<256x128xbf16>,
    return
  }
  func.func @transform_0(%arg0: i32) -> (i32, i32) {
    %c0_i32 = arith.constant 0 : i32
    %c0_i32_0 = arith.constant 0 : i32
    return %arg0, %c0_i32 : i32, i32
  }
  func.func @transform_1(%arg0: i32) -> (i32, i32) {
    %c0_i32 = arith.constant 0 : i32
    %c0_i32_0 = arith.constant 0 : i32
    %c0_i32_1 = arith.constant 0 : i32
    return %c0_i32, %c0_i32_0 : i32, i32
  }
  func.func @transform_2(%arg0: i32) -> (i32, i32) {
    %c0_i32 = arith.constant 0 : i32
    %c0_i32_0 = arith.constant 0 : i32
    %c0_i32_1 = arith.constant 0 : i32
    return %c0_i32, %c0_i32_0 : i32, i32
  }
  func.func @transform_3(%arg0: i32) -> (i32, i32) {
    %c0_i32 = arith.constant 0 : i32
    %c0_i32_0 = arith.constant 0 : i32
    %c0_i32_1 = arith.constant 0 : i32
    return %c0_i32, %c0_i32_0 : i32, i32
  }
  func.func @transform_4(%arg0: i32) -> (i32, i32) {
    %c0_i32 = arith.constant 0 : i32
    %c0_i32_0 = arith.constant 0 : i32
    %c0_i32_1 = arith.constant 0 : i32
    return %c0_i32, %c0_i32_0 : i32, i32
  }
  func.func @transform_5(%arg0: i32) -> (i32, i32) {
    %c0_i32 = arith.constant 0 : i32
    %c0_i32_0 = arith.constant 0 : i32
    return %arg0, %c0_i32 : i32, i32
  }
}

</mosaic_0001>

<llo_original>
// kernel: word_char_embed.1
$region0: #{word_char_embed.1}
  #allocation0 [shape = 'u32[]', space=smem, size = 0x4, offset = 0x4, fixed_abs, tag = 'smem constant byte address 0x4 - core index']
  #allocation1 [shape = 'u32[144,128]{1,0:T(1,128)}', space=vmem, size = 0x12000, scoped, tag = 'internal scratch']
  %s0 = inlined_call_operand.vmem [shape: s32[256,9], index: 0, kind: input, shape index: {}]
  %s1 = inlined_call_operand.vmem [shape: bf16[512,128], index: 1, kind: input, shape index: {}]
  %s2 = inlined_call_operand.vmem [shape: bf16[128,128], index: 2, kind: input, shape index: {}]
  %s3 = inlined_call_operand.vmem [shape: bf16[128,128], index: 3, kind: input, shape index: {}]
  %s4 = inlined_call_operand.vmem [shape: f32[1,128], index: 4, kind: input, shape index: {}]
  %s5 = inlined_call_operand.hbm [shape: bf16[256,128], index: 5, kind: output, shape index: {}]
  %s6 = sld [smem:[#allocation0]]
  $region30: #{word_char_embed.1} parent=0
    _
  %s8 = ssub.s32 1, %s6
  %s9 = scalar_select 0, %s8, %s6
  $region1: #{word_char_embed.1} parent=0
    #allocation2 [shape = 'u8[65536]{0}', space=vmem, size = 0x10000, scoped, tag = 'output window, operand 0, single buffered']
    #allocation3 [shape = 's32[1]{0}', space=sflag, size = 0x4, scoped, tag = 'scoped memory for word_char_embed.1']
    %10 = vsyncpa [#allocation3], 0
    // Predicated region
    $region2: #{word_char_embed.1} parent=1 // pred_check
      _
    $region3: #{word_char_embed.1} parent=1 // pred_check_branch
      %12 = sbr.rel (0) target = $region5
    $region4: #{word_char_embed.1} parent=1 // pred_region
      _
    $region5: #{word_char_embed.1} parent=1 // pred_fallthru
      _
    // Predicated region
    $region6: #{word_char_embed.1} parent=1 // pred_check
      _
    $region7: #{word_char_embed.1} parent=1 // pred_check_branch
      %14 = sbr.rel (0) target = $region9
    $region8: #{word_char_embed.1} parent=1 // pred_region
      _
    $region9: #{word_char_embed.1} parent=1 // pred_fallthru
      _
    // Predicated region
    $region10: #{word_char_embed.1} parent=1 // pred_check
      _
    $region11: #{word_char_embed.1} parent=1 // pred_check_branch
      %16 = sbr.rel (0) target = $region13
    $region12: #{word_char_embed.1} parent=1 // pred_region
      _
    $region13: #{word_char_embed.1} parent=1 // pred_fallthru
      _
    // Predicated region
    $region14: #{word_char_embed.1} parent=1 // pred_check
      _
    $region15: #{word_char_embed.1} parent=1 // pred_check_branch
      %18 = sbr.rel (0) target = $region17
    $region16: #{word_char_embed.1} parent=1 // pred_region
      _
    $region17: #{word_char_embed.1} parent=1 // pred_fallthru
      _
    // Predicated region
    $region18: #{word_char_embed.1} parent=1 // pred_check
      _
    $region19: #{word_char_embed.1} parent=1 // pred_check_branch
      %20 = sbr.rel (0) target = $region21
    $region20: #{word_char_embed.1} parent=1 // pred_region
      _
    $region21: #{word_char_embed.1} parent=1 // pred_fallthru
      _
    %v22 = vld [vmem:[%s0] sm:$0xff]
    %v23 = vld [vmem:[%s0 + $0x8] sm:$0xff]
    %v24 = vld [vmem:[%s0 + $0x10] sm:$0xff]
    %v25 = vld [vmem:[%s0 + $0x18] sm:$0xff]
    %v26 = vld [vmem:[%s0 + $0x20] sm:$0xff]
    %v27 = vld [vmem:[%s0 + $0x28] sm:$0xff]
    %v28 = vld [vmem:[%s0 + $0x30] sm:$0xff]
    %v29 = vld [vmem:[%s0 + $0x38] sm:$0xff]
    %v30 = vld [vmem:[%s0 + $0x40] sm:$0xff]
    %v31 = vld [vmem:[%s0 + $0x48] sm:$0xff]
    %v32 = vld [vmem:[%s0 + $0x50] sm:$0xff]
    %v33 = vld [vmem:[%s0 + $0x58] sm:$0xff]
    %v34 = vld [vmem:[%s0 + $0x60] sm:$0xff]
    %v35 = vld [vmem:[%s0 + $0x68] sm:$0xff]
    %v36 = vld [vmem:[%s0 + $0x70] sm:$0xff]
    %v37 = vld [vmem:[%s0 + $0x78] sm:$0xff]
    %v38 = vld [vmem:[%s0 + $0x80] sm:$0xff]
    %v39 = vld [vmem:[%s0 + $0x88] sm:$0xff]
    %v40 = vld [vmem:[%s0 + $0x90] sm:$0xff]
    %v41 = vld [vmem:[%s0 + $0x98] sm:$0xff]
    %v42 = vld [vmem:[%s0 + $0xa0] sm:$0xff]
    %v43 = vld [vmem:[%s0 + $0xa8] sm:$0xff]
    %v44 = vld [vmem:[%s0 + $0xb0] sm:$0xff]
    %v45 = vld [vmem:[%s0 + $0xb8] sm:$0xff]
    %v46 = vld [vmem:[%s0 + $0xc0] sm:$0xff]
    %v47 = vld [vmem:[%s0 + $0xc8] sm:$0xff]
    %v48 = vld [vmem:[%s0 + $0xd0] sm:$0xff]
    %v49 = vld [vmem:[%s0 + $0xd8] sm:$0xff]
    %v50 = vld [vmem:[%s0 + $0xe0] sm:$0xff]
    %v51 = vld [vmem:[%s0 + $0xe8] sm:$0xff]
    %v52 = vld [vmem:[%s0 + $0xf0] sm:$0xff]
    %v53 = vld [vmem:[%s0 + $0xf8] sm:$0xff]
    %v54 = vlaneseq
    %v55 = vand.u32 %v54, 127
    %v56 = vadd.s32 %v55, 128
    %v57 = vadd.s32 %v55, 256
    %v58 = vadd.s32 %v55, 384
    %59 = vset.pattern.permute.xlu0 0
    %60 = vperm.xlu0 %59, %v22
    %v61 = vpop.permute.xlu0 %60
    %62 = vset.pattern.permute.xlu0 0
    %63 = vperm.xlu0 %62, %v23
    %v64 = vpop.permute.xlu0 %63
    %65 = vset.pattern.permute.xlu0 0
    %66 = vperm.xlu0 %65, %v24
    %v67 = vpop.permute.xlu0 %66
    %68 = vset.pattern.permute.xlu0 0
    %69 = vperm.xlu0 %68, %v25
    %v70 = vpop.permute.xlu0 %69
    %71 = vset.pattern.permute.xlu0 0
    %72 = vperm.xlu0 %71, %v26
    %v73 = vpop.permute.xlu0 %72
    %74 = vset.pattern.permute.xlu0 0
    %75 = vperm.xlu0 %74, %v27
    %v76 = vpop.permute.xlu0 %75
    %77 = vset.pattern.permute.xlu0 0
    %78 = vperm.xlu0 %77, %v28
    %v79 = vpop.permute.xlu0 %78
    %80 = vset.pattern.permute.xlu0 0
    %81 = vperm.xlu0 %80, %v29
    %v82 = vpop.permute.xlu0 %81
    %83 = vset.pattern.permute.xlu0 0
    %84 = vperm.xlu0 %83, %v30
    %v85 = vpop.permute.xlu0 %84
    %86 = vset.pattern.permute.xlu0 0
    %87 = vperm.xlu0 %86, %v31
    %v88 = vpop.permute.xlu0 %87
    %89 = vset.pattern.permute.xlu0 0
    %90 = vperm.xlu0 %89, %v32
    %v91 = vpop.permute.xlu0 %90
    %92 = vset.pattern.permute.xlu0 0
    %93 = vperm.xlu0 %92, %v33
    %v94 = vpop.permute.xlu0 %93
    %95 = vset.pattern.permute.xlu0 0
    %96 = vperm.xlu0 %95, %v34
    %v97 = vpop.permute.xlu0 %96
    %98 = vset.pattern.permute.xlu0 0
    %99 = vperm.xlu0 %98, %v35
    %v100 = vpop.permute.xlu0 %99
    %101 = vset.pattern.permute.xlu0 0
    %102 = vperm.xlu0 %101, %v36
    %v103 = vpop.permute.xlu0 %102
    %104 = vset.pattern.permute.xlu0 0
    %105 = vperm.xlu0 %104, %v37
    %v106 = vpop.permute.xlu0 %105
    %107 = vset.pattern.permute.xlu0 0
    %108 = vperm.xlu0 %107, %v38
    %v109 = vpop.permute.xlu0 %108
    %110 = vset.pattern.permute.xlu0 0
    %111 = vperm.xlu0 %110, %v39
    %v112 = vpop.permute.xlu0 %111
    %113 = vset.pattern.permute.xlu0 0
    %114 = vperm.xlu0 %113, %v40
    %v115 = vpop.permute.xlu0 %114
    %116 = vset.pattern.permute.xlu0 0
    %117 = vperm.xlu0 %116, %v41
    %v118 = vpop.permute.xlu0 %117
    %119 = vset.pattern.permute.xlu0 0
    %120 = vperm.xlu0 %119, %v42
    %v121 = vpop.permute.xlu0 %120
    %122 = vset.pattern.permute.xlu0 0
    %123 = vperm.xlu0 %122, %v43
    %v124 = vpop.permute.xlu0 %123
    %125 = vset.pattern.permute.xlu0 0
    %126 = vperm.xlu0 %125, %v44
    %v127 = vpop.permute.xlu0 %126
    %128 = vset.pattern.permute.xlu0 0
    %129 = vperm.xlu0 %128, %v45
    %v130 = vpop.permute.xlu0 %129
    %131 = vset.pattern.permute.xlu0 0
    %132 = vperm.xlu0 %131, %v46
    %v133 = vpop.permute.xlu0 %132
    %134 = vset.pattern.permute.xlu0 0
    %135 = vperm.xlu0 %134, %v47
    %v136 = vpop.permute.xlu0 %135
    %137 = vset.pattern.permute.xlu0 0
    %138 = vperm.xlu0 %137, %v48
    %v139 = vpop.permute.xlu0 %138
    %140 = vset.pattern.permute.xlu0 0
    %141 = vperm.xlu0 %140, %v49
    %v142 = vpop.permute.xlu0 %141
    %143 = vset.pattern.permute.xlu0 0
    %144 = vperm.xlu0 %143, %v50
    %v145 = vpop.permute.xlu0 %144
    %146 = vset.pattern.permute.xlu0 0
    %147 = vperm.xlu0 %146, %v51
    %v148 = vpop.permute.xlu0 %147
    %149 = vset.pattern.permute.xlu0 0
    %150 = vperm.xlu0 %149, %v52
    %v151 = vpop.permute.xlu0 %150
    %152 = vset.pattern.permute.xlu0 0
    %153 = vperm.xlu0 %152, %v53
    %v154 = vpop.permute.xlu0 %153
    %vm155 = vcmp.eq.s32.totalorder %v55, %v61
    %vm156 = vcmp.eq.s32.totalorder %v56, %v61
    %vm157 = vcmp.eq.s32.totalorder %v57, %v61
    %vm158 = vcmp.eq.s32.totalorder %v58, %v61
    %vm159 = vcmp.eq.s32.totalorder %v55, %v64
    %vm160 = vcmp.eq.s32.totalorder %v56, %v64
    %vm161 = vcmp.eq.s32.totalorder %v57, %v64
    %vm162 = vcmp.eq.s32.totalorder %v58, %v64
    %vm163 = vcmp.eq.s32.totalorder %v55, %v67
    %vm164 = vcmp.eq.s32.totalorder %v56, %v67
    %vm165 = vcmp.eq.s32.totalorder %v57, %v67
    %vm166 = vcmp.eq.s32.totalorder %v58, %v67
    %vm167 = vcmp.eq.s32.totalorder %v55, %v70
    %vm168 = vcmp.eq.s32.totalorder %v56, %v70
    %vm169 = vcmp.eq.s32.totalorder %v57, %v70
    %vm170 = vcmp.eq.s32.totalorder %v58, %v70
    %vm171 = vcmp.eq.s32.totalorder %v55, %v73
    %vm172 = vcmp.eq.s32.totalorder %v56, %v73
    %vm173 = vcmp.eq.s32.totalorder %v57, %v73
    %vm174 = vcmp.eq.s32.totalorder %v58, %v73
    %vm175 = vcmp.eq.s32.totalorder %v55, %v76
    %vm176 = vcmp.eq.s32.totalorder %v56, %v76
    %vm177 = vcmp.eq.s32.totalorder %v57, %v76
    %vm178 = vcmp.eq.s32.totalorder %v58, %v76
    %vm179 = vcmp.eq.s32.totalorder %v55, %v79
    %vm180 = vcmp.eq.s32.totalorder %v56, %v79
    %vm181 = vcmp.eq.s32.totalorder %v57, %v79
    %vm182 = vcmp.eq.s32.totalorder %v58, %v79
    %vm183 = vcmp.eq.s32.totalorder %v55, %v82
    %vm184 = vcmp.eq.s32.totalorder %v56, %v82
    %vm185 = vcmp.eq.s32.totalorder %v57, %v82
    %vm186 = vcmp.eq.s32.totalorder %v58, %v82
    %vm187 = vcmp.eq.s32.totalorder %v55, %v85
    %vm188 = vcmp.eq.s32.totalorder %v56, %v85
    %vm189 = vcmp.eq.s32.totalorder %v57, %v85
    %vm190 = vcmp.eq.s32.totalorder %v58, %v85
    %vm191 = vcmp.eq.s32.totalorder %v55, %v88
    %vm192 = vcmp.eq.s32.totalorder %v56, %v88
    %vm193 = vcmp.eq.s32.totalorder %v57, %v88
    %vm194 = vcmp.eq.s32.totalorder %v58, %v88
    %vm195 = vcmp.eq.s32.totalorder %v55, %v91
    %vm196 = vcmp.eq.s32.totalorder %v56, %v91
    %vm197 = vcmp.eq.s32.totalorder %v57, %v91
    %vm198 = vcmp.eq.s32.totalorder %v58, %v91
    %vm199 = vcmp.eq.s32.totalorder %v55, %v94
    %vm200 = vcmp.eq.s32.totalorder %v56, %v94
    %vm201 = vcmp.eq.s32.totalorder %v57, %v94
    %vm202 = vcmp.eq.s32.totalorder %v58, %v94
    %vm203 = vcmp.eq.s32.totalorder %v55, %v97
    %vm204 = vcmp.eq.s32.totalorder %v56, %v97
    %vm205 = vcmp.eq.s32.totalorder %v57, %v97
    %vm206 = vcmp.eq.s32.totalorder %v58, %v97
    %vm207 = vcmp.eq.s32.totalorder %v55, %v100
    %vm208 = vcmp.eq.s32.totalorder %v56, %v100
    %vm209 = vcmp.eq.s32.totalorder %v57, %v100
    %vm210 = vcmp.eq.s32.totalorder %v58, %v100
    %vm211 = vcmp.eq.s32.totalorder %v55, %v103
    %vm212 = vcmp.eq.s32.totalorder %v56, %v103
    %vm213 = vcmp.eq.s32.totalorder %v57, %v103
    %vm214 = vcmp.eq.s32.totalorder %v58, %v103
    %vm215 = vcmp.eq.s32.totalorder %v55, %v106
    %vm216 = vcmp.eq.s32.totalorder %v56, %v106
    %vm217 = vcmp.eq.s32.totalorder %v57, %v106
    %vm218 = vcmp.eq.s32.totalorder %v58, %v106
    %vm219 = vcmp.eq.s32.totalorder %v55, %v109
    %vm220 = vcmp.eq.s32.totalorder %v56, %v109
    %vm221 = vcmp.eq.s32.totalorder %v57, %v109
    %vm222 = vcmp.eq.s32.totalorder %v58, %v109
    %vm223 = vcmp.eq.s32.totalorder %v55, %v112
    %vm224 = vcmp.eq.s32.totalorder %v56, %v112
    %vm225 = vcmp.eq.s32.totalorder %v57, %v112
    %vm226 = vcmp.eq.s32.totalorder %v58, %v112
    %vm227 = vcmp.eq.s32.totalorder %v55, %v115
    %vm228 = vcmp.eq.s32.totalorder %v56, %v115
    %vm229 = vcmp.eq.s32.totalorder %v57, %v115
    %vm230 = vcmp.eq.s32.totalorder %v58, %v115
    %vm231 = vcmp.eq.s32.totalorder %v55, %v118
    %vm232 = vcmp.eq.s32.totalorder %v56, %v118
    %vm233 = vcmp.eq.s32.totalorder %v57, %v118
    %vm234 = vcmp.eq.s32.totalorder %v58, %v118
    %vm235 = vcmp.eq.s32.totalorder %v55, %v121
    %vm236 = vcmp.eq.s32.totalorder %v56, %v121
    %vm237 = vcmp.eq.s32.totalorder %v57, %v121
    %vm238 = vcmp.eq.s32.totalorder %v58, %v121
    %vm239 = vcmp.eq.s32.totalorder %v55, %v124
    %vm240 = vcmp.eq.s32.totalorder %v56, %v124
    %vm241 = vcmp.eq.s32.totalorder %v57, %v124
    %vm242 = vcmp.eq.s32.totalorder %v58, %v124
    %vm243 = vcmp.eq.s32.totalorder %v55, %v127
    %vm244 = vcmp.eq.s32.totalorder %v56, %v127
    %vm245 = vcmp.eq.s32.totalorder %v57, %v127
    %vm246 = vcmp.eq.s32.totalorder %v58, %v127
    %vm247 = vcmp.eq.s32.totalorder %v55, %v130
    %vm248 = vcmp.eq.s32.totalorder %v56, %v130
    %vm249 = vcmp.eq.s32.totalorder %v57, %v130
    %vm250 = vcmp.eq.s32.totalorder %v58, %v130
    %vm251 = vcmp.eq.s32.totalorder %v55, %v133
    %vm252 = vcmp.eq.s32.totalorder %v56, %v133
    %vm253 = vcmp.eq.s32.totalorder %v57, %v133
    %vm254 = vcmp.eq.s32.totalorder %v58, %v133
    %vm255 = vcmp.eq.s32.totalorder %v55, %v136
    %vm256 = vcmp.eq.s32.totalorder %v56, %v136
    %vm257 = vcmp.eq.s32.totalorder %v57, %v136
    %vm258 = vcmp.eq.s32.totalorder %v58, %v136
    %vm259 = vcmp.eq.s32.totalorder %v55, %v139
    %vm260 = vcmp.eq.s32.totalorder %v56, %v139
    %vm261 = vcmp.eq.s32.totalorder %v57, %v139
    %vm262 = vcmp.eq.s32.totalorder %v58, %v139
    %vm263 = vcmp.eq.s32.totalorder %v55, %v142
    %vm264 = vcmp.eq.s32.totalorder %v56, %v142
    %vm265 = vcmp.eq.s32.totalorder %v57, %v142
    %vm266 = vcmp.eq.s32.totalorder %v58, %v142
    %vm267 = vcmp.eq.s32.totalorder %v55, %v145
    %vm268 = vcmp.eq.s32.totalorder %v56, %v145
    %vm269 = vcmp.eq.s32.totalorder %v57, %v145
    %vm270 = vcmp.eq.s32.totalorder %v58, %v145
    %vm271 = vcmp.eq.s32.totalorder %v55, %v148
    %vm272 = vcmp.eq.s32.totalorder %v56, %v148
    %vm273 = vcmp.eq.s32.totalorder %v57, %v148
    %vm274 = vcmp.eq.s32.totalorder %v58, %v148
    %vm275 = vcmp.eq.s32.totalorder %v55, %v151
    %vm276 = vcmp.eq.s32.totalorder %v56, %v151
    %vm277 = vcmp.eq.s32.totalorder %v57, %v151
    %vm278 = vcmp.eq.s32.totalorder %v58, %v151
    %vm279 = vcmp.eq.s32.totalorder %v55, %v154
    %vm280 = vcmp.eq.s32.totalorder %v56, %v154
    %vm281 = vcmp.eq.s32.totalorder %v57, %v154
    %vm282 = vcmp.eq.s32.totalorder %v58, %v154
    %v283 = vsel %vm155, 1, 0
    %v284 = vsel %vm156, 1, 0
    %v285 = vsel %vm157, 1, 0
    %v286 = vsel %vm158, 1, 0
    %v287 = vsel %vm159, 1, 0
    %v288 = vsel %vm160, 1, 0
    %v289 = vsel %vm161, 1, 0
    %v290 = vsel %vm162, 1, 0
    %v291 = vsel %vm163, 1, 0
    %v292 = vsel %vm164, 1, 0
    %v293 = vsel %vm165, 1, 0
    %v294 = vsel %vm166, 1, 0
    %v295 = vsel %vm167, 1, 0
    %v296 = vsel %vm168, 1, 0
    %v297 = vsel %vm169, 1, 0
    %v298 = vsel %vm170, 1, 0
    %v299 = vsel %vm171, 1, 0
    %v300 = vsel %vm172, 1, 0
    %v301 = vsel %vm173, 1, 0
    %v302 = vsel %vm174, 1, 0
    %v303 = vsel %vm175, 1, 0
    %v304 = vsel %vm176, 1, 0
    %v305 = vsel %vm177, 1, 0
    %v306 = vsel %vm178, 1, 0
    %v307 = vsel %vm179, 1, 0
    %v308 = vsel %vm180, 1, 0
    %v309 = vsel %vm181, 1, 0
    %v310 = vsel %vm182, 1, 0
    %v311 = vsel %vm183, 1, 0
    %v312 = vsel %vm184, 1, 0
    %v313 = vsel %vm185, 1, 0
    %v314 = vsel %vm186, 1, 0
    %v315 = vsel %vm187, 1, 0
    %v316 = vsel %vm188, 1, 0
    %v317 = vsel %vm189, 1, 0
    %v318 = vsel %vm190, 1, 0
    %v319 = vsel %vm191, 1, 0
    %v320 = vsel %vm192, 1, 0
    %v321 = vsel %vm193, 1, 0
    %v322 = vsel %vm194, 1, 0
    %v323 = vsel %vm195, 1, 0
    %v324 = vsel %vm196, 1, 0
    %v325 = vsel %vm197, 1, 0
    %v326 = vsel %vm198, 1, 0
    %v327 = vsel %vm199, 1, 0
    %v328 = vsel %vm200, 1, 0
    %v329 = vsel %vm201, 1, 0
    %v330 = vsel %vm202, 1, 0
    %v331 = vsel %vm203, 1, 0
    %v332 = vsel %vm204, 1, 0
    %v333 = vsel %vm205, 1, 0
    %v334 = vsel %vm206, 1, 0
    %v335 = vsel %vm207, 1, 0
    %v336 = vsel %vm208, 1, 0
    %v337 = vsel %vm209, 1, 0
    %v338 = vsel %vm210, 1, 0
    %v339 = vsel %vm211, 1, 0
    %v340 = vsel %vm212, 1, 0
    %v341 = vsel %vm213, 1, 0
    %v342 = vsel %vm214, 1, 0
    %v343 = vsel %vm215, 1, 0
    %v344 = vsel %vm216, 1, 0
    %v345 = vsel %vm217, 1, 0
    %v346 = vsel %vm218, 1, 0
    %v347 = vsel %vm219, 1, 0
    %v348 = vsel %vm220, 1, 0
    %v349 = vsel %vm221, 1, 0
    %v350 = vsel %vm222, 1, 0
    %v351 = vsel %vm223, 1, 0
    %v352 = vsel %vm224, 1, 0
    %v353 = vsel %vm225, 1, 0
    %v354 = vsel %vm226, 1, 0
    %v355 = vsel %vm227, 1, 0
    %v356 = vsel %vm228, 1, 0
    %v357 = vsel %vm229, 1, 0
    %v358 = vsel %vm230, 1, 0
    %v359 = vsel %vm231, 1, 0
    %v360 = vsel %vm232, 1, 0
    %v361 = vsel %vm233, 1, 0
    %v362 = vsel %vm234, 1, 0
    %v363 = vsel %vm235, 1, 0
    %v364 = vsel %vm236, 1, 0
    %v365 = vsel %vm237, 1, 0
    %v366 = vsel %vm238, 1, 0
    %v367 = vsel %vm239, 1, 0
    %v368 = vsel %vm240, 1, 0
    %v369 = vsel %vm241, 1, 0
    %v370 = vsel %vm242, 1, 0
    %v371 = vsel %vm243, 1, 0
    %v372 = vsel %vm244, 1, 0
    %v373 = vsel %vm245, 1, 0
    %v374 = vsel %vm246, 1, 0
    %v375 = vsel %vm247, 1, 0
    %v376 = vsel %vm248, 1, 0
    %v377 = vsel %vm249, 1, 0
    %v378 = vsel %vm250, 1, 0
    %v379 = vsel %vm251, 1, 0
    %v380 = vsel %vm252, 1, 0
    %v381 = vsel %vm253, 1, 0
    %v382 = vsel %vm254, 1, 0
    %v383 = vsel %vm255, 1, 0
    %v384 = vsel %vm256, 1, 0
    %v385 = vsel %vm257, 1, 0
    %v386 = vsel %vm258, 1, 0
    %v387 = vsel %vm259, 1, 0
    %v388 = vsel %vm260, 1, 0
    %v389 = vsel %vm261, 1, 0
    %v390 = vsel %vm262, 1, 0
    %v391 = vsel %vm263, 1, 0
    %v392 = vsel %vm264, 1, 0
    %v393 = vsel %vm265, 1, 0
    %v394 = vsel %vm266, 1, 0
    %v395 = vsel %vm267, 1, 0
    %v396 = vsel %vm268, 1, 0
    %v397 = vsel %vm269, 1, 0
    %v398 = vsel %vm270, 1, 0
    %v399 = vsel %vm271, 1, 0
    %v400 = vsel %vm272, 1, 0
    %v401 = vsel %vm273, 1, 0
    %v402 = vsel %vm274, 1, 0
    %v403 = vsel %vm275, 1, 0
    %v404 = vsel %vm276, 1, 0
    %v405 = vsel %vm277, 1, 0
    %v406 = vsel %vm278, 1, 0
    %v407 = vsel %vm279, 1, 0
    %v408 = vsel %vm280, 1, 0
    %v409 = vsel %vm281, 1, 0
    %v410 = vsel %vm282, 1, 0
    %v411 = vcvt.s32.f32 %v283
    %v412 = vcvt.s32.f32 %v284
    %v413 = vcvt.s32.f32 %v285
    %v414 = vcvt.s32.f32 %v286
    %v415 = vcvt.s32.f32 %v287
    %v416 = vcvt.s32.f32 %v288
    %v417 = vcvt.s32.f32 %v289
    %v418 = vcvt.s32.f32 %v290
    %v419 = vcvt.s32.f32 %v291
    %v420 = vcvt.s32.f32 %v292
    %v421 = vcvt.s32.f32 %v293
    %v422 = vcvt.s32.f32 %v294
    %v423 = vcvt.s32.f32 %v295
    %v424 = vcvt.s32.f32 %v296
    %v425 = vcvt.s32.f32 %v297
    %v426 = vcvt.s32.f32 %v298
    %v427 = vcvt.s32.f32 %v299
    %v428 = vcvt.s32.f32 %v300
    %v429 = vcvt.s32.f32 %v301
    %v430 = vcvt.s32.f32 %v302
    %v431 = vcvt.s32.f32 %v303
    %v432 = vcvt.s32.f32 %v304
    %v433 = vcvt.s32.f32 %v305
    %v434 = vcvt.s32.f32 %v306
    %v435 = vcvt.s32.f32 %v307
    %v436 = vcvt.s32.f32 %v308
    %v437 = vcvt.s32.f32 %v309
    %v438 = vcvt.s32.f32 %v310
    %v439 = vcvt.s32.f32 %v311
    %v440 = vcvt.s32.f32 %v312
    %v441 = vcvt.s32.f32 %v313
    %v442 = vcvt.s32.f32 %v314
    %v443 = vcvt.s32.f32 %v315
    %v444 = vcvt.s32.f32 %v316
    %v445 = vcvt.s32.f32 %v317
    %v446 = vcvt.s32.f32 %v318
    %v447 = vcvt.s32.f32 %v319
    %v448 = vcvt.s32.f32 %v320
    %v449 = vcvt.s32.f32 %v321
    %v450 = vcvt.s32.f32 %v322
    %v451 = vcvt.s32.f32 %v323
    %v452 = vcvt.s32.f32 %v324
    %v453 = vcvt.s32.f32 %v325
    %v454 = vcvt.s32.f32 %v326
    %v455 = vcvt.s32.f32 %v327
    %v456 = vcvt.s32.f32 %v328
    %v457 = vcvt.s32.f32 %v329
    %v458 = vcvt.s32.f32 %v330
    %v459 = vcvt.s32.f32 %v331
    %v460 = vcvt.s32.f32 %v332
    %v461 = vcvt.s32.f32 %v333
    %v462 = vcvt.s32.f32 %v334
    %v463 = vcvt.s32.f32 %v335
    %v464 = vcvt.s32.f32 %v336
    %v465 = vcvt.s32.f32 %v337
    %v466 = vcvt.s32.f32 %v338
    %v467 = vcvt.s32.f32 %v339
    %v468 = vcvt.s32.f32 %v340
    %v469 = vcvt.s32.f32 %v341
    %v470 = vcvt.s32.f32 %v342
    %v471 = vcvt.s32.f32 %v343
    %v472 = vcvt.s32.f32 %v344
    %v473 = vcvt.s32.f32 %v345
    %v474 = vcvt.s32.f32 %v346
    %v475 = vcvt.s32.f32 %v347
    %v476 = vcvt.s32.f32 %v348
    %v477 = vcvt.s32.f32 %v349
    %v478 = vcvt.s32.f32 %v350
    %v479 = vcvt.s32.f32 %v351
    %v480 = vcvt.s32.f32 %v352
    %v481 = vcvt.s32.f32 %v353
    %v482 = vcvt.s32.f32 %v354
    %v483 = vcvt.s32.f32 %v355
    %v484 = vcvt.s32.f32 %v356
    %v485 = vcvt.s32.f32 %v357
    %v486 = vcvt.s32.f32 %v358
    %v487 = vcvt.s32.f32 %v359
    %v488 = vcvt.s32.f32 %v360
    %v489 = vcvt.s32.f32 %v361
    %v490 = vcvt.s32.f32 %v362
    %v491 = vcvt.s32.f32 %v363
    %v492 = vcvt.s32.f32 %v364
    %v493 = vcvt.s32.f32 %v365
    %v494 = vcvt.s32.f32 %v366
    %v495 = vcvt.s32.f32 %v367
    %v496 = vcvt.s32.f32 %v368
    %v497 = vcvt.s32.f32 %v369
    %v498 = vcvt.s32.f32 %v370
    %v499 = vcvt.s32.f32 %v371
    %v500 = vcvt.s32.f32 %v372
    %v501 = vcvt.s32.f32 %v373
    %v502 = vcvt.s32.f32 %v374
    %v503 = vcvt.s32.f32 %v375
    %v504 = vcvt.s32.f32 %v376
    %v505 = vcvt.s32.f32 %v377
    %v506 = vcvt.s32.f32 %v378
    %v507 = vcvt.s32.f32 %v379
    %v508 = vcvt.s32.f32 %v380
    %v509 = vcvt.s32.f32 %v381
    %v510 = vcvt.s32.f32 %v382
    %v511 = vcvt.s32.f32 %v383
    %v512 = vcvt.s32.f32 %v384
    %v513 = vcvt.s32.f32 %v385
    %v514 = vcvt.s32.f32 %v386
    %v515 = vcvt.s32.f32 %v387
    %v516 = vcvt.s32.f32 %v388
    %v517 = vcvt.s32.f32 %v389
    %v518 = vcvt.s32.f32 %v390
    %v519 = vcvt.s32.f32 %v391
    %v520 = vcvt.s32.f32 %v392
    %v521 = vcvt.s32.f32 %v393
    %v522 = vcvt.s32.f32 %v394
    %v523 = vcvt.s32.f32 %v395
    %v524 = vcvt.s32.f32 %v396
    %v525 = vcvt.s32.f32 %v397
    %v526 = vcvt.s32.f32 %v398
    %v527 = vcvt.s32.f32 %v399
    %v528 = vcvt.s32.f32 %v400
    %v529 = vcvt.s32.f32 %v401
    %v530 = vcvt.s32.f32 %v402
    %v531 = vcvt.s32.f32 %v403
    %v532 = vcvt.s32.f32 %v404
    %v533 = vcvt.s32.f32 %v405
    %v534 = vcvt.s32.f32 %v406
    %v535 = vcvt.s32.f32 %v407
    %v536 = vcvt.s32.f32 %v408
    %v537 = vcvt.s32.f32 %v409
    %v538 = vcvt.s32.f32 %v410
    %v539 = vpack.c.bf16 %v415, %v411
    %v540 = vpack.c.bf16 %v416, %v412
    %v541 = vpack.c.bf16 %v417, %v413
    %v542 = vpack.c.bf16 %v418, %v414
    %v543 = vpack.c.bf16 %v423, %v419
    %v544 = vpack.c.bf16 %v424, %v420
    %v545 = vpack.c.bf16 %v425, %v421
    %v546 = vpack.c.bf16 %v426, %v422
    %v547 = vpack.c.bf16 %v431, %v427
    %v548 = vpack.c.bf16 %v432, %v428
    %v549 = vpack.c.bf16 %v433, %v429
    %v550 = vpack.c.bf16 %v434, %v430
    %v551 = vpack.c.bf16 %v439, %v435
    %v552 = vpack.c.bf16 %v440, %v436
    %v553 = vpack.c.bf16 %v441, %v437
    %v554 = vpack.c.bf16 %v442, %v438
    %v555 = vpack.c.bf16 %v447, %v443
    %v556 = vpack.c.bf16 %v448, %v444
    %v557 = vpack.c.bf16 %v449, %v445
    %v558 = vpack.c.bf16 %v450, %v446
    %v559 = vpack.c.bf16 %v455, %v451
    %v560 = vpack.c.bf16 %v456, %v452
    %v561 = vpack.c.bf16 %v457, %v453
    %v562 = vpack.c.bf16 %v458, %v454
    %v563 = vpack.c.bf16 %v463, %v459
    %v564 = vpack.c.bf16 %v464, %v460
    %v565 = vpack.c.bf16 %v465, %v461
    %v566 = vpack.c.bf16 %v466, %v462
    %v567 = vpack.c.bf16 %v471, %v467
    %v568 = vpack.c.bf16 %v472, %v468
    %v569 = vpack.c.bf16 %v473, %v469
    %v570 = vpack.c.bf16 %v474, %v470
    %v571 = vpack.c.bf16 %v479, %v475
    %v572 = vpack.c.bf16 %v480, %v476
    %v573 = vpack.c.bf16 %v481, %v477
    %v574 = vpack.c.bf16 %v482, %v478
    %v575 = vpack.c.bf16 %v487, %v483
    %v576 = vpack.c.bf16 %v488, %v484
    %v577 = vpack.c.bf16 %v489, %v485
    %v578 = vpack.c.bf16 %v490, %v486
    %v579 = vpack.c.bf16 %v495, %v491
    %v580 = vpack.c.bf16 %v496, %v492
    %v581 = vpack.c.bf16 %v497, %v493
    %v582 = vpack.c.bf16 %v498, %v494
    %v583 = vpack.c.bf16 %v503, %v499
    %v584 = vpack.c.bf16 %v504, %v500
    %v585 = vpack.c.bf16 %v505, %v501
    %v586 = vpack.c.bf16 %v506, %v502
    %v587 = vpack.c.bf16 %v511, %v507
    %v588 = vpack.c.bf16 %v512, %v508
    %v589 = vpack.c.bf16 %v513, %v509
    %v590 = vpack.c.bf16 %v514, %v510
    %v591 = vpack.c.bf16 %v519, %v515
    %v592 = vpack.c.bf16 %v520, %v516
    %v593 = vpack.c.bf16 %v521, %v517
    %v594 = vpack.c.bf16 %v522, %v518
    %v595 = vpack.c.bf16 %v527, %v523
    %v596 = vpack.c.bf16 %v528, %v524
    %v597 = vpack.c.bf16 %v529, %v525
    %v598 = vpack.c.bf16 %v530, %v526
    %v599 = vpack.c.bf16 %v535, %v531
    %v600 = vpack.c.bf16 %v536, %v532
    %v601 = vpack.c.bf16 %v537, %v533
    %v602 = vpack.c.bf16 %v538, %v534
    %v603 = vld [vmem:[%s1] sm:$0xf]
    %v604 = vld [vmem:[%s1 + $0x4] sm:$0xf]
    %v605 = vld [vmem:[%s1 + $0x8] sm:$0xf]
    %v606 = vld [vmem:[%s1 + $0xc] sm:$0xf]
    %v607 = vld [vmem:[%s1 + $0x10] sm:$0xf]
    %v608 = vld [vmem:[%s1 + $0x14] sm:$0xf]
    %v609 = vld [vmem:[%s1 + $0x18] sm:$0xf]
    %v610 = vld [vmem:[%s1 + $0x1c] sm:$0xf]
    %v611 = vld [vmem:[%s1 + $0x20] sm:$0xf]
    %v612 = vld [vmem:[%s1 + $0x24] sm:$0xf]
    %v613 = vld [vmem:[%s1 + $0x28] sm:$0xf]
    %v614 = vld [vmem:[%s1 + $0x2c] sm:$0xf]
    %v615 = vld [vmem:[%s1 + $0x30] sm:$0xf]
    %v616 = vld [vmem:[%s1 + $0x34] sm:$0xf]
    %v617 = vld [vmem:[%s1 + $0x38] sm:$0xf]
    %v618 = vld [vmem:[%s1 + $0x3c] sm:$0xf]
    %v619 = vld [vmem:[%s1 + $0x40] sm:$0xf]
    %v620 = vld [vmem:[%s1 + $0x44] sm:$0xf]
    %v621 = vld [vmem:[%s1 + $0x48] sm:$0xf]
    %v622 = vld [vmem:[%s1 + $0x4c] sm:$0xf]
    %v623 = vld [vmem:[%s1 + $0x50] sm:$0xf]
    %v624 = vld [vmem:[%s1 + $0x54] sm:$0xf]
    %v625 = vld [vmem:[%s1 + $0x58] sm:$0xf]
    %v626 = vld [vmem:[%s1 + $0x5c] sm:$0xf]
    %v627 = vld [vmem:[%s1 + $0x60] sm:$0xf]
    %v628 = vld [vmem:[%s1 + $0x64] sm:$0xf]
    %v629 = vld [vmem:[%s1 + $0x68] sm:$0xf]
    %v630 = vld [vmem:[%s1 + $0x6c] sm:$0xf]
    %v631 = vld [vmem:[%s1 + $0x70] sm:$0xf]
    %v632 = vld [vmem:[%s1 + $0x74] sm:$0xf]
    %v633 = vld [vmem:[%s1 + $0x78] sm:$0xf]
    %v634 = vld [vmem:[%s1 + $0x7c] sm:$0xf]
    %v635 = vld [vmem:[%s1 + $0x80] sm:$0xf]
    %v636 = vld [vmem:[%s1 + $0x84] sm:$0xf]
    %v637 = vld [vmem:[%s1 + $0x88] sm:$0xf]
    %v638 = vld [vmem:[%s1 + $0x8c] sm:$0xf]
    %v639 = vld [vmem:[%s1 + $0x90] sm:$0xf]
    %v640 = vld [vmem:[%s1 + $0x94] sm:$0xf]
    %v641 = vld [vmem:[%s1 + $0x98] sm:$0xf]
    %v642 = vld [vmem:[%s1 + $0x9c] sm:$0xf]
    %v643 = vld [vmem:[%s1 + $0xa0] sm:$0xf]
    %v644 = vld [vmem:[%s1 + $0xa4] sm:$0xf]
    %v645 = vld [vmem:[%s1 + $0xa8] sm:$0xf]
    %v646 = vld [vmem:[%s1 + $0xac] sm:$0xf]
    %v647 = vld [vmem:[%s1 + $0xb0] sm:$0xf]
    %v648 = vld [vmem:[%s1 + $0xb4] sm:$0xf]
    %v649 = vld [vmem:[%s1 + $0xb8] sm:$0xf]
    %v650 = vld [vmem:[%s1 + $0xbc] sm:$0xf]
    %v651 = vld [vmem:[%s1 + $0xc0] sm:$0xf]
    %v652 = vld [vmem:[%s1 + $0xc4] sm:$0xf]
    %v653 = vld [vmem:[%s1 + $0xc8] sm:$0xf]
    %v654 = vld [vmem:[%s1 + $0xcc] sm:$0xf]
    %v655 = vld [vmem:[%s1 + $0xd0] sm:$0xf]
    %v656 = vld [vmem:[%s1 + $0xd4] sm:$0xf]
    %v657 = vld [vmem:[%s1 + $0xd8] sm:$0xf]
    %v658 = vld [vmem:[%s1 + $0xdc] sm:$0xf]
    %v659 = vld [vmem:[%s1 + $0xe0] sm:$0xf]
    %v660 = vld [vmem:[%s1 + $0xe4] sm:$0xf]
    %v661 = vld [vmem:[%s1 + $0xe8] sm:$0xf]
    %v662 = vld [vmem:[%s1 + $0xec] sm:$0xf]
    %v663 = vld [vmem:[%s1 + $0xf0] sm:$0xf]
    %v664 = vld [vmem:[%s1 + $0xf4] sm:$0xf]
    %v665 = vld [vmem:[%s1 + $0xf8] sm:$0xf]
    %v666 = vld [vmem:[%s1 + $0xfc] sm:$0xf]
    %667 = vset.pattern.permute.xlu0 1
    %668 = vperm.xlu0 %667, %v22
    %v669 = vpop.permute.xlu0 %668
    %670 = vset.pattern.permute.xlu0 1
    %671 = vperm.xlu0 %670, %v23
    %v672 = vpop.permute.xlu0 %671
    %673 = vset.pattern.permute.xlu0 1
    %674 = vperm.xlu0 %673, %v24
    %v675 = vpop.permute.xlu0 %674
    %676 = vset.pattern.permute.xlu0 1
    %677 = vperm.xlu0 %676, %v25
    %v678 = vpop.permute.xlu0 %677
    %679 = vset.pattern.permute.xlu0 1
    %680 = vperm.xlu0 %679, %v26
    %v681 = vpop.permute.xlu0 %680
    %682 = vset.pattern.permute.xlu0 1
    %683 = vperm.xlu0 %682, %v27
    %v684 = vpop.permute.xlu0 %683
    %685 = vset.pattern.permute.xlu0 1
    %686 = vperm.xlu0 %685, %v28
    %v687 = vpop.permute.xlu0 %686
    %688 = vset.pattern.permute.xlu0 1
    %689 = vperm.xlu0 %688, %v29
    %v690 = vpop.permute.xlu0 %689
    %691 = vset.pattern.permute.xlu0 1
    %692 = vperm.xlu0 %691, %v30
    %v693 = vpop.permute.xlu0 %692
    %694 = vset.pattern.permute.xlu0 1
    %695 = vperm.xlu0 %694, %v31
    %v696 = vpop.permute.xlu0 %695
    %697 = vset.pattern.permute.xlu0 1
    %698 = vperm.xlu0 %697, %v32
    %v699 = vpop.permute.xlu0 %698
    %700 = vset.pattern.permute.xlu0 1
    %701 = vperm.xlu0 %700, %v33
    %v702 = vpop.permute.xlu0 %701
    %703 = vset.pattern.permute.xlu0 1
    %704 = vperm.xlu0 %703, %v34
    %v705 = vpop.permute.xlu0 %704
    %706 = vset.pattern.permute.xlu0 1
    %707 = vperm.xlu0 %706, %v35
    %v708 = vpop.permute.xlu0 %707
    %709 = vset.pattern.permute.xlu0 1
    %710 = vperm.xlu0 %709, %v36
    %v711 = vpop.permute.xlu0 %710
    %712 = vset.pattern.permute.xlu0 1
    %713 = vperm.xlu0 %712, %v37
    %v714 = vpop.permute.xlu0 %713
    %715 = vset.pattern.permute.xlu0 1
    %716 = vperm.xlu0 %715, %v38
    %v717 = vpop.permute.xlu0 %716
    %718 = vset.pattern.permute.xlu0 1
    %719 = vperm.xlu0 %718, %v39
    %v720 = vpop.permute.xlu0 %719
    %721 = vset.pattern.permute.xlu0 1
    %722 = vperm.xlu0 %721, %v40
    %v723 = vpop.permute.xlu0 %722
    %724 = vset.pattern.permute.xlu0 1
    %725 = vperm.xlu0 %724, %v41
    %v726 = vpop.permute.xlu0 %725
    %727 = vset.pattern.permute.xlu0 1
    %728 = vperm.xlu0 %727, %v42
    %v729 = vpop.permute.xlu0 %728
    %730 = vset.pattern.permute.xlu0 1
    %731 = vperm.xlu0 %730, %v43
    %v732 = vpop.permute.xlu0 %731
    %733 = vset.pattern.permute.xlu0 1
    %734 = vperm.xlu0 %733, %v44
    %v735 = vpop.permute.xlu0 %734
    %736 = vset.pattern.permute.xlu0 1
    %737 = vperm.xlu0 %736, %v45
    %v738 = vpop.permute.xlu0 %737
    %739 = vset.pattern.permute.xlu0 1
    %740 = vperm.xlu0 %739, %v46
    %v741 = vpop.permute.xlu0 %740
    %742 = vset.pattern.permute.xlu0 1
    %743 = vperm.xlu0 %742, %v47
    %v744 = vpop.permute.xlu0 %743
    %745 = vset.pattern.permute.xlu0 1
    %746 = vperm.xlu0 %745, %v48
    %v747 = vpop.permute.xlu0 %746
    %748 = vset.pattern.permute.xlu0 1
    %749 = vperm.xlu0 %748, %v49
    %v750 = vpop.permute.xlu0 %749
    %751 = vset.pattern.permute.xlu0 1
    %752 = vperm.xlu0 %751, %v50
    %v753 = vpop.permute.xlu0 %752
    %754 = vset.pattern.permute.xlu0 1
    %755 = vperm.xlu0 %754, %v51
    %v756 = vpop.permute.xlu0 %755
    %757 = vset.pattern.permute.xlu0 1
    %758 = vperm.xlu0 %757, %v52
    %v759 = vpop.permute.xlu0 %758
    %760 = vset.pattern.permute.xlu0 1
    %761 = vperm.xlu0 %760, %v53
    %v762 = vpop.permute.xlu0 %761
    %vm763 = vcmp.eq.s32.totalorder %v55, %v669
    %vm764 = vcmp.eq.s32.totalorder %v55, %v672
    %vm765 = vcmp.eq.s32.totalorder %v55, %v675
    %vm766 = vcmp.eq.s32.totalorder %v55, %v678
    %vm767 = vcmp.eq.s32.totalorder %v55, %v681
    %vm768 = vcmp.eq.s32.totalorder %v55, %v684
    %vm769 = vcmp.eq.s32.totalorder %v55, %v687
    %vm770 = vcmp.eq.s32.totalorder %v55, %v690
    %vm771 = vcmp.eq.s32.totalorder %v55, %v693
    %vm772 = vcmp.eq.s32.totalorder %v55, %v696
    %vm773 = vcmp.eq.s32.totalorder %v55, %v699
    %vm774 = vcmp.eq.s32.totalorder %v55, %v702
    %vm775 = vcmp.eq.s32.totalorder %v55, %v705
    %vm776 = vcmp.eq.s32.totalorder %v55, %v708
    %vm777 = vcmp.eq.s32.totalorder %v55, %v711
    %vm778 = vcmp.eq.s32.totalorder %v55, %v714
    %vm779 = vcmp.eq.s32.totalorder %v55, %v717
    %vm780 = vcmp.eq.s32.totalorder %v55, %v720
    %vm781 = vcmp.eq.s32.totalorder %v55, %v723
    %vm782 = vcmp.eq.s32.totalorder %v55, %v726
    %vm783 = vcmp.eq.s32.totalorder %v55, %v729
    %vm784 = vcmp.eq.s32.totalorder %v55, %v732
    %vm785 = vcmp.eq.s32.totalorder %v55, %v735
    %vm786 = vcmp.eq.s32.totalorder %v55, %v738
    %vm787 = vcmp.eq.s32.totalorder %v55, %v741
    %vm788 = vcmp.eq.s32.totalorder %v55, %v744
    %vm789 = vcmp.eq.s32.totalorder %v55, %v747
    %vm790 = vcmp.eq.s32.totalorder %v55, %v750
    %vm791 = vcmp.eq.s32.totalorder %v55, %v753
    %vm792 = vcmp.eq.s32.totalorder %v55, %v756
    %vm793 = vcmp.eq.s32.totalorder %v55, %v759
    %vm794 = vcmp.eq.s32.totalorder %v55, %v762
    %v795 = vsel %vm763, 1, 0
    %v796 = vsel %vm764, 1, 0
    %v797 = vsel %vm765, 1, 0
    %v798 = vsel %vm766, 1, 0
    %v799 = vsel %vm767, 1, 0
    %v800 = vsel %vm768, 1, 0
    %v801 = vsel %vm769, 1, 0
    %v802 = vsel %vm770, 1, 0
    %v803 = vsel %vm771, 1, 0
    %v804 = vsel %vm772, 1, 0
    %v805 = vsel %vm773, 1, 0
    %v806 = vsel %vm774, 1, 0
    %v807 = vsel %vm775, 1, 0
    %v808 = vsel %vm776, 1, 0
    %v809 = vsel %vm777, 1, 0
    %v810 = vsel %vm778, 1, 0
    %v811 = vsel %vm779, 1, 0
    %v812 = vsel %vm780, 1, 0
    %v813 = vsel %vm781, 1, 0
    %v814 = vsel %vm782, 1, 0
    %v815 = vsel %vm783, 1, 0
    %v816 = vsel %vm784, 1, 0
    %v817 = vsel %vm785, 1, 0
    %v818 = vsel %vm786, 1, 0
    %v819 = vsel %vm787, 1, 0
    %v820 = vsel %vm788, 1, 0
    %v821 = vsel %vm789, 1, 0
    %v822 = vsel %vm790, 1, 0
    %v823 = vsel %vm791, 1, 0
    %v824 = vsel %vm792, 1, 0
    %v825 = vsel %vm793, 1, 0
    %v826 = vsel %vm794, 1, 0
    %v827 = vcvt.s32.f32 %v795
    %v828 = vcvt.s32.f32 %v796
    %v829 = vcvt.s32.f32 %v797
    %v830 = vcvt.s32.f32 %v798
    %v831 = vcvt.s32.f32 %v799
    %v832 = vcvt.s32.f32 %v800
    %v833 = vcvt.s32.f32 %v801
    %v834 = vcvt.s32.f32 %v802
    %v835 = vcvt.s32.f32 %v803
    %v836 = vcvt.s32.f32 %v804
    %v837 = vcvt.s32.f32 %v805
    %v838 = vcvt.s32.f32 %v806
    %v839 = vcvt.s32.f32 %v807
    %v840 = vcvt.s32.f32 %v808
    %v841 = vcvt.s32.f32 %v809
    %v842 = vcvt.s32.f32 %v810
    %v843 = vcvt.s32.f32 %v811
    %v844 = vcvt.s32.f32 %v812
    %v845 = vcvt.s32.f32 %v813
    %v846 = vcvt.s32.f32 %v814
    %v847 = vcvt.s32.f32 %v815
    %v848 = vcvt.s32.f32 %v816
    %v849 = vcvt.s32.f32 %v817
    %v850 = vcvt.s32.f32 %v818
    %v851 = vcvt.s32.f32 %v819
    %v852 = vcvt.s32.f32 %v820
    %v853 = vcvt.s32.f32 %v821
    %v854 = vcvt.s32.f32 %v822
    %v855 = vcvt.s32.f32 %v823
    %v856 = vcvt.s32.f32 %v824
    %v857 = vcvt.s32.f32 %v825
    %v858 = vcvt.s32.f32 %v826
    %v859 = vadd.f32 %v827, 0.0
    %v860 = vadd.f32 %v828, 0.0
    %v861 = vadd.f32 %v829, 0.0
    %v862 = vadd.f32 %v830, 0.0
    %v863 = vadd.f32 %v831, 0.0
    %v864 = vadd.f32 %v832, 0.0
    %v865 = vadd.f32 %v833, 0.0
    %v866 = vadd.f32 %v834, 0.0
    %v867 = vadd.f32 %v835, 0.0
    %v868 = vadd.f32 %v836, 0.0
    %v869 = vadd.f32 %v837, 0.0
    %v870 = vadd.f32 %v838, 0.0
    %v871 = vadd.f32 %v839, 0.0
    %v872 = vadd.f32 %v840, 0.0
    %v873 = vadd.f32 %v841, 0.0
    %v874 = vadd.f32 %v842, 0.0
    %v875 = vadd.f32 %v843, 0.0
    %v876 = vadd.f32 %v844, 0.0
    %v877 = vadd.f32 %v845, 0.0
    %v878 = vadd.f32 %v846, 0.0
    %v879 = vadd.f32 %v847, 0.0
    %v880 = vadd.f32 %v848, 0.0
    %v881 = vadd.f32 %v849, 0.0
    %v882 = vadd.f32 %v850, 0.0
    %v883 = vadd.f32 %v851, 0.0
    %v884 = vadd.f32 %v852, 0.0
    %v885 = vadd.f32 %v853, 0.0
    %v886 = vadd.f32 %v854, 0.0
    %v887 = vadd.f32 %v855, 0.0
    %v888 = vadd.f32 %v856, 0.0
    %v889 = vadd.f32 %v857, 0.0
    %v890 = vadd.f32 %v858, 0.0
    %891 = vset.pattern.permute.xlu0 2
    %892 = vperm.xlu0 %891, %v22
    %v893 = vpop.permute.xlu0 %892
    %894 = vset.pattern.permute.xlu0 2
    %895 = vperm.xlu0 %894, %v23
    %v896 = vpop.permute.xlu0 %895
    %897 = vset.pattern.permute.xlu0 2
    %898 = vperm.xlu0 %897, %v24
    %v899 = vpop.permute.xlu0 %898
    %900 = vset.pattern.permute.xlu0 2
    %901 = vperm.xlu0 %900, %v25
    %v902 = vpop.permute.xlu0 %901
    %903 = vset.pattern.permute.xlu0 2
    %904 = vperm.xlu0 %903, %v26
    %v905 = vpop.permute.xlu0 %904
    %906 = vset.pattern.permute.xlu0 2
    %907 = vperm.xlu0 %906, %v27
    %v908 = vpop.permute.xlu0 %907
    %909 = vset.pattern.permute.xlu0 2
    %910 = vperm.xlu0 %909, %v28
    %v911 = vpop.permute.xlu0 %910
    %912 = vset.pattern.permute.xlu0 2
    %913 = vperm.xlu0 %912, %v29
    %v914 = vpop.permute.xlu0 %913
    %915 = vset.pattern.permute.xlu0 2
    %916 = vperm.xlu0 %915, %v30
    %v917 = vpop.permute.xlu0 %916
    %918 = vset.pattern.permute.xlu0 2
    %919 = vperm.xlu0 %918, %v31
    %v920 = vpop.permute.xlu0 %919
    %921 = vset.pattern.permute.xlu0 2
    %922 = vperm.xlu0 %921, %v32
    %v923 = vpop.permute.xlu0 %922
    %924 = vset.pattern.permute.xlu0 2
    %925 = vperm.xlu0 %924, %v33
    %v926 = vpop.permute.xlu0 %925
    %927 = vset.pattern.permute.xlu0 2
    %928 = vperm.xlu0 %927, %v34
    %v929 = vpop.permute.xlu0 %928
    %930 = vset.pattern.permute.xlu0 2
    %931 = vperm.xlu0 %930, %v35
    %v932 = vpop.permute.xlu0 %931
    %933 = vset.pattern.permute.xlu0 2
    %934 = vperm.xlu0 %933, %v36
    %v935 = vpop.permute.xlu0 %934
    %936 = vset.pattern.permute.xlu0 2
    %937 = vperm.xlu0 %936, %v37
    %v938 = vpop.permute.xlu0 %937
    %939 = vset.pattern.permute.xlu0 2
    %940 = vperm.xlu0 %939, %v38
    %v941 = vpop.permute.xlu0 %940
    %942 = vset.pattern.permute.xlu0 2
    %943 = vperm.xlu0 %942, %v39
    %v944 = vpop.permute.xlu0 %943
    %945 = vset.pattern.permute.xlu0 2
    %946 = vperm.xlu0 %945, %v40
    %v947 = vpop.permute.xlu0 %946
    %948 = vset.pattern.permute.xlu0 2
    %949 = vperm.xlu0 %948, %v41
    %v950 = vpop.permute.xlu0 %949
    %951 = vset.pattern.permute.xlu0 2
    %952 = vperm.xlu0 %951, %v42
    %v953 = vpop.permute.xlu0 %952
    %954 = vset.pattern.permute.xlu0 2
    %955 = vperm.xlu0 %954, %v43
    %v956 = vpop.permute.xlu0 %955
    %957 = vset.pattern.permute.xlu0 2
    %958 = vperm.xlu0 %957, %v44
    %v959 = vpop.permute.xlu0 %958
    %960 = vset.pattern.permute.xlu0 2
    %961 = vperm.xlu0 %960, %v45
    %v962 = vpop.permute.xlu0 %961
    %963 = vset.pattern.permute.xlu0 2
    %964 = vperm.xlu0 %963, %v46
    %v965 = vpop.permute.xlu0 %964
    %966 = vset.pattern.permute.xlu0 2
    %967 = vperm.xlu0 %966, %v47
    %v968 = vpop.permute.xlu0 %967
    %969 = vset.pattern.permute.xlu0 2
    %970 = vperm.xlu0 %969, %v48
    %v971 = vpop.permute.xlu0 %970
    %972 = vset.pattern.permute.xlu0 2
    %973 = vperm.xlu0 %972, %v49
    %v974 = vpop.permute.xlu0 %973
    %975 = vset.pattern.permute.xlu0 2
    %976 = vperm.xlu0 %975, %v50
    %v977 = vpop.permute.xlu0 %976
    %978 = vset.pattern.permute.xlu0 2
    %979 = vperm.xlu0 %978, %v51
    %v980 = vpop.permute.xlu0 %979
    %981 = vset.pattern.permute.xlu0 2
    %982 = vperm.xlu0 %981, %v52
    %v983 = vpop.permute.xlu0 %982
    %984 = vset.pattern.permute.xlu0 2
    %985 = vperm.xlu0 %984, %v53
    %v986 = vpop.permute.xlu0 %985
    %vm987 = vcmp.eq.s32.totalorder %v55, %v893
    %vm988 = vcmp.eq.s32.totalorder %v55, %v896
    %vm989 = vcmp.eq.s32.totalorder %v55, %v899
    %vm990 = vcmp.eq.s32.totalorder %v55, %v902
    %vm991 = vcmp.eq.s32.totalorder %v55, %v905
    %vm992 = vcmp.eq.s32.totalorder %v55, %v908
    %vm993 = vcmp.eq.s32.totalorder %v55, %v911
    %vm994 = vcmp.eq.s32.totalorder %v55, %v914
    %vm995 = vcmp.eq.s32.totalorder %v55, %v917
    %vm996 = vcmp.eq.s32.totalorder %v55, %v920
    %vm997 = vcmp.eq.s32.totalorder %v55, %v923
    %vm998 = vcmp.eq.s32.totalorder %v55, %v926
    %vm999 = vcmp.eq.s32.totalorder %v55, %v929
    %vm1000 = vcmp.eq.s32.totalorder %v55, %v932
    %vm1001 = vcmp.eq.s32.totalorder %v55, %v935
    %vm1002 = vcmp.eq.s32.totalorder %v55, %v938
    %vm1003 = vcmp.eq.s32.totalorder %v55, %v941
    %vm1004 = vcmp.eq.s32.totalorder %v55, %v944
    %vm1005 = vcmp.eq.s32.totalorder %v55, %v947
    %vm1006 = vcmp.eq.s32.totalorder %v55, %v950
    %vm1007 = vcmp.eq.s32.totalorder %v55, %v953
    %vm1008 = vcmp.eq.s32.totalorder %v55, %v956
    %vm1009 = vcmp.eq.s32.totalorder %v55, %v959
    %vm1010 = vcmp.eq.s32.totalorder %v55, %v962
    %vm1011 = vcmp.eq.s32.totalorder %v55, %v965
    %vm1012 = vcmp.eq.s32.totalorder %v55, %v968
    %vm1013 = vcmp.eq.s32.totalorder %v55, %v971
    %vm1014 = vcmp.eq.s32.totalorder %v55, %v974
    %vm1015 = vcmp.eq.s32.totalorder %v55, %v977
    %vm1016 = vcmp.eq.s32.totalorder %v55, %v980
    %vm1017 = vcmp.eq.s32.totalorder %v55, %v983
    %vm1018 = vcmp.eq.s32.totalorder %v55, %v986
    %v1019 = vsel %vm987, 1, 0
    %v1020 = vsel %vm988, 1, 0
    %v1021 = vsel %vm989, 1, 0
    %v1022 = vsel %vm990, 1, 0
    %v1023 = vsel %vm991, 1, 0
    %v1024 = vsel %vm992, 1, 0
    %v1025 = vsel %vm993, 1, 0
    %v1026 = vsel %vm994, 1, 0
    %v1027 = vsel %vm995, 1, 0
    %v1028 = vsel %vm996, 1, 0
    %v1029 = vsel %vm997, 1, 0
    %v1030 = vsel %vm998, 1, 0
    %v1031 = vsel %vm999, 1, 0
    %v1032 = vsel %vm1000, 1, 0
    %v1033 = vsel %vm1001, 1, 0
    %v1034 = vsel %vm1002, 1, 0
    %v1035 = vsel %vm1003, 1, 0
    %v1036 = vsel %vm1004, 1, 0
    %v1037 = vsel %vm1005, 1, 0
    %v1038 = vsel %vm1006, 1, 0
    %v1039 = vsel %vm1007, 1, 0
    %v1040 = vsel %vm1008, 1, 0
    %v1041 = vsel %vm1009, 1, 0
    %v1042 = vsel %vm1010, 1, 0
    %v1043 = vsel %vm1011, 1, 0
    %v1044 = vsel %vm1012, 1, 0
    %v1045 = vsel %vm1013, 1, 0
    %v1046 = vsel %vm1014, 1, 0
    %v1047 = vsel %vm1015, 1, 0
    %v1048 = vsel %vm1016, 1, 0
    %v1049 = vsel %vm1017, 1, 0
    %v1050 = vsel %vm1018, 1, 0
    %v1051 = vcvt.s32.f32 %v1019
    %v1052 = vcvt.s32.f32 %v1020
    %v1053 = vcvt.s32.f32 %v1021
    %v1054 = vcvt.s32.f32 %v1022
    %v1055 = vcvt.s32.f32 %v1023
    %v1056 = vcvt.s32.f32 %v1024
    %v1057 = vcvt.s32.f32 %v1025
    %v1058 = vcvt.s32.f32 %v1026
    %v1059 = vcvt.s32.f32 %v1027
    %v1060 = vcvt.s32.f32 %v1028
    %v1061 = vcvt.s32.f32 %v1029
    %v1062 = vcvt.s32.f32 %v1030
    %v1063 = vcvt.s32.f32 %v1031
    %v1064 = vcvt.s32.f32 %v1032
    %v1065 = vcvt.s32.f32 %v1033
    %v1066 = vcvt.s32.f32 %v1034
    %v1067 = vcvt.s32.f32 %v1035
    %v1068 = vcvt.s32.f32 %v1036
    %v1069 = vcvt.s32.f32 %v1037
    %v1070 = vcvt.s32.f32 %v1038
    %v1071 = vcvt.s32.f32 %v1039
    %v1072 = vcvt.s32.f32 %v1040
    %v1073 = vcvt.s32.f32 %v1041
    %v1074 = vcvt.s32.f32 %v1042
    %v1075 = vcvt.s32.f32 %v1043
    %v1076 = vcvt.s32.f32 %v1044
    %v1077 = vcvt.s32.f32 %v1045
    %v1078 = vcvt.s32.f32 %v1046
    %v1079 = vcvt.s32.f32 %v1047
    %v1080 = vcvt.s32.f32 %v1048
    %v1081 = vcvt.s32.f32 %v1049
    %v1082 = vcvt.s32.f32 %v1050
    %v1083 = vadd.f32 %v859, %v1051
    %v1084 = vadd.f32 %v860, %v1052
    %v1085 = vadd.f32 %v861, %v1053
    %v1086 = vadd.f32 %v862, %v1054
    %v1087 = vadd.f32 %v863, %v1055
    %v1088 = vadd.f32 %v864, %v1056
    %v1089 = vadd.f32 %v865, %v1057
    %v1090 = vadd.f32 %v866, %v1058
    %v1091 = vadd.f32 %v867, %v1059
    %v1092 = vadd.f32 %v868, %v1060
    %v1093 = vadd.f32 %v869, %v1061
    %v1094 = vadd.f32 %v870, %v1062
    %v1095 = vadd.f32 %v871, %v1063
    %v1096 = vadd.f32 %v872, %v1064
    %v1097 = vadd.f32 %v873, %v1065
    %v1098 = vadd.f32 %v874, %v1066
    %v1099 = vadd.f32 %v875, %v1067
    %v1100 = vadd.f32 %v876, %v1068
    %v1101 = vadd.f32 %v877, %v1069
    %v1102 = vadd.f32 %v878, %v1070
    %v1103 = vadd.f32 %v879, %v1071
    %v1104 = vadd.f32 %v880, %v1072
    %v1105 = vadd.f32 %v881, %v1073
    %v1106 = vadd.f32 %v882, %v1074
    %v1107 = vadd.f32 %v883, %v1075
    %v1108 = vadd.f32 %v884, %v1076
    %v1109 = vadd.f32 %v885, %v1077
    %v1110 = vadd.f32 %v886, %v1078
    %v1111 = vadd.f32 %v887, %v1079
    %v1112 = vadd.f32 %v888, %v1080
    %v1113 = vadd.f32 %v889, %v1081
    %v1114 = vadd.f32 %v890, %v1082
    %1115 = vset.pattern.permute.xlu0 3
    %1116 = vperm.xlu0 %1115, %v22
    %v1117 = vpop.permute.xlu0 %1116
    %1118 = vset.pattern.permute.xlu0 3
    %1119 = vperm.xlu0 %1118, %v23
    %v1120 = vpop.permute.xlu0 %1119
    %1121 = vset.pattern.permute.xlu0 3
    %1122 = vperm.xlu0 %1121, %v24
    %v1123 = vpop.permute.xlu0 %1122
    %1124 = vset.pattern.permute.xlu0 3
    %1125 = vperm.xlu0 %1124, %v25
    %v1126 = vpop.permute.xlu0 %1125
    %1127 = vset.pattern.permute.xlu0 3
    %1128 = vperm.xlu0 %1127, %v26
    %v1129 = vpop.permute.xlu0 %1128
    %1130 = vset.pattern.permute.xlu0 3
    %1131 = vperm.xlu0 %1130, %v27
    %v1132 = vpop.permute.xlu0 %1131
    %1133 = vset.pattern.permute.xlu0 3
    %1134 = vperm.xlu0 %1133, %v28
    %v1135 = vpop.permute.xlu0 %1134
    %1136 = vset.pattern.permute.xlu0 3
    %1137 = vperm.xlu0 %1136, %v29
    %v1138 = vpop.permute.xlu0 %1137
    %1139 = vset.pattern.permute.xlu0 3
    %1140 = vperm.xlu0 %1139, %v30
    %v1141 = vpop.permute.xlu0 %1140
    %1142 = vset.pattern.permute.xlu0 3
    %1143 = vperm.xlu0 %1142, %v31
    %v1144 = vpop.permute.xlu0 %1143
    %1145 = vset.pattern.permute.xlu0 3
    %1146 = vperm.xlu0 %1145, %v32
    %v1147 = vpop.permute.xlu0 %1146
    %1148 = vset.pattern.permute.xlu0 3
    %1149 = vperm.xlu0 %1148, %v33
    %v1150 = vpop.permute.xlu0 %1149
    %1151 = vset.pattern.permute.xlu0 3
    %1152 = vperm.xlu0 %1151, %v34
    %v1153 = vpop.permute.xlu0 %1152
    %1154 = vset.pattern.permute.xlu0 3
    %1155 = vperm.xlu0 %1154, %v35
    %v1156 = vpop.permute.xlu0 %1155
    %1157 = vset.pattern.permute.xlu0 3
    %1158 = vperm.xlu0 %1157, %v36
    %v1159 = vpop.permute.xlu0 %1158
    %1160 = vset.pattern.permute.xlu0 3
    %1161 = vperm.xlu0 %1160, %v37
    %v1162 = vpop.permute.xlu0 %1161
    %1163 = vset.pattern.permute.xlu0 3
    %1164 = vperm.xlu0 %1163, %v38
    %v1165 = vpop.permute.xlu0 %1164
    %1166 = vset.pattern.permute.xlu0 3
    %1167 = vperm.xlu0 %1166, %v39
    %v1168 = vpop.permute.xlu0 %1167
    %1169 = vset.pattern.permute.xlu0 3
    %1170 = vperm.xlu0 %1169, %v40
    %v1171 = vpop.permute.xlu0 %1170
    %1172 = vset.pattern.permute.xlu0 3
    %1173 = vperm.xlu0 %1172, %v41
    %v1174 = vpop.permute.xlu0 %1173
    %1175 = vset.pattern.permute.xlu0 3
    %1176 = vperm.xlu0 %1175, %v42
    %v1177 = vpop.permute.xlu0 %1176
    %1178 = vset.pattern.permute.xlu0 3
    %1179 = vperm.xlu0 %1178, %v43
    %v1180 = vpop.permute.xlu0 %1179
    %1181 = vset.pattern.permute.xlu0 3
    %1182 = vperm.xlu0 %1181, %v44
    %v1183 = vpop.permute.xlu0 %1182
    %1184 = vset.pattern.permute.xlu0 3
    %1185 = vperm.xlu0 %1184, %v45
    %v1186 = vpop.permute.xlu0 %1185
    %1187 = vset.pattern.permute.xlu0 3
    %1188 = vperm.xlu0 %1187, %v46
    %v1189 = vpop.permute.xlu0 %1188
    %1190 = vset.pattern.permute.xlu0 3
    %1191 = vperm.xlu0 %1190, %v47
    %v1192 = vpop.permute.xlu0 %1191
    %1193 = vset.pattern.permute.xlu0 3
    %1194 = vperm.xlu0 %1193, %v48
    %v1195 = vpop.permute.xlu0 %1194
    %1196 = vset.pattern.permute.xlu0 3
    %1197 = vperm.xlu0 %1196, %v49
    %v1198 = vpop.permute.xlu0 %1197
    %1199 = vset.pattern.permute.xlu0 3
    %1200 = vperm.xlu0 %1199, %v50
    %v1201 = vpop.permute.xlu0 %1200
    %1202 = vset.pattern.permute.xlu0 3
    %1203 = vperm.xlu0 %1202, %v51
    %v1204 = vpop.permute.xlu0 %1203
    %1205 = vset.pattern.permute.xlu0 3
    %1206 = vperm.xlu0 %1205, %v52
    %v1207 = vpop.permute.xlu0 %1206
    %1208 = vset.pattern.permute.xlu0 3
    %1209 = vperm.xlu0 %1208, %v53
    %v1210 = vpop.permute.xlu0 %1209
    %vm1211 = vcmp.eq.s32.totalorder %v55, %v1117
    %vm1212 = vcmp.eq.s32.totalorder %v55, %v1120
    %vm1213 = vcmp.eq.s32.totalorder %v55, %v1123
    %vm1214 = vcmp.eq.s32.totalorder %v55, %v1126
    %vm1215 = vcmp.eq.s32.totalorder %v55, %v1129
    %vm1216 = vcmp.eq.s32.totalorder %v55, %v1132
    %vm1217 = vcmp.eq.s32.totalorder %v55, %v1135
    %vm1218 = vcmp.eq.s32.totalorder %v55, %v1138
    %vm1219 = vcmp.eq.s32.totalorder %v55, %v1141
    %vm1220 = vcmp.eq.s32.totalorder %v55, %v1144
    %vm1221 = vcmp.eq.s32.totalorder %v55, %v1147
    %vm1222 = vcmp.eq.s32.totalorder %v55, %v1150
    %vm1223 = vcmp.eq.s32.totalorder %v55, %v1153
    %vm1224 = vcmp.eq.s32.totalorder %v55, %v1156
    %vm1225 = vcmp.eq.s32.totalorder %v55, %v1159
    %vm1226 = vcmp.eq.s32.totalorder %v55, %v1162
    %vm1227 = vcmp.eq.s32.totalorder %v55, %v1165
    %vm1228 = vcmp.eq.s32.totalorder %v55, %v1168
    %vm1229 = vcmp.eq.s32.totalorder %v55, %v1171
    %vm1230 = vcmp.eq.s32.totalorder %v55, %v1174
    %vm1231 = vcmp.eq.s32.totalorder %v55, %v1177
    %vm1232 = vcmp.eq.s32.totalorder %v55, %v1180
    %vm1233 = vcmp.eq.s32.totalorder %v55, %v1183
    %vm1234 = vcmp.eq.s32.totalorder %v55, %v1186
    %vm1235 = vcmp.eq.s32.totalorder %v55, %v1189
    %vm1236 = vcmp.eq.s32.totalorder %v55, %v1192
    %vm1237 = vcmp.eq.s32.totalorder %v55, %v1195
    %vm1238 = vcmp.eq.s32.totalorder %v55, %v1198
    %vm1239 = vcmp.eq.s32.totalorder %v55, %v1201
    %vm1240 = vcmp.eq.s32.totalorder %v55, %v1204
    %vm1241 = vcmp.eq.s32.totalorder %v55, %v1207
    %vm1242 = vcmp.eq.s32.totalorder %v55, %v1210
    %v1243 = vsel %vm1211, 1, 0
    %v1244 = vsel %vm1212, 1, 0
    %v1245 = vsel %vm1213, 1, 0
    %v1246 = vsel %vm1214, 1, 0
    %v1247 = vsel %vm1215, 1, 0
    %v1248 = vsel %vm1216, 1, 0
    %v1249 = vsel %vm1217, 1, 0
    %v1250 = vsel %vm1218, 1, 0
    %v1251 = vsel %vm1219, 1, 0
    %v1252 = vsel %vm1220, 1, 0
    %v1253 = vsel %vm1221, 1, 0
    %v1254 = vsel %vm1222, 1, 0
    %v1255 = vsel %vm1223, 1, 0
    %v1256 = vsel %vm1224, 1, 0
    %v1257 = vsel %vm1225, 1, 0
    %v1258 = vsel %vm1226, 1, 0
    %v1259 = vsel %vm1227, 1, 0
    %v1260 = vsel %vm1228, 1, 0
    %v1261 = vsel %vm1229, 1, 0
    %v1262 = vsel %vm1230, 1, 0
    %v1263 = vsel %vm1231, 1, 0
    %v1264 = vsel %vm1232, 1, 0
    %v1265 = vsel %vm1233, 1, 0
    %v1266 = vsel %vm1234, 1, 0
    %v1267 = vsel %vm1235, 1, 0
    %v1268 = vsel %vm1236, 1, 0
    %v1269 = vsel %vm1237, 1, 0
    %v1270 = vsel %vm1238, 1, 0
    %v1271 = vsel %vm1239, 1, 0
    %v1272 = vsel %vm1240, 1, 0
    %v1273 = vsel %vm1241, 1, 0
    %v1274 = vsel %vm1242, 1, 0
    %v1275 = vcvt.s32.f32 %v1243
    %v1276 = vcvt.s32.f32 %v1244
    %v1277 = vcvt.s32.f32 %v1245
    %v1278 = vcvt.s32.f32 %v1246
    %v1279 = vcvt.s32.f32 %v1247
    %v1280 = vcvt.s32.f32 %v1248
    %v1281 = vcvt.s32.f32 %v1249
    %v1282 = vcvt.s32.f32 %v1250
    %v1283 = vcvt.s32.f32 %v1251
    %v1284 = vcvt.s32.f32 %v1252
    %v1285 = vcvt.s32.f32 %v1253
    %v1286 = vcvt.s32.f32 %v1254
    %v1287 = vcvt.s32.f32 %v1255
    %v1288 = vcvt.s32.f32 %v1256
    %v1289 = vcvt.s32.f32 %v1257
    %v1290 = vcvt.s32.f32 %v1258
    %v1291 = vcvt.s32.f32 %v1259
    %v1292 = vcvt.s32.f32 %v1260
    %v1293 = vcvt.s32.f32 %v1261
    %v1294 = vcvt.s32.f32 %v1262
    %v1295 = vcvt.s32.f32 %v1263
    %v1296 = vcvt.s32.f32 %v1264
    %v1297 = vcvt.s32.f32 %v1265
    %v1298 = vcvt.s32.f32 %v1266
    %v1299 = vcvt.s32.f32 %v1267
    %v1300 = vcvt.s32.f32 %v1268
    %v1301 = vcvt.s32.f32 %v1269
    %v1302 = vcvt.s32.f32 %v1270
    %v1303 = vcvt.s32.f32 %v1271
    %v1304 = vcvt.s32.f32 %v1272
    %v1305 = vcvt.s32.f32 %v1273
    %v1306 = vcvt.s32.f32 %v1274
    %v1307 = vadd.f32 %v1083, %v1275
    %v1308 = vadd.f32 %v1084, %v1276
    %v1309 = vadd.f32 %v1085, %v1277
    %v1310 = vadd.f32 %v1086, %v1278
    %v1311 = vadd.f32 %v1087, %v1279
    %v1312 = vadd.f32 %v1088, %v1280
    %v1313 = vadd.f32 %v1089, %v1281
    %v1314 = vadd.f32 %v1090, %v1282
    %v1315 = vadd.f32 %v1091, %v1283
    %v1316 = vadd.f32 %v1092, %v1284
    %v1317 = vadd.f32 %v1093, %v1285
    %v1318 = vadd.f32 %v1094, %v1286
    %v1319 = vadd.f32 %v1095, %v1287
    %v1320 = vadd.f32 %v1096, %v1288
    %v1321 = vadd.f32 %v1097, %v1289
    %v1322 = vadd.f32 %v1098, %v1290
    %v1323 = vadd.f32 %v1099, %v1291
    %v1324 = vadd.f32 %v1100, %v1292
    %v1325 = vadd.f32 %v1101, %v1293
    %v1326 = vadd.f32 %v1102, %v1294
    %v1327 = vadd.f32 %v1103, %v1295
    %v1328 = vadd.f32 %v1104, %v1296
    %v1329 = vadd.f32 %v1105, %v1297
    %v1330 = vadd.f32 %v1106, %v1298
    %v1331 = vadd.f32 %v1107, %v1299
    %v1332 = vadd.f32 %v1108, %v1300
    %v1333 = vadd.f32 %v1109, %v1301
    %v1334 = vadd.f32 %v1110, %v1302
    %v1335 = vadd.f32 %v1111, %v1303
    %v1336 = vadd.f32 %v1112, %v1304
    %v1337 = vadd.f32 %v1113, %v1305
    %v1338 = vadd.f32 %v1114, %v1306
    %1339 = vset.pattern.permute.xlu0 4
    %1340 = vperm.xlu0 %1339, %v22
    %v1341 = vpop.permute.xlu0 %1340
    %1342 = vset.pattern.permute.xlu0 4
    %1343 = vperm.xlu0 %1342, %v23
    %v1344 = vpop.permute.xlu0 %1343
    %1345 = vset.pattern.permute.xlu0 4
    %1346 = vperm.xlu0 %1345, %v24
    %v1347 = vpop.permute.xlu0 %1346
    %1348 = vset.pattern.permute.xlu0 4
    %1349 = vperm.xlu0 %1348, %v25
    %v1350 = vpop.permute.xlu0 %1349
    %1351 = vset.pattern.permute.xlu0 4
    %1352 = vperm.xlu0 %1351, %v26
    %v1353 = vpop.permute.xlu0 %1352
    %1354 = vset.pattern.permute.xlu0 4
    %1355 = vperm.xlu0 %1354, %v27
    %v1356 = vpop.permute.xlu0 %1355
    %1357 = vset.pattern.permute.xlu0 4
    %1358 = vperm.xlu0 %1357, %v28
    %v1359 = vpop.permute.xlu0 %1358
    %1360 = vset.pattern.permute.xlu0 4
    %1361 = vperm.xlu0 %1360, %v29
    %v1362 = vpop.permute.xlu0 %1361
    %1363 = vset.pattern.permute.xlu0 4
    %1364 = vperm.xlu0 %1363, %v30
    %v1365 = vpop.permute.xlu0 %1364
    %1366 = vset.pattern.permute.xlu0 4
    %1367 = vperm.xlu0 %1366, %v31
    %v1368 = vpop.permute.xlu0 %1367
    %1369 = vset.pattern.permute.xlu0 4
    %1370 = vperm.xlu0 %1369, %v32
    %v1371 = vpop.permute.xlu0 %1370
    %1372 = vset.pattern.permute.xlu0 4
    %1373 = vperm.xlu0 %1372, %v33
    %v1374 = vpop.permute.xlu0 %1373
    %1375 = vset.pattern.permute.xlu0 4
    %1376 = vperm.xlu0 %1375, %v34
    %v1377 = vpop.permute.xlu0 %1376
    %1378 = vset.pattern.permute.xlu0 4
    %1379 = vperm.xlu0 %1378, %v35
    %v1380 = vpop.permute.xlu0 %1379
    %1381 = vset.pattern.permute.xlu0 4
    %1382 = vperm.xlu0 %1381, %v36
    %v1383 = vpop.permute.xlu0 %1382
    %1384 = vset.pattern.permute.xlu0 4
    %1385 = vperm.xlu0 %1384, %v37
    %v1386 = vpop.permute.xlu0 %1385
    %1387 = vset.pattern.permute.xlu0 4
    %1388 = vperm.xlu0 %1387, %v38
    %v1389 = vpop.permute.xlu0 %1388
    %1390 = vset.pattern.permute.xlu0 4
    %1391 = vperm.xlu0 %1390, %v39
    %v1392 = vpop.permute.xlu0 %1391
    %1393 = vset.pattern.permute.xlu0 4
    %1394 = vperm.xlu0 %1393, %v40
    %v1395 = vpop.permute.xlu0 %1394
    %1396 = vset.pattern.permute.xlu0 4
    %1397 = vperm.xlu0 %1396, %v41
    %v1398 = vpop.permute.xlu0 %1397
    %1399 = vset.pattern.permute.xlu0 4
    %1400 = vperm.xlu0 %1399, %v42
    %v1401 = vpop.permute.xlu0 %1400
    %1402 = vset.pattern.permute.xlu0 4
    %1403 = vperm.xlu0 %1402, %v43
    %v1404 = vpop.permute.xlu0 %1403
    %1405 = vset.pattern.permute.xlu0 4
    %1406 = vperm.xlu0 %1405, %v44
    %v1407 = vpop.permute.xlu0 %1406
    %1408 = vset.pattern.permute.xlu0 4
    %1409 = vperm.xlu0 %1408, %v45
    %v1410 = vpop.permute.xlu0 %1409
    %1411 = vset.pattern.permute.xlu0 4
    %1412 = vperm.xlu0 %1411, %v46
    %v1413 = vpop.permute.xlu0 %1412
    %1414 = vset.pattern.permute.xlu0 4
    %1415 = vperm.xlu0 %1414, %v47
    %v1416 = vpop.permute.xlu0 %1415
    %1417 = vset.pattern.permute.xlu0 4
    %1418 = vperm.xlu0 %1417, %v48
    %v1419 = vpop.permute.xlu0 %1418
    %1420 = vset.pattern.permute.xlu0 4
    %1421 = vperm.xlu0 %1420, %v49
    %v1422 = vpop.permute.xlu0 %1421
    %1423 = vset.pattern.permute.xlu0 4
    %1424 = vperm.xlu0 %1423, %v50
    %v1425 = vpop.permute.xlu0 %1424
    %1426 = vset.pattern.permute.xlu0 4
    %1427 = vperm.xlu0 %1426, %v51
    %v1428 = vpop.permute.xlu0 %1427
    %1429 = vset.pattern.permute.xlu0 4
    %1430 = vperm.xlu0 %1429, %v52
    %v1431 = vpop.permute.xlu0 %1430
    %1432 = vset.pattern.permute.xlu0 4
    %1433 = vperm.xlu0 %1432, %v53
    %v1434 = vpop.permute.xlu0 %1433
    %vm1435 = vcmp.eq.s32.totalorder %v55, %v1341
    %vm1436 = vcmp.eq.s32.totalorder %v55, %v1344
    %vm1437 = vcmp.eq.s32.totalorder %v55, %v1347
    %vm1438 = vcmp.eq.s32.totalorder %v55, %v1350
    %vm1439 = vcmp.eq.s32.totalorder %v55, %v1353
    %vm1440 = vcmp.eq.s32.totalorder %v55, %v1356
    %vm1441 = vcmp.eq.s32.totalorder %v55, %v1359
    %vm1442 = vcmp.eq.s32.totalorder %v55, %v1362
    %vm1443 = vcmp.eq.s32.totalorder %v55, %v1365
    %vm1444 = vcmp.eq.s32.totalorder %v55, %v1368
    %vm1445 = vcmp.eq.s32.totalorder %v55, %v1371
    %vm1446 = vcmp.eq.s32.totalorder %v55, %v1374
    %vm1447 = vcmp.eq.s32.totalorder %v55, %v1377
    %vm1448 = vcmp.eq.s32.totalorder %v55, %v1380
    %vm1449 = vcmp.eq.s32.totalorder %v55, %v1383
    %vm1450 = vcmp.eq.s32.totalorder %v55, %v1386
    %vm1451 = vcmp.eq.s32.totalorder %v55, %v1389
    %vm1452 = vcmp.eq.s32.totalorder %v55, %v1392
    %vm1453 = vcmp.eq.s32.totalorder %v55, %v1395
    %vm1454 = vcmp.eq.s32.totalorder %v55, %v1398
    %vm1455 = vcmp.eq.s32.totalorder %v55, %v1401
    %vm1456 = vcmp.eq.s32.totalorder %v55, %v1404
    %vm1457 = vcmp.eq.s32.totalorder %v55, %v1407
    %vm1458 = vcmp.eq.s32.totalorder %v55, %v1410
    %vm1459 = vcmp.eq.s32.totalorder %v55, %v1413
    %vm1460 = vcmp.eq.s32.totalorder %v55, %v1416
    %vm1461 = vcmp.eq.s32.totalorder %v55, %v1419
    %vm1462 = vcmp.eq.s32.totalorder %v55, %v1422
    %vm1463 = vcmp.eq.s32.totalorder %v55, %v1425
    %vm1464 = vcmp.eq.s32.totalorder %v55, %v1428
    %vm1465 = vcmp.eq.s32.totalorder %v55, %v1431
    %vm1466 = vcmp.eq.s32.totalorder %v55, %v1434
    %v1467 = vsel %vm1435, 1, 0
    %v1468 = vsel %vm1436, 1, 0
    %v1469 = vsel %vm1437, 1, 0
    %v1470 = vsel %vm1438, 1, 0
    %v1471 = vsel %vm1439, 1, 0
    %v1472 = vsel %vm1440, 1, 0
    %v1473 = vsel %vm1441, 1, 0
    %v1474 = vsel %vm1442, 1, 0
    %v1475 = vsel %vm1443, 1, 0
    %v1476 = vsel %vm1444, 1, 0
    %v1477 = vsel %vm1445, 1, 0
    %v1478 = vsel %vm1446, 1, 0
    %v1479 = vsel %vm1447, 1, 0
    %v1480 = vsel %vm1448, 1, 0
    %v1481 = vsel %vm1449, 1, 0
    %v1482 = vsel %vm1450, 1, 0
    %v1483 = vsel %vm1451, 1, 0
    %v1484 = vsel %vm1452, 1, 0
    %v1485 = vsel %vm1453, 1, 0
    %v1486 = vsel %vm1454, 1, 0
    %v1487 = vsel %vm1455, 1, 0
    %v1488 = vsel %vm1456, 1, 0
    %v1489 = vsel %vm1457, 1, 0
    %v1490 = vsel %vm1458, 1, 0
    %v1491 = vsel %vm1459, 1, 0
    %v1492 = vsel %vm1460, 1, 0
    %v1493 = vsel %vm1461, 1, 0
    %v1494 = vsel %vm1462, 1, 0
    %v1495 = vsel %vm1463, 1, 0
    %v1496 = vsel %vm1464, 1, 0
    %v1497 = vsel %vm1465, 1, 0
    %v1498 = vsel %vm1466, 1, 0
    %v1499 = vcvt.s32.f32 %v1467
    %v1500 = vcvt.s32.f32 %v1468
    %v1501 = vcvt.s32.f32 %v1469
    %v1502 = vcvt.s32.f32 %v1470
    %v1503 = vcvt.s32.f32 %v1471
    %v1504 = vcvt.s32.f32 %v1472
    %v1505 = vcvt.s32.f32 %v1473
    %v1506 = vcvt.s32.f32 %v1474
    %v1507 = vcvt.s32.f32 %v1475
    %v1508 = vcvt.s32.f32 %v1476
    %v1509 = vcvt.s32.f32 %v1477
    %v1510 = vcvt.s32.f32 %v1478
    %v1511 = vcvt.s32.f32 %v1479
    %v1512 = vcvt.s32.f32 %v1480
    %v1513 = vcvt.s32.f32 %v1481
    %v1514 = vcvt.s32.f32 %v1482
    %v1515 = vcvt.s32.f32 %v1483
    %v1516 = vcvt.s32.f32 %v1484
    %v1517 = vcvt.s32.f32 %v1485
    %v1518 = vcvt.s32.f32 %v1486
    %v1519 = vcvt.s32.f32 %v1487
    %v1520 = vcvt.s32.f32 %v1488
    %v1521 = vcvt.s32.f32 %v1489
    %v1522 = vcvt.s32.f32 %v1490
    %v1523 = vcvt.s32.f32 %v1491
    %v1524 = vcvt.s32.f32 %v1492
    %v1525 = vcvt.s32.f32 %v1493
    %v1526 = vcvt.s32.f32 %v1494
    %v1527 = vcvt.s32.f32 %v1495
    %v1528 = vcvt.s32.f32 %v1496
    %v1529 = vcvt.s32.f32 %v1497
    %v1530 = vcvt.s32.f32 %v1498
    %v1531 = vadd.f32 %v1307, %v1499
    %v1532 = vadd.f32 %v1308, %v1500
    %v1533 = vadd.f32 %v1309, %v1501
    %v1534 = vadd.f32 %v1310, %v1502
    %v1535 = vadd.f32 %v1311, %v1503
    %v1536 = vadd.f32 %v1312, %v1504
    %v1537 = vadd.f32 %v1313, %v1505
    %v1538 = vadd.f32 %v1314, %v1506
    %v1539 = vadd.f32 %v1315, %v1507
    %v1540 = vadd.f32 %v1316, %v1508
    %v1541 = vadd.f32 %v1317, %v1509
    %v1542 = vadd.f32 %v1318, %v1510
    %v1543 = vadd.f32 %v1319, %v1511
    %v1544 = vadd.f32 %v1320, %v1512
    %v1545 = vadd.f32 %v1321, %v1513
    %v1546 = vadd.f32 %v1322, %v1514
    %v1547 = vadd.f32 %v1323, %v1515
    %v1548 = vadd.f32 %v1324, %v1516
    %v1549 = vadd.f32 %v1325, %v1517
    %v1550 = vadd.f32 %v1326, %v1518
    %v1551 = vadd.f32 %v1327, %v1519
    %v1552 = vadd.f32 %v1328, %v1520
    %v1553 = vadd.f32 %v1329, %v1521
    %v1554 = vadd.f32 %v1330, %v1522
    %v1555 = vadd.f32 %v1331, %v1523
    %v1556 = vadd.f32 %v1332, %v1524
    %v1557 = vadd.f32 %v1333, %v1525
    %v1558 = vadd.f32 %v1334, %v1526
    %v1559 = vadd.f32 %v1335, %v1527
    %v1560 = vadd.f32 %v1336, %v1528
    %v1561 = vadd.f32 %v1337, %v1529
    %v1562 = vadd.f32 %v1338, %v1530
    %1563 = vset.pattern.permute.xlu0 5
    %1564 = vperm.xlu0 %1563, %v22
    %v1565 = vpop.permute.xlu0 %1564
    %1566 = vset.pattern.permute.xlu0 5
    %1567 = vperm.xlu0 %1566, %v23
    %v1568 = vpop.permute.xlu0 %1567
    %1569 = vset.pattern.permute.xlu0 5
    %1570 = vperm.xlu0 %1569, %v24
    %v1571 = vpop.permute.xlu0 %1570
    %1572 = vset.pattern.permute.xlu0 5
    %1573 = vperm.xlu0 %1572, %v25
    %v1574 = vpop.permute.xlu0 %1573
    %1575 = vset.pattern.permute.xlu0 5
    %1576 = vperm.xlu0 %1575, %v26
    %v1577 = vpop.permute.xlu0 %1576
    %1578 = vset.pattern.permute.xlu0 5
    %1579 = vperm.xlu0 %1578, %v27
    %v1580 = vpop.permute.xlu0 %1579
    %1581 = vset.pattern.permute.xlu0 5
    %1582 = vperm.xlu0 %1581, %v28
    %v1583 = vpop.permute.xlu0 %1582
    %1584 = vset.pattern.permute.xlu0 5
    %1585 = vperm.xlu0 %1584, %v29
    %v1586 = vpop.permute.xlu0 %1585
    %1587 = vset.pattern.permute.xlu0 5
    %1588 = vperm.xlu0 %1587, %v30
    %v1589 = vpop.permute.xlu0 %1588
    %1590 = vset.pattern.permute.xlu0 5
    %1591 = vperm.xlu0 %1590, %v31
    %v1592 = vpop.permute.xlu0 %1591
    %1593 = vset.pattern.permute.xlu0 5
    %1594 = vperm.xlu0 %1593, %v32
    %v1595 = vpop.permute.xlu0 %1594
    %1596 = vset.pattern.permute.xlu0 5
    %1597 = vperm.xlu0 %1596, %v33
    %v1598 = vpop.permute.xlu0 %1597
    %1599 = vset.pattern.permute.xlu0 5
    %1600 = vperm.xlu0 %1599, %v34
    %v1601 = vpop.permute.xlu0 %1600
    %1602 = vset.pattern.permute.xlu0 5
    %1603 = vperm.xlu0 %1602, %v35
    %v1604 = vpop.permute.xlu0 %1603
    %1605 = vset.pattern.permute.xlu0 5
    %1606 = vperm.xlu0 %1605, %v36
    %v1607 = vpop.permute.xlu0 %1606
    %1608 = vset.pattern.permute.xlu0 5
    %1609 = vperm.xlu0 %1608, %v37
    %v1610 = vpop.permute.xlu0 %1609
    %1611 = vset.pattern.permute.xlu0 5
    %1612 = vperm.xlu0 %1611, %v38
    %v1613 = vpop.permute.xlu0 %1612
    %1614 = vset.pattern.permute.xlu0 5
    %1615 = vperm.xlu0 %1614, %v39
    %v1616 = vpop.permute.xlu0 %1615
    %1617 = vset.pattern.permute.xlu0 5
    %1618 = vperm.xlu0 %1617, %v40
    %v1619 = vpop.permute.xlu0 %1618
    %1620 = vset.pattern.permute.xlu0 5
    %1621 = vperm.xlu0 %1620, %v41
    %v1622 = vpop.permute.xlu0 %1621
    %1623 = vset.pattern.permute.xlu0 5
    %1624 = vperm.xlu0 %1623, %v42
    %v1625 = vpop.permute.xlu0 %1624
    %1626 = vset.pattern.permute.xlu0 5
    %1627 = vperm.xlu0 %1626, %v43
    %v1628 = vpop.permute.xlu0 %1627
    %1629 = vset.pattern.permute.xlu0 5
    %1630 = vperm.xlu0 %1629, %v44
    %v1631 = vpop.permute.xlu0 %1630
    %1632 = vset.pattern.permute.xlu0 5
    %1633 = vperm.xlu0 %1632, %v45
    %v1634 = vpop.permute.xlu0 %1633
    %1635 = vset.pattern.permute.xlu0 5
    %1636 = vperm.xlu0 %1635, %v46
    %v1637 = vpop.permute.xlu0 %1636
    %1638 = vset.pattern.permute.xlu0 5
    %1639 = vperm.xlu0 %1638, %v47
    %v1640 = vpop.permute.xlu0 %1639
    %1641 = vset.pattern.permute.xlu0 5
    %1642 = vperm.xlu0 %1641, %v48
    %v1643 = vpop.permute.xlu0 %1642
    %1644 = vset.pattern.permute.xlu0 5
    %1645 = vperm.xlu0 %1644, %v49
    %v1646 = vpop.permute.xlu0 %1645
    %1647 = vset.pattern.permute.xlu0 5
    %1648 = vperm.xlu0 %1647, %v50
    %v1649 = vpop.permute.xlu0 %1648
    %1650 = vset.pattern.permute.xlu0 5
    %1651 = vperm.xlu0 %1650, %v51
    %v1652 = vpop.permute.xlu0 %1651
    %1653 = vset.pattern.permute.xlu0 5
    %1654 = vperm.xlu0 %1653, %v52
    %v1655 = vpop.permute.xlu0 %1654
    %1656 = vset.pattern.permute.xlu0 5
    %1657 = vperm.xlu0 %1656, %v53
    %v1658 = vpop.permute.xlu0 %1657
    %vm1659 = vcmp.eq.s32.totalorder %v55, %v1565
    %vm1660 = vcmp.eq.s32.totalorder %v55, %v1568
    %vm1661 = vcmp.eq.s32.totalorder %v55, %v1571
    %vm1662 = vcmp.eq.s32.totalorder %v55, %v1574
    %vm1663 = vcmp.eq.s32.totalorder %v55, %v1577
    %vm1664 = vcmp.eq.s32.totalorder %v55, %v1580
    %vm1665 = vcmp.eq.s32.totalorder %v55, %v1583
    %vm1666 = vcmp.eq.s32.totalorder %v55, %v1586
    %vm1667 = vcmp.eq.s32.totalorder %v55, %v1589
    %vm1668 = vcmp.eq.s32.totalorder %v55, %v1592
    %vm1669 = vcmp.eq.s32.totalorder %v55, %v1595
    %vm1670 = vcmp.eq.s32.totalorder %v55, %v1598
    %vm1671 = vcmp.eq.s32.totalorder %v55, %v1601
    %vm1672 = vcmp.eq.s32.totalorder %v55, %v1604
    %vm1673 = vcmp.eq.s32.totalorder %v55, %v1607
    %vm1674 = vcmp.eq.s32.totalorder %v55, %v1610
    %vm1675 = vcmp.eq.s32.totalorder %v55, %v1613
    %vm1676 = vcmp.eq.s32.totalorder %v55, %v1616
    %vm1677 = vcmp.eq.s32.totalorder %v55, %v1619
    %vm1678 = vcmp.eq.s32.totalorder %v55, %v1622
    %vm1679 = vcmp.eq.s32.totalorder %v55, %v1625
    %vm1680 = vcmp.eq.s32.totalorder %v55, %v1628
    %vm1681 = vcmp.eq.s32.totalorder %v55, %v1631
    %vm1682 = vcmp.eq.s32.totalorder %v55, %v1634
    %vm1683 = vcmp.eq.s32.totalorder %v55, %v1637
    %vm1684 = vcmp.eq.s32.totalorder %v55, %v1640
    %vm1685 = vcmp.eq.s32.totalorder %v55, %v1643
    %vm1686 = vcmp.eq.s32.totalorder %v55, %v1646
    %vm1687 = vcmp.eq.s32.totalorder %v55, %v1649
    %vm1688 = vcmp.eq.s32.totalorder %v55, %v1652
    %vm1689 = vcmp.eq.s32.totalorder %v55, %v1655
    %vm1690 = vcmp.eq.s32.totalorder %v55, %v1658
    %v1691 = vsel %vm1659, 1, 0
    %v1692 = vsel %vm1660, 1, 0
    %v1693 = vsel %vm1661, 1, 0
    %v1694 = vsel %vm1662, 1, 0
    %v1695 = vsel %vm1663, 1, 0
    %v1696 = vsel %vm1664, 1, 0
    %v1697 = vsel %vm1665, 1, 0
    %v1698 = vsel %vm1666, 1, 0
    %v1699 = vsel %vm1667, 1, 0
    %v1700 = vsel %vm1668, 1, 0
    %v1701 = vsel %vm1669, 1, 0
    %v1702 = vsel %vm1670, 1, 0
    %v1703 = vsel %vm1671, 1, 0
    %v1704 = vsel %vm1672, 1, 0
    %v1705 = vsel %vm1673, 1, 0
    %v1706 = vsel %vm1674, 1, 0
    %v1707 = vsel %vm1675, 1, 0
    %v1708 = vsel %vm1676, 1, 0
    %v1709 = vsel %vm1677, 1, 0
    %v1710 = vsel %vm1678, 1, 0
    %v1711 = vsel %vm1679, 1, 0
    %v1712 = vsel %vm1680, 1, 0
    %v1713 = vsel %vm1681, 1, 0
    %v1714 = vsel %vm1682, 1, 0
    %v1715 = vsel %vm1683, 1, 0
    %v1716 = vsel %vm1684, 1, 0
    %v1717 = vsel %vm1685, 1, 0
    %v1718 = vsel %vm1686, 1, 0
    %v1719 = vsel %vm1687, 1, 0
    %v1720 = vsel %vm1688, 1, 0
    %v1721 = vsel %vm1689, 1, 0
    %v1722 = vsel %vm1690, 1, 0
    %v1723 = vcvt.s32.f32 %v1691
    %v1724 = vcvt.s32.f32 %v1692
    %v1725 = vcvt.s32.f32 %v1693
    %v1726 = vcvt.s32.f32 %v1694
    %v1727 = vcvt.s32.f32 %v1695
    %v1728 = vcvt.s32.f32 %v1696
    %v1729 = vcvt.s32.f32 %v1697
    %v1730 = vcvt.s32.f32 %v1698
    %v1731 = vcvt.s32.f32 %v1699
    %v1732 = vcvt.s32.f32 %v1700
    %v1733 = vcvt.s32.f32 %v1701
    %v1734 = vcvt.s32.f32 %v1702
    %v1735 = vcvt.s32.f32 %v1703
    %v1736 = vcvt.s32.f32 %v1704
    %v1737 = vcvt.s32.f32 %v1705
    %v1738 = vcvt.s32.f32 %v1706
    %v1739 = vcvt.s32.f32 %v1707
    %v1740 = vcvt.s32.f32 %v1708
    %v1741 = vcvt.s32.f32 %v1709
    %v1742 = vcvt.s32.f32 %v1710
    %v1743 = vcvt.s32.f32 %v1711
    %v1744 = vcvt.s32.f32 %v1712
    %v1745 = vcvt.s32.f32 %v1713
    %v1746 = vcvt.s32.f32 %v1714
    %v1747 = vcvt.s32.f32 %v1715
    %v1748 = vcvt.s32.f32 %v1716
    %v1749 = vcvt.s32.f32 %v1717
    %v1750 = vcvt.s32.f32 %v1718
    %v1751 = vcvt.s32.f32 %v1719
    %v1752 = vcvt.s32.f32 %v1720
    %v1753 = vcvt.s32.f32 %v1721
    %v1754 = vcvt.s32.f32 %v1722
    %v1755 = vadd.f32 %v1531, %v1723
    %v1756 = vadd.f32 %v1532, %v1724
    %v1757 = vadd.f32 %v1533, %v1725
    %v1758 = vadd.f32 %v1534, %v1726
    %v1759 = vadd.f32 %v1535, %v1727
    %v1760 = vadd.f32 %v1536, %v1728
    %v1761 = vadd.f32 %v1537, %v1729
    %v1762 = vadd.f32 %v1538, %v1730
    %v1763 = vadd.f32 %v1539, %v1731
    %v1764 = vadd.f32 %v1540, %v1732
    %v1765 = vadd.f32 %v1541, %v1733
    %v1766 = vadd.f32 %v1542, %v1734
    %v1767 = vadd.f32 %v1543, %v1735
    %v1768 = vadd.f32 %v1544, %v1736
    %v1769 = vadd.f32 %v1545, %v1737
    %v1770 = vadd.f32 %v1546, %v1738
    %v1771 = vadd.f32 %v1547, %v1739
    %v1772 = vadd.f32 %v1548, %v1740
    %v1773 = vadd.f32 %v1549, %v1741
    %v1774 = vadd.f32 %v1550, %v1742
    %v1775 = vadd.f32 %v1551, %v1743
    %v1776 = vadd.f32 %v1552, %v1744
    %v1777 = vadd.f32 %v1553, %v1745
    %v1778 = vadd.f32 %v1554, %v1746
    %v1779 = vadd.f32 %v1555, %v1747
    %v1780 = vadd.f32 %v1556, %v1748
    %v1781 = vadd.f32 %v1557, %v1749
    %v1782 = vadd.f32 %v1558, %v1750
    %v1783 = vadd.f32 %v1559, %v1751
    %v1784 = vadd.f32 %v1560, %v1752
    %v1785 = vadd.f32 %v1561, %v1753
    %v1786 = vadd.f32 %v1562, %v1754
    %1787 = vset.pattern.permute.xlu0 6
    %1788 = vperm.xlu0 %1787, %v22
    %v1789 = vpop.permute.xlu0 %1788
    %1790 = vset.pattern.permute.xlu0 6
    %1791 = vperm.xlu0 %1790, %v23
    %v1792 = vpop.permute.xlu0 %1791
    %1793 = vset.pattern.permute.xlu0 6
    %1794 = vperm.xlu0 %1793, %v24
    %v1795 = vpop.permute.xlu0 %1794
    %1796 = vset.pattern.permute.xlu0 6
    %1797 = vperm.xlu0 %1796, %v25
    %v1798 = vpop.permute.xlu0 %1797
    %1799 = vset.pattern.permute.xlu0 6
    %1800 = vperm.xlu0 %1799, %v26
    %v1801 = vpop.permute.xlu0 %1800
    %1802 = vset.pattern.permute.xlu0 6
    %1803 = vperm.xlu0 %1802, %v27
    %v1804 = vpop.permute.xlu0 %1803
    %1805 = vset.pattern.permute.xlu0 6
    %1806 = vperm.xlu0 %1805, %v28
    %v1807 = vpop.permute.xlu0 %1806
    %1808 = vset.pattern.permute.xlu0 6
    %1809 = vperm.xlu0 %1808, %v29
    %v1810 = vpop.permute.xlu0 %1809
    %1811 = vset.pattern.permute.xlu0 6
    %1812 = vperm.xlu0 %1811, %v30
    %v1813 = vpop.permute.xlu0 %1812
    %1814 = vset.pattern.permute.xlu0 6
    %1815 = vperm.xlu0 %1814, %v31
    %v1816 = vpop.permute.xlu0 %1815
    %1817 = vset.pattern.permute.xlu0 6
    %1818 = vperm.xlu0 %1817, %v32
    %v1819 = vpop.permute.xlu0 %1818
    %1820 = vset.pattern.permute.xlu0 6
    %1821 = vperm.xlu0 %1820, %v33
    %v1822 = vpop.permute.xlu0 %1821
    %1823 = vset.pattern.permute.xlu0 6
    %1824 = vperm.xlu0 %1823, %v34
    %v1825 = vpop.permute.xlu0 %1824
    %1826 = vset.pattern.permute.xlu0 6
    %1827 = vperm.xlu0 %1826, %v35
    %v1828 = vpop.permute.xlu0 %1827
    %1829 = vset.pattern.permute.xlu0 6
    %1830 = vperm.xlu0 %1829, %v36
    %v1831 = vpop.permute.xlu0 %1830
    %1832 = vset.pattern.permute.xlu0 6
    %1833 = vperm.xlu0 %1832, %v37
    %v1834 = vpop.permute.xlu0 %1833
    %1835 = vset.pattern.permute.xlu0 6
    %1836 = vperm.xlu0 %1835, %v38
    %v1837 = vpop.permute.xlu0 %1836
    %1838 = vset.pattern.permute.xlu0 6
    %1839 = vperm.xlu0 %1838, %v39
    %v1840 = vpop.permute.xlu0 %1839
    %1841 = vset.pattern.permute.xlu0 6
    %1842 = vperm.xlu0 %1841, %v40
    %v1843 = vpop.permute.xlu0 %1842
    %1844 = vset.pattern.permute.xlu0 6
    %1845 = vperm.xlu0 %1844, %v41
    %v1846 = vpop.permute.xlu0 %1845
    %1847 = vset.pattern.permute.xlu0 6
    %1848 = vperm.xlu0 %1847, %v42
    %v1849 = vpop.permute.xlu0 %1848
    %1850 = vset.pattern.permute.xlu0 6
    %1851 = vperm.xlu0 %1850, %v43
    %v1852 = vpop.permute.xlu0 %1851
    %1853 = vset.pattern.permute.xlu0 6
    %1854 = vperm.xlu0 %1853, %v44
    %v1855 = vpop.permute.xlu0 %1854
    %1856 = vset.pattern.permute.xlu0 6
    %1857 = vperm.xlu0 %1856, %v45
    %v1858 = vpop.permute.xlu0 %1857
    %1859 = vset.pattern.permute.xlu0 6
    %1860 = vperm.xlu0 %1859, %v46
    %v1861 = vpop.permute.xlu0 %1860
    %1862 = vset.pattern.permute.xlu0 6
    %1863 = vperm.xlu0 %1862, %v47
    %v1864 = vpop.permute.xlu0 %1863
    %1865 = vset.pattern.permute.xlu0 6
    %1866 = vperm.xlu0 %1865, %v48
    %v1867 = vpop.permute.xlu0 %1866
    %1868 = vset.pattern.permute.xlu0 6
    %1869 = vperm.xlu0 %1868, %v49
    %v1870 = vpop.permute.xlu0 %1869
    %1871 = vset.pattern.permute.xlu0 6
    %1872 = vperm.xlu0 %1871, %v50
    %v1873 = vpop.permute.xlu0 %1872
    %1874 = vset.pattern.permute.xlu0 6
    %1875 = vperm.xlu0 %1874, %v51
    %v1876 = vpop.permute.xlu0 %1875
    %1877 = vset.pattern.permute.xlu0 6
    %1878 = vperm.xlu0 %1877, %v52
    %v1879 = vpop.permute.xlu0 %1878
    %1880 = vset.pattern.permute.xlu0 6
    %1881 = vperm.xlu0 %1880, %v53
    %v1882 = vpop.permute.xlu0 %1881
    %vm1883 = vcmp.eq.s32.totalorder %v55, %v1789
    %vm1884 = vcmp.eq.s32.totalorder %v55, %v1792
    %vm1885 = vcmp.eq.s32.totalorder %v55, %v1795
    %vm1886 = vcmp.eq.s32.totalorder %v55, %v1798
    %vm1887 = vcmp.eq.s32.totalorder %v55, %v1801
    %vm1888 = vcmp.eq.s32.totalorder %v55, %v1804
    %vm1889 = vcmp.eq.s32.totalorder %v55, %v1807
    %vm1890 = vcmp.eq.s32.totalorder %v55, %v1810
    %vm1891 = vcmp.eq.s32.totalorder %v55, %v1813
    %vm1892 = vcmp.eq.s32.totalorder %v55, %v1816
    %vm1893 = vcmp.eq.s32.totalorder %v55, %v1819
    %vm1894 = vcmp.eq.s32.totalorder %v55, %v1822
    %vm1895 = vcmp.eq.s32.totalorder %v55, %v1825
    %vm1896 = vcmp.eq.s32.totalorder %v55, %v1828
    %vm1897 = vcmp.eq.s32.totalorder %v55, %v1831
    %vm1898 = vcmp.eq.s32.totalorder %v55, %v1834
    %vm1899 = vcmp.eq.s32.totalorder %v55, %v1837
    %vm1900 = vcmp.eq.s32.totalorder %v55, %v1840
    %vm1901 = vcmp.eq.s32.totalorder %v55, %v1843
    %vm1902 = vcmp.eq.s32.totalorder %v55, %v1846
    %vm1903 = vcmp.eq.s32.totalorder %v55, %v1849
    %vm1904 = vcmp.eq.s32.totalorder %v55, %v1852
    %vm1905 = vcmp.eq.s32.totalorder %v55, %v1855
    %vm1906 = vcmp.eq.s32.totalorder %v55, %v1858
    %vm1907 = vcmp.eq.s32.totalorder %v55, %v1861
    %vm1908 = vcmp.eq.s32.totalorder %v55, %v1864
    %vm1909 = vcmp.eq.s32.totalorder %v55, %v1867
    %vm1910 = vcmp.eq.s32.totalorder %v55, %v1870
    %vm1911 = vcmp.eq.s32.totalorder %v55, %v1873
    %vm1912 = vcmp.eq.s32.totalorder %v55, %v1876
    %vm1913 = vcmp.eq.s32.totalorder %v55, %v1879
    %vm1914 = vcmp.eq.s32.totalorder %v55, %v1882
    %v1915 = vsel %vm1883, 1, 0
    %v1916 = vsel %vm1884, 1, 0
    %v1917 = vsel %vm1885, 1, 0
    %v1918 = vsel %vm1886, 1, 0
    %v1919 = vsel %vm1887, 1, 0
    %v1920 = vsel %vm1888, 1, 0
    %v1921 = vsel %vm1889, 1, 0
    %v1922 = vsel %vm1890, 1, 0
    %v1923 = vsel %vm1891, 1, 0
    %v1924 = vsel %vm1892, 1, 0
    %v1925 = vsel %vm1893, 1, 0
    %v1926 = vsel %vm1894, 1, 0
    %v1927 = vsel %vm1895, 1, 0
    %v1928 = vsel %vm1896, 1, 0
    %v1929 = vsel %vm1897, 1, 0
    %v1930 = vsel %vm1898, 1, 0
    %v1931 = vsel %vm1899, 1, 0
    %v1932 = vsel %vm1900, 1, 0
    %v1933 = vsel %vm1901, 1, 0
    %v1934 = vsel %vm1902, 1, 0
    %v1935 = vsel %vm1903, 1, 0
    %v1936 = vsel %vm1904, 1, 0
    %v1937 = vsel %vm1905, 1, 0
    %v1938 = vsel %vm1906, 1, 0
    %v1939 = vsel %vm1907, 1, 0
    %v1940 = vsel %vm1908, 1, 0
    %v1941 = vsel %vm1909, 1, 0
    %v1942 = vsel %vm1910, 1, 0
    %v1943 = vsel %vm1911, 1, 0
    %v1944 = vsel %vm1912, 1, 0
    %v1945 = vsel %vm1913, 1, 0
    %v1946 = vsel %vm1914, 1, 0
    %v1947 = vcvt.s32.f32 %v1915
    %v1948 = vcvt.s32.f32 %v1916
    %v1949 = vcvt.s32.f32 %v1917
    %v1950 = vcvt.s32.f32 %v1918
    %v1951 = vcvt.s32.f32 %v1919
    %v1952 = vcvt.s32.f32 %v1920
    %v1953 = vcvt.s32.f32 %v1921
    %v1954 = vcvt.s32.f32 %v1922
    %v1955 = vcvt.s32.f32 %v1923
    %v1956 = vcvt.s32.f32 %v1924
    %v1957 = vcvt.s32.f32 %v1925
    %v1958 = vcvt.s32.f32 %v1926
    %v1959 = vcvt.s32.f32 %v1927
    %v1960 = vcvt.s32.f32 %v1928
    %v1961 = vcvt.s32.f32 %v1929
    %v1962 = vcvt.s32.f32 %v1930
    %v1963 = vcvt.s32.f32 %v1931
    %v1964 = vcvt.s32.f32 %v1932
    %v1965 = vcvt.s32.f32 %v1933
    %v1966 = vcvt.s32.f32 %v1934
    %v1967 = vcvt.s32.f32 %v1935
    %v1968 = vcvt.s32.f32 %v1936
    %v1969 = vcvt.s32.f32 %v1937
    %v1970 = vcvt.s32.f32 %v1938
    %v1971 = vcvt.s32.f32 %v1939
    %v1972 = vcvt.s32.f32 %v1940
    %v1973 = vcvt.s32.f32 %v1941
    %v1974 = vcvt.s32.f32 %v1942
    %v1975 = vcvt.s32.f32 %v1943
    %v1976 = vcvt.s32.f32 %v1944
    %v1977 = vcvt.s32.f32 %v1945
    %v1978 = vcvt.s32.f32 %v1946
    %v1979 = vadd.f32 %v1755, %v1947
    %v1980 = vadd.f32 %v1756, %v1948
    %v1981 = vadd.f32 %v1757, %v1949
    %v1982 = vadd.f32 %v1758, %v1950
    %v1983 = vadd.f32 %v1759, %v1951
    %v1984 = vadd.f32 %v1760, %v1952
    %v1985 = vadd.f32 %v1761, %v1953
    %v1986 = vadd.f32 %v1762, %v1954
    %v1987 = vadd.f32 %v1763, %v1955
    %v1988 = vadd.f32 %v1764, %v1956
    %v1989 = vadd.f32 %v1765, %v1957
    %v1990 = vadd.f32 %v1766, %v1958
    %v1991 = vadd.f32 %v1767, %v1959
    %v1992 = vadd.f32 %v1768, %v1960
    %v1993 = vadd.f32 %v1769, %v1961
    %v1994 = vadd.f32 %v1770, %v1962
    %v1995 = vadd.f32 %v1771, %v1963
    %v1996 = vadd.f32 %v1772, %v1964
    %v1997 = vadd.f32 %v1773, %v1965
    %v1998 = vadd.f32 %v1774, %v1966
    %v1999 = vadd.f32 %v1775, %v1967
    %v2000 = vadd.f32 %v1776, %v1968
    %v2001 = vadd.f32 %v1777, %v1969
    %v2002 = vadd.f32 %v1778, %v1970
    %v2003 = vadd.f32 %v1779, %v1971
    %v2004 = vadd.f32 %v1780, %v1972
    %v2005 = vadd.f32 %v1781, %v1973
    %v2006 = vadd.f32 %v1782, %v1974
    %v2007 = vadd.f32 %v1783, %v1975
    %v2008 = vadd.f32 %v1784, %v1976
    %v2009 = vadd.f32 %v1785, %v1977
    %v2010 = vadd.f32 %v1786, %v1978
    %2011 = vset.pattern.permute.xlu0 7
    %2012 = vperm.xlu0 %2011, %v22
    %v2013 = vpop.permute.xlu0 %2012
    %2014 = vset.pattern.permute.xlu0 7
    %2015 = vperm.xlu0 %2014, %v23
    %v2016 = vpop.permute.xlu0 %2015
    %2017 = vset.pattern.permute.xlu0 7
    %2018 = vperm.xlu0 %2017, %v24
    %v2019 = vpop.permute.xlu0 %2018
    %2020 = vset.pattern.permute.xlu0 7
    %2021 = vperm.xlu0 %2020, %v25
    %v2022 = vpop.permute.xlu0 %2021
    %2023 = vset.pattern.permute.xlu0 7
    %2024 = vperm.xlu0 %2023, %v26
    %v2025 = vpop.permute.xlu0 %2024
    %2026 = vset.pattern.permute.xlu0 7
    %2027 = vperm.xlu0 %2026, %v27
    %v2028 = vpop.permute.xlu0 %2027
    %2029 = vset.pattern.permute.xlu0 7
    %2030 = vperm.xlu0 %2029, %v28
    %v2031 = vpop.permute.xlu0 %2030
    %2032 = vset.pattern.permute.xlu0 7
    %2033 = vperm.xlu0 %2032, %v29
    %v2034 = vpop.permute.xlu0 %2033
    %2035 = vset.pattern.permute.xlu0 7
    %2036 = vperm.xlu0 %2035, %v30
    %v2037 = vpop.permute.xlu0 %2036
    %2038 = vset.pattern.permute.xlu0 7
    %2039 = vperm.xlu0 %2038, %v31
    %v2040 = vpop.permute.xlu0 %2039
    %2041 = vset.pattern.permute.xlu0 7
    %2042 = vperm.xlu0 %2041, %v32
    %v2043 = vpop.permute.xlu0 %2042
    %2044 = vset.pattern.permute.xlu0 7
    %2045 = vperm.xlu0 %2044, %v33
    %v2046 = vpop.permute.xlu0 %2045
    %2047 = vset.pattern.permute.xlu0 7
    %2048 = vperm.xlu0 %2047, %v34
    %v2049 = vpop.permute.xlu0 %2048
    %2050 = vset.pattern.permute.xlu0 7
    %2051 = vperm.xlu0 %2050, %v35
    %v2052 = vpop.permute.xlu0 %2051
    %2053 = vset.pattern.permute.xlu0 7
    %2054 = vperm.xlu0 %2053, %v36
    %v2055 = vpop.permute.xlu0 %2054
    %2056 = vset.pattern.permute.xlu0 7
    %2057 = vperm.xlu0 %2056, %v37
    %v2058 = vpop.permute.xlu0 %2057
    %2059 = vset.pattern.permute.xlu0 7
    %2060 = vperm.xlu0 %2059, %v38
    %v2061 = vpop.permute.xlu0 %2060
    %2062 = vset.pattern.permute.xlu0 7
    %2063 = vperm.xlu0 %2062, %v39
    %v2064 = vpop.permute.xlu0 %2063
    %2065 = vset.pattern.permute.xlu0 7
    %2066 = vperm.xlu0 %2065, %v40
    %v2067 = vpop.permute.xlu0 %2066
    %2068 = vset.pattern.permute.xlu0 7
    %2069 = vperm.xlu0 %2068, %v41
    %v2070 = vpop.permute.xlu0 %2069
    %2071 = vset.pattern.permute.xlu0 7
    %2072 = vperm.xlu0 %2071, %v42
    %v2073 = vpop.permute.xlu0 %2072
    %2074 = vset.pattern.permute.xlu0 7
    %2075 = vperm.xlu0 %2074, %v43
    %v2076 = vpop.permute.xlu0 %2075
    %2077 = vset.pattern.permute.xlu0 7
    %2078 = vperm.xlu0 %2077, %v44
    %v2079 = vpop.permute.xlu0 %2078
    %2080 = vset.pattern.permute.xlu0 7
    %2081 = vperm.xlu0 %2080, %v45
    %v2082 = vpop.permute.xlu0 %2081
    %2083 = vset.pattern.permute.xlu0 7
    %2084 = vperm.xlu0 %2083, %v46
    %v2085 = vpop.permute.xlu0 %2084
    %2086 = vset.pattern.permute.xlu0 7
    %2087 = vperm.xlu0 %2086, %v47
    %v2088 = vpop.permute.xlu0 %2087
    %2089 = vset.pattern.permute.xlu0 7
    %2090 = vperm.xlu0 %2089, %v48
    %v2091 = vpop.permute.xlu0 %2090
    %2092 = vset.pattern.permute.xlu0 7
    %2093 = vperm.xlu0 %2092, %v49
    %v2094 = vpop.permute.xlu0 %2093
    %2095 = vset.pattern.permute.xlu0 7
    %2096 = vperm.xlu0 %2095, %v50
    %v2097 = vpop.permute.xlu0 %2096
    %2098 = vset.pattern.permute.xlu0 7
    %2099 = vperm.xlu0 %2098, %v51
    %v2100 = vpop.permute.xlu0 %2099
    %2101 = vset.pattern.permute.xlu0 7
    %2102 = vperm.xlu0 %2101, %v52
    %v2103 = vpop.permute.xlu0 %2102
    %2104 = vset.pattern.permute.xlu0 7
    %2105 = vperm.xlu0 %2104, %v53
    %v2106 = vpop.permute.xlu0 %2105
    %vm2107 = vcmp.eq.s32.totalorder %v55, %v2013
    %vm2108 = vcmp.eq.s32.totalorder %v55, %v2016
    %vm2109 = vcmp.eq.s32.totalorder %v55, %v2019
    %vm2110 = vcmp.eq.s32.totalorder %v55, %v2022
    %vm2111 = vcmp.eq.s32.totalorder %v55, %v2025
    %vm2112 = vcmp.eq.s32.totalorder %v55, %v2028
    %vm2113 = vcmp.eq.s32.totalorder %v55, %v2031
    %vm2114 = vcmp.eq.s32.totalorder %v55, %v2034
    %vm2115 = vcmp.eq.s32.totalorder %v55, %v2037
    %vm2116 = vcmp.eq.s32.totalorder %v55, %v2040
    %vm2117 = vcmp.eq.s32.totalorder %v55, %v2043
    %vm2118 = vcmp.eq.s32.totalorder %v55, %v2046
    %vm2119 = vcmp.eq.s32.totalorder %v55, %v2049
    %vm2120 = vcmp.eq.s32.totalorder %v55, %v2052
    %vm2121 = vcmp.eq.s32.totalorder %v55, %v2055
    %vm2122 = vcmp.eq.s32.totalorder %v55, %v2058
    %vm2123 = vcmp.eq.s32.totalorder %v55, %v2061
    %vm2124 = vcmp.eq.s32.totalorder %v55, %v2064
    %vm2125 = vcmp.eq.s32.totalorder %v55, %v2067
    %vm2126 = vcmp.eq.s32.totalorder %v55, %v2070
    %vm2127 = vcmp.eq.s32.totalorder %v55, %v2073
    %vm2128 = vcmp.eq.s32.totalorder %v55, %v2076
    %vm2129 = vcmp.eq.s32.totalorder %v55, %v2079
    %vm2130 = vcmp.eq.s32.totalorder %v55, %v2082
    %vm2131 = vcmp.eq.s32.totalorder %v55, %v2085
    %vm2132 = vcmp.eq.s32.totalorder %v55, %v2088
    %vm2133 = vcmp.eq.s32.totalorder %v55, %v2091
    %vm2134 = vcmp.eq.s32.totalorder %v55, %v2094
    %vm2135 = vcmp.eq.s32.totalorder %v55, %v2097
    %vm2136 = vcmp.eq.s32.totalorder %v55, %v2100
    %vm2137 = vcmp.eq.s32.totalorder %v55, %v2103
    %vm2138 = vcmp.eq.s32.totalorder %v55, %v2106
    %v2139 = vsel %vm2107, 1, 0
    %v2140 = vsel %vm2108, 1, 0
    %v2141 = vsel %vm2109, 1, 0
    %v2142 = vsel %vm2110, 1, 0
    %v2143 = vsel %vm2111, 1, 0
    %v2144 = vsel %vm2112, 1, 0
    %v2145 = vsel %vm2113, 1, 0
    %v2146 = vsel %vm2114, 1, 0
    %v2147 = vsel %vm2115, 1, 0
    %v2148 = vsel %vm2116, 1, 0
    %v2149 = vsel %vm2117, 1, 0
    %v2150 = vsel %vm2118, 1, 0
    %v2151 = vsel %vm2119, 1, 0
    %v2152 = vsel %vm2120, 1, 0
    %v2153 = vsel %vm2121, 1, 0
    %v2154 = vsel %vm2122, 1, 0
    %v2155 = vsel %vm2123, 1, 0
    %v2156 = vsel %vm2124, 1, 0
    %v2157 = vsel %vm2125, 1, 0
    %v2158 = vsel %vm2126, 1, 0
    %v2159 = vsel %vm2127, 1, 0
    %v2160 = vsel %vm2128, 1, 0
    %v2161 = vsel %vm2129, 1, 0
    %v2162 = vsel %vm2130, 1, 0
    %v2163 = vsel %vm2131, 1, 0
    %v2164 = vsel %vm2132, 1, 0
    %v2165 = vsel %vm2133, 1, 0
    %v2166 = vsel %vm2134, 1, 0
    %v2167 = vsel %vm2135, 1, 0
    %v2168 = vsel %vm2136, 1, 0
    %v2169 = vsel %vm2137, 1, 0
    %v2170 = vsel %vm2138, 1, 0
    %v2171 = vcvt.s32.f32 %v2139
    %v2172 = vcvt.s32.f32 %v2140
    %v2173 = vcvt.s32.f32 %v2141
    %v2174 = vcvt.s32.f32 %v2142
    %v2175 = vcvt.s32.f32 %v2143
    %v2176 = vcvt.s32.f32 %v2144
    %v2177 = vcvt.s32.f32 %v2145
    %v2178 = vcvt.s32.f32 %v2146
    %v2179 = vcvt.s32.f32 %v2147
    %v2180 = vcvt.s32.f32 %v2148
    %v2181 = vcvt.s32.f32 %v2149
    %v2182 = vcvt.s32.f32 %v2150
    %v2183 = vcvt.s32.f32 %v2151
    %v2184 = vcvt.s32.f32 %v2152
    %v2185 = vcvt.s32.f32 %v2153
    %v2186 = vcvt.s32.f32 %v2154
    %v2187 = vcvt.s32.f32 %v2155
    %v2188 = vcvt.s32.f32 %v2156
    %v2189 = vcvt.s32.f32 %v2157
    %v2190 = vcvt.s32.f32 %v2158
    %v2191 = vcvt.s32.f32 %v2159
    %v2192 = vcvt.s32.f32 %v2160
    %v2193 = vcvt.s32.f32 %v2161
    %v2194 = vcvt.s32.f32 %v2162
    %v2195 = vcvt.s32.f32 %v2163
    %v2196 = vcvt.s32.f32 %v2164
    %v2197 = vcvt.s32.f32 %v2165
    %v2198 = vcvt.s32.f32 %v2166
    %v2199 = vcvt.s32.f32 %v2167
    %v2200 = vcvt.s32.f32 %v2168
    %v2201 = vcvt.s32.f32 %v2169
    %v2202 = vcvt.s32.f32 %v2170
    %v2203 = vadd.f32 %v1979, %v2171
    %v2204 = vadd.f32 %v1980, %v2172
    %v2205 = vadd.f32 %v1981, %v2173
    %v2206 = vadd.f32 %v1982, %v2174
    %v2207 = vadd.f32 %v1983, %v2175
    %v2208 = vadd.f32 %v1984, %v2176
    %v2209 = vadd.f32 %v1985, %v2177
    %v2210 = vadd.f32 %v1986, %v2178
    %v2211 = vadd.f32 %v1987, %v2179
    %v2212 = vadd.f32 %v1988, %v2180
    %v2213 = vadd.f32 %v1989, %v2181
    %v2214 = vadd.f32 %v1990, %v2182
    %v2215 = vadd.f32 %v1991, %v2183
    %v2216 = vadd.f32 %v1992, %v2184
    %v2217 = vadd.f32 %v1993, %v2185
    %v2218 = vadd.f32 %v1994, %v2186
    %v2219 = vadd.f32 %v1995, %v2187
    %v2220 = vadd.f32 %v1996, %v2188
    %v2221 = vadd.f32 %v1997, %v2189
    %v2222 = vadd.f32 %v1998, %v2190
    %v2223 = vadd.f32 %v1999, %v2191
    %v2224 = vadd.f32 %v2000, %v2192
    %v2225 = vadd.f32 %v2001, %v2193
    %v2226 = vadd.f32 %v2002, %v2194
    %v2227 = vadd.f32 %v2003, %v2195
    %v2228 = vadd.f32 %v2004, %v2196
    %v2229 = vadd.f32 %v2005, %v2197
    %v2230 = vadd.f32 %v2006, %v2198
    %v2231 = vadd.f32 %v2007, %v2199
    %v2232 = vadd.f32 %v2008, %v2200
    %v2233 = vadd.f32 %v2009, %v2201
    %v2234 = vadd.f32 %v2010, %v2202
    %2235 = vset.pattern.permute.xlu0 8
    %2236 = vperm.xlu0 %2235, %v22
    %v2237 = vpop.permute.xlu0 %2236
    %2238 = vset.pattern.permute.xlu0 8
    %2239 = vperm.xlu0 %2238, %v23
    %v2240 = vpop.permute.xlu0 %2239
    %2241 = vset.pattern.permute.xlu0 8
    %2242 = vperm.xlu0 %2241, %v24
    %v2243 = vpop.permute.xlu0 %2242
    %2244 = vset.pattern.permute.xlu0 8
    %2245 = vperm.xlu0 %2244, %v25
    %v2246 = vpop.permute.xlu0 %2245
    %2247 = vset.pattern.permute.xlu0 8
    %2248 = vperm.xlu0 %2247, %v26
    %v2249 = vpop.permute.xlu0 %2248
    %2250 = vset.pattern.permute.xlu0 8
    %2251 = vperm.xlu0 %2250, %v27
    %v2252 = vpop.permute.xlu0 %2251
    %2253 = vset.pattern.permute.xlu0 8
    %2254 = vperm.xlu0 %2253, %v28
    %v2255 = vpop.permute.xlu0 %2254
    %2256 = vset.pattern.permute.xlu0 8
    %2257 = vperm.xlu0 %2256, %v29
    %v2258 = vpop.permute.xlu0 %2257
    %2259 = vset.pattern.permute.xlu0 8
    %2260 = vperm.xlu0 %2259, %v30
    %v2261 = vpop.permute.xlu0 %2260
    %2262 = vset.pattern.permute.xlu0 8
    %2263 = vperm.xlu0 %2262, %v31
    %v2264 = vpop.permute.xlu0 %2263
    %2265 = vset.pattern.permute.xlu0 8
    %2266 = vperm.xlu0 %2265, %v32
    %v2267 = vpop.permute.xlu0 %2266
    %2268 = vset.pattern.permute.xlu0 8
    %2269 = vperm.xlu0 %2268, %v33
    %v2270 = vpop.permute.xlu0 %2269
    %2271 = vset.pattern.permute.xlu0 8
    %2272 = vperm.xlu0 %2271, %v34
    %v2273 = vpop.permute.xlu0 %2272
    %2274 = vset.pattern.permute.xlu0 8
    %2275 = vperm.xlu0 %2274, %v35
    %v2276 = vpop.permute.xlu0 %2275
    %2277 = vset.pattern.permute.xlu0 8
    %2278 = vperm.xlu0 %2277, %v36
    %v2279 = vpop.permute.xlu0 %2278
    %2280 = vset.pattern.permute.xlu0 8
    %2281 = vperm.xlu0 %2280, %v37
    %v2282 = vpop.permute.xlu0 %2281
    %2283 = vset.pattern.permute.xlu0 8
    %2284 = vperm.xlu0 %2283, %v38
    %v2285 = vpop.permute.xlu0 %2284
    %2286 = vset.pattern.permute.xlu0 8
    %2287 = vperm.xlu0 %2286, %v39
    %v2288 = vpop.permute.xlu0 %2287
    %2289 = vset.pattern.permute.xlu0 8
    %2290 = vperm.xlu0 %2289, %v40
    %v2291 = vpop.permute.xlu0 %2290
    %2292 = vset.pattern.permute.xlu0 8
    %2293 = vperm.xlu0 %2292, %v41
    %v2294 = vpop.permute.xlu0 %2293
    %2295 = vset.pattern.permute.xlu0 8
    %2296 = vperm.xlu0 %2295, %v42
    %v2297 = vpop.permute.xlu0 %2296
    %2298 = vset.pattern.permute.xlu0 8
    %2299 = vperm.xlu0 %2298, %v43
    %v2300 = vpop.permute.xlu0 %2299
    %2301 = vset.pattern.permute.xlu0 8
    %2302 = vperm.xlu0 %2301, %v44
    %v2303 = vpop.permute.xlu0 %2302
    %2304 = vset.pattern.permute.xlu0 8
    %2305 = vperm.xlu0 %2304, %v45
    %v2306 = vpop.permute.xlu0 %2305
    %2307 = vset.pattern.permute.xlu0 8
    %2308 = vperm.xlu0 %2307, %v46
    %v2309 = vpop.permute.xlu0 %2308
    %2310 = vset.pattern.permute.xlu0 8
    %2311 = vperm.xlu0 %2310, %v47
    %v2312 = vpop.permute.xlu0 %2311
    %2313 = vset.pattern.permute.xlu0 8
    %2314 = vperm.xlu0 %2313, %v48
    %v2315 = vpop.permute.xlu0 %2314
    %2316 = vset.pattern.permute.xlu0 8
    %2317 = vperm.xlu0 %2316, %v49
    %v2318 = vpop.permute.xlu0 %2317
    %2319 = vset.pattern.permute.xlu0 8
    %2320 = vperm.xlu0 %2319, %v50
    %v2321 = vpop.permute.xlu0 %2320
    %2322 = vset.pattern.permute.xlu0 8
    %2323 = vperm.xlu0 %2322, %v51
    %v2324 = vpop.permute.xlu0 %2323
    %2325 = vset.pattern.permute.xlu0 8
    %2326 = vperm.xlu0 %2325, %v52
    %v2327 = vpop.permute.xlu0 %2326
    %2328 = vset.pattern.permute.xlu0 8
    %2329 = vperm.xlu0 %2328, %v53
    %v2330 = vpop.permute.xlu0 %2329
    %vm2331 = vcmp.eq.s32.totalorder %v55, %v2237
    %vm2332 = vcmp.eq.s32.totalorder %v55, %v2240
    %vm2333 = vcmp.eq.s32.totalorder %v55, %v2243
    %vm2334 = vcmp.eq.s32.totalorder %v55, %v2246
    %vm2335 = vcmp.eq.s32.totalorder %v55, %v2249
    %vm2336 = vcmp.eq.s32.totalorder %v55, %v2252
    %vm2337 = vcmp.eq.s32.totalorder %v55, %v2255
    %vm2338 = vcmp.eq.s32.totalorder %v55, %v2258
    %vm2339 = vcmp.eq.s32.totalorder %v55, %v2261
    %vm2340 = vcmp.eq.s32.totalorder %v55, %v2264
    %vm2341 = vcmp.eq.s32.totalorder %v55, %v2267
    %vm2342 = vcmp.eq.s32.totalorder %v55, %v2270
    %vm2343 = vcmp.eq.s32.totalorder %v55, %v2273
    %vm2344 = vcmp.eq.s32.totalorder %v55, %v2276
    %vm2345 = vcmp.eq.s32.totalorder %v55, %v2279
    %vm2346 = vcmp.eq.s32.totalorder %v55, %v2282
    %vm2347 = vcmp.eq.s32.totalorder %v55, %v2285
    %vm2348 = vcmp.eq.s32.totalorder %v55, %v2288
    %vm2349 = vcmp.eq.s32.totalorder %v55, %v2291
    %vm2350 = vcmp.eq.s32.totalorder %v55, %v2294
    %vm2351 = vcmp.eq.s32.totalorder %v55, %v2297
    %vm2352 = vcmp.eq.s32.totalorder %v55, %v2300
    %vm2353 = vcmp.eq.s32.totalorder %v55, %v2303
    %vm2354 = vcmp.eq.s32.totalorder %v55, %v2306
    %vm2355 = vcmp.eq.s32.totalorder %v55, %v2309
    %vm2356 = vcmp.eq.s32.totalorder %v55, %v2312
    %vm2357 = vcmp.eq.s32.totalorder %v55, %v2315
    %vm2358 = vcmp.eq.s32.totalorder %v55, %v2318
    %vm2359 = vcmp.eq.s32.totalorder %v55, %v2321
    %vm2360 = vcmp.eq.s32.totalorder %v55, %v2324
    %vm2361 = vcmp.eq.s32.totalorder %v55, %v2327
    %vm2362 = vcmp.eq.s32.totalorder %v55, %v2330
    %v2363 = vsel %vm2331, 1, 0
    %v2364 = vsel %vm2332, 1, 0
    %v2365 = vsel %vm2333, 1, 0
    %v2366 = vsel %vm2334, 1, 0
    %v2367 = vsel %vm2335, 1, 0
    %v2368 = vsel %vm2336, 1, 0
    %v2369 = vsel %vm2337, 1, 0
    %v2370 = vsel %vm2338, 1, 0
    %v2371 = vsel %vm2339, 1, 0
    %v2372 = vsel %vm2340, 1, 0
    %v2373 = vsel %vm2341, 1, 0
    %v2374 = vsel %vm2342, 1, 0
    %v2375 = vsel %vm2343, 1, 0
    %v2376 = vsel %vm2344, 1, 0
    %v2377 = vsel %vm2345, 1, 0
    %v2378 = vsel %vm2346, 1, 0
    %v2379 = vsel %vm2347, 1, 0
    %v2380 = vsel %vm2348, 1, 0
    %v2381 = vsel %vm2349, 1, 0
    %v2382 = vsel %vm2350, 1, 0
    %v2383 = vsel %vm2351, 1, 0
    %v2384 = vsel %vm2352, 1, 0
    %v2385 = vsel %vm2353, 1, 0
    %v2386 = vsel %vm2354, 1, 0
    %v2387 = vsel %vm2355, 1, 0
    %v2388 = vsel %vm2356, 1, 0
    %v2389 = vsel %vm2357, 1, 0
    %v2390 = vsel %vm2358, 1, 0
    %v2391 = vsel %vm2359, 1, 0
    %v2392 = vsel %vm2360, 1, 0
    %v2393 = vsel %vm2361, 1, 0
    %v2394 = vsel %vm2362, 1, 0
    %v2395 = vcvt.s32.f32 %v2363
    %v2396 = vcvt.s32.f32 %v2364
    %v2397 = vcvt.s32.f32 %v2365
    %v2398 = vcvt.s32.f32 %v2366
    %v2399 = vcvt.s32.f32 %v2367
    %v2400 = vcvt.s32.f32 %v2368
    %v2401 = vcvt.s32.f32 %v2369
    %v2402 = vcvt.s32.f32 %v2370
    %v2403 = vcvt.s32.f32 %v2371
    %v2404 = vcvt.s32.f32 %v2372
    %v2405 = vcvt.s32.f32 %v2373
    %v2406 = vcvt.s32.f32 %v2374
    %v2407 = vcvt.s32.f32 %v2375
    %v2408 = vcvt.s32.f32 %v2376
    %v2409 = vcvt.s32.f32 %v2377
    %v2410 = vcvt.s32.f32 %v2378
    %v2411 = vcvt.s32.f32 %v2379
    %v2412 = vcvt.s32.f32 %v2380
    %v2413 = vcvt.s32.f32 %v2381
    %v2414 = vcvt.s32.f32 %v2382
    %v2415 = vcvt.s32.f32 %v2383
    %v2416 = vcvt.s32.f32 %v2384
    %v2417 = vcvt.s32.f32 %v2385
    %v2418 = vcvt.s32.f32 %v2386
    %v2419 = vcvt.s32.f32 %v2387
    %v2420 = vcvt.s32.f32 %v2388
    %v2421 = vcvt.s32.f32 %v2389
    %v2422 = vcvt.s32.f32 %v2390
    %v2423 = vcvt.s32.f32 %v2391
    %v2424 = vcvt.s32.f32 %v2392
    %v2425 = vcvt.s32.f32 %v2393
    %v2426 = vcvt.s32.f32 %v2394
    %v2427 = vadd.f32 %v2203, %v2395
    %v2428 = vadd.f32 %v2204, %v2396
    %v2429 = vadd.f32 %v2205, %v2397
    %v2430 = vadd.f32 %v2206, %v2398
    %v2431 = vadd.f32 %v2207, %v2399
    %v2432 = vadd.f32 %v2208, %v2400
    %v2433 = vadd.f32 %v2209, %v2401
    %v2434 = vadd.f32 %v2210, %v2402
    %v2435 = vadd.f32 %v2211, %v2403
    %v2436 = vadd.f32 %v2212, %v2404
    %v2437 = vadd.f32 %v2213, %v2405
    %v2438 = vadd.f32 %v2214, %v2406
    %v2439 = vadd.f32 %v2215, %v2407
    %v2440 = vadd.f32 %v2216, %v2408
    %v2441 = vadd.f32 %v2217, %v2409
    %v2442 = vadd.f32 %v2218, %v2410
    %v2443 = vadd.f32 %v2219, %v2411
    %v2444 = vadd.f32 %v2220, %v2412
    %v2445 = vadd.f32 %v2221, %v2413
    %v2446 = vadd.f32 %v2222, %v2414
    %v2447 = vadd.f32 %v2223, %v2415
    %v2448 = vadd.f32 %v2224, %v2416
    %v2449 = vadd.f32 %v2225, %v2417
    %v2450 = vadd.f32 %v2226, %v2418
    %v2451 = vadd.f32 %v2227, %v2419
    %v2452 = vadd.f32 %v2228, %v2420
    %v2453 = vadd.f32 %v2229, %v2421
    %v2454 = vadd.f32 %v2230, %v2422
    %v2455 = vadd.f32 %v2231, %v2423
    %v2456 = vadd.f32 %v2232, %v2424
    %v2457 = vadd.f32 %v2233, %v2425
    %v2458 = vadd.f32 %v2234, %v2426
    %v2459 = vpack.c.bf16 %v2428, %v2427
    %v2460 = vpack.c.bf16 %v2430, %v2429
    %v2461 = vpack.c.bf16 %v2432, %v2431
    %v2462 = vpack.c.bf16 %v2434, %v2433
    %v2463 = vpack.c.bf16 %v2436, %v2435
    %v2464 = vpack.c.bf16 %v2438, %v2437
    %v2465 = vpack.c.bf16 %v2440, %v2439
    %v2466 = vpack.c.bf16 %v2442, %v2441
    %v2467 = vpack.c.bf16 %v2444, %v2443
    %v2468 = vpack.c.bf16 %v2446, %v2445
    %v2469 = vpack.c.bf16 %v2448, %v2447
    %v2470 = vpack.c.bf16 %v2450, %v2449
    %v2471 = vpack.c.bf16 %v2452, %v2451
    %v2472 = vpack.c.bf16 %v2454, %v2453
    %v2473 = vpack.c.bf16 %v2456, %v2455
    %v2474 = vpack.c.bf16 %v2458, %v2457
    %v2475 = vld [vmem:[%s2] sm:$0xf]
    %v2476 = vld [vmem:[%s2 + $0x4] sm:$0xf]
    %v2477 = vld [vmem:[%s2 + $0x8] sm:$0xf]
    %v2478 = vld [vmem:[%s2 + $0xc] sm:$0xf]
    %v2479 = vld [vmem:[%s2 + $0x10] sm:$0xf]
    %v2480 = vld [vmem:[%s2 + $0x14] sm:$0xf]
    %v2481 = vld [vmem:[%s2 + $0x18] sm:$0xf]
    %v2482 = vld [vmem:[%s2 + $0x1c] sm:$0xf]
    %v2483 = vld [vmem:[%s2 + $0x20] sm:$0xf]
    %v2484 = vld [vmem:[%s2 + $0x24] sm:$0xf]
    %v2485 = vld [vmem:[%s2 + $0x28] sm:$0xf]
    %v2486 = vld [vmem:[%s2 + $0x2c] sm:$0xf]
    %v2487 = vld [vmem:[%s2 + $0x30] sm:$0xf]
    %v2488 = vld [vmem:[%s2 + $0x34] sm:$0xf]
    %v2489 = vld [vmem:[%s2 + $0x38] sm:$0xf]
    %v2490 = vld [vmem:[%s2 + $0x3c] sm:$0xf]
    %v2507 = vunpack.c.l.b16 %v2475
    %v2508 = vunpack.c.l.b16 %v2476
    %v2509 = vunpack.c.l.b16 %v2477
    %v2510 = vunpack.c.l.b16 %v2478
    %v2511 = vunpack.c.l.b16 %v2479
    %v2512 = vunpack.c.l.b16 %v2480
    %v2513 = vunpack.c.l.b16 %v2481
    %v2514 = vunpack.c.l.b16 %v2482
    %v2515 = vunpack.c.l.b16 %v2483
    %v2516 = vunpack.c.l.b16 %v2484
    %v2517 = vunpack.c.l.b16 %v2485
    %v2518 = vunpack.c.l.b16 %v2486
    %v2519 = vunpack.c.l.b16 %v2487
    %v2520 = vunpack.c.l.b16 %v2488
    %v2521 = vunpack.c.l.b16 %v2489
    %v2522 = vunpack.c.l.b16 %v2490
    %v2523 = vpack.c.b16 %v2508, %v2507
    %v2524 = vpack.c.b16 %v2510, %v2509
    %v2525 = vpack.c.b16 %v2512, %v2511
    %v2526 = vpack.c.b16 %v2514, %v2513
    %v2527 = vpack.c.b16 %v2516, %v2515
    %v2528 = vpack.c.b16 %v2518, %v2517
    %v2529 = vpack.c.b16 %v2520, %v2519
    %v2530 = vpack.c.b16 %v2522, %v2521
    %2539 = vmatprep.subr.bf16.mxu0 0
    %2540 = vmatpush1.bf16.msra.mxu0 %v2523
    %2541 = vmatprep.subr.bf16.mxu0 0
    %2542 = vmatpush1.bf16.msra.mxu0 %v2524
    %2543 = vmatprep.subr.bf16.mxu0 0
    %2544 = vmatpush1.bf16.msra.mxu0 %v2525
    %2545 = vmatprep.subr.bf16.mxu0 0
    %2546 = vmatpush1.bf16.msra.mxu0 %v2526
    %2547 = vmatprep.subr.bf16.mxu0 0
    %2548 = vmatpush1.bf16.msra.mxu0 %v2527
    %2549 = vmatprep.subr.bf16.mxu0 0
    %2550 = vmatpush1.bf16.msra.mxu0 %v2528
    %2551 = vmatprep.subr.bf16.mxu0 0
    %2552 = vmatpush1.bf16.msra.mxu0 %v2529
    %2553 = vmatprep.subr.bf16.mxu0 0
    %2554 = vmatpush1.bf16.msra.mxu0 %v2530
    %2555 = vmatprep.subr.bf16.mxu0 0
    %2556 = vmatpush1.bf16.msra.mxu0 0
    %2557 = vmatprep.subr.bf16.mxu0 0
    %2558 = vmatpush1.bf16.msra.mxu0 0
    %2559 = vmatprep.subr.bf16.mxu0 0
    %2560 = vmatpush1.bf16.msra.mxu0 0
    %2561 = vmatprep.subr.bf16.mxu0 0
    %2562 = vmatpush1.bf16.msra.mxu0 0
    %2563 = vmatprep.subr.bf16.mxu0 0
    %2564 = vmatpush1.bf16.msra.mxu0 0
    %2565 = vmatprep.subr.bf16.mxu0 0
    %2566 = vmatpush1.bf16.msra.mxu0 0
    %2567 = vmatprep.subr.bf16.mxu0 0
    %2568 = vmatpush1.bf16.msra.mxu0 0
    %2569 = vmatprep.subr.bf16.mxu0 0
    %2570 = vmatpush1.bf16.msra.mxu0 0
    %2571 = vmatprep.mubr.bf16.mxu0 0
    %2572 = vmatmul.mubr.bf16.gmra.mrb[0].mxu0 %v2459
    %v2573 = vpop.f32.mrb[0].mxu0
    %v2574 = vadd.f32 0.0, %v2573
    %v2575 = vpop.f32.mrb[0].mxu0
    %v2576 = vpop.f32.mrb[0].mxu0
    %v2577 = vadd.f32 0.0, %v2576
    %v2578 = vpop.f32.mrb[0].mxu0
    %2579 = vmatprep.mubr.bf16.mxu0 0
    %2580 = vmatmul.mubr.bf16.gmra.mrb[0].mxu0 %v2460
    %v2581 = vpop.f32.mrb[0].mxu0
    %v2582 = vadd.f32 0.0, %v2581
    %v2583 = vpop.f32.mrb[0].mxu0
    %v2584 = vpop.f32.mrb[0].mxu0
    %v2585 = vadd.f32 0.0, %v2584
    %v2586 = vpop.f32.mrb[0].mxu0
    %2587 = vmatprep.mubr.bf16.mxu0 0
    %2588 = vmatmul.mubr.bf16.gmra.mrb[0].mxu0 %v2461
    %v2589 = vpop.f32.mrb[0].mxu0
    %v2590 = vadd.f32 0.0, %v2589
    %v2591 = vpop.f32.mrb[0].mxu0
    %v2592 = vpop.f32.mrb[0].mxu0
    %v2593 = vadd.f32 0.0, %v2592
    %v2594 = vpop.f32.mrb[0].mxu0
    %2595 = vmatprep.mubr.bf16.mxu0 0
    %2596 = vmatmul.mubr.bf16.gmra.mrb[0].mxu0 %v2462
    %v2597 = vpop.f32.mrb[0].mxu0
    %v2598 = vadd.f32 0.0, %v2597
    %v2599 = vpop.f32.mrb[0].mxu0
    %v2600 = vpop.f32.mrb[0].mxu0
    %v2601 = vadd.f32 0.0, %v2600
    %v2602 = vpop.f32.mrb[0].mxu0
    %2603 = vmatprep.mubr.bf16.mxu0 0
    %2604 = vmatmul.mubr.bf16.gmra.mrb[0].mxu0 %v2463
    %v2605 = vpop.f32.mrb[0].mxu0
    %v2606 = vadd.f32 0.0, %v2605
    %v2607 = vpop.f32.mrb[0].mxu0
    %v2608 = vpop.f32.mrb[0].mxu0
    %v2609 = vadd.f32 0.0, %v2608
    %v2610 = vpop.f32.mrb[0].mxu0
    %2611 = vmatprep.mubr.bf16.mxu0 0
    %2612 = vmatmul.mubr.bf16.gmra.mrb[0].mxu0 %v2464
    %v2613 = vpop.f32.mrb[0].mxu0
    %v2614 = vadd.f32 0.0, %v2613
    %v2615 = vpop.f32.mrb[0].mxu0
    %v2616 = vpop.f32.mrb[0].mxu0
    %v2617 = vadd.f32 0.0, %v2616
    %v2618 = vpop.f32.mrb[0].mxu0
    %2619 = vmatprep.mubr.bf16.mxu0 0
    %2620 = vmatmul.mubr.bf16.gmra.mrb[0].mxu0 %v2465
    %v2621 = vpop.f32.mrb[0].mxu0
    %v2622 = vadd.f32 0.0, %v2621
    %v2623 = vpop.f32.mrb[0].mxu0
    %v2624 = vpop.f32.mrb[0].mxu0
    %v2625 = vadd.f32 0.0, %v2624
    %v2626 = vpop.f32.mrb[0].mxu0
    %2627 = vmatprep.mubr.bf16.mxu0 0
    %2628 = vmatmul.mubr.bf16.gmra.mrb[0].mxu0 %v2466
    %v2629 = vpop.f32.mrb[0].mxu0
    %v2630 = vadd.f32 0.0, %v2629
    %v2631 = vpop.f32.mrb[0].mxu0
    %v2632 = vpop.f32.mrb[0].mxu0
    %v2633 = vadd.f32 0.0, %v2632
    %v2634 = vpop.f32.mrb[0].mxu0
    %2635 = vmatprep.mubr.bf16.mxu0 0
    %2636 = vmatmul.mubr.bf16.gmra.mrb[0].mxu0 %v2467
    %v2637 = vpop.f32.mrb[0].mxu0
    %v2638 = vadd.f32 0.0, %v2637
    %v2639 = vpop.f32.mrb[0].mxu0
    %v2640 = vpop.f32.mrb[0].mxu0
    %v2641 = vadd.f32 0.0, %v2640
    %v2642 = vpop.f32.mrb[0].mxu0
    %2643 = vmatprep.mubr.bf16.mxu0 0
    %2644 = vmatmul.mubr.bf16.gmra.mrb[0].mxu0 %v2468
    %v2645 = vpop.f32.mrb[0].mxu0
    %v2646 = vadd.f32 0.0, %v2645
    %v2647 = vpop.f32.mrb[0].mxu0
    %v2648 = vpop.f32.mrb[0].mxu0
    %v2649 = vadd.f32 0.0, %v2648
    %v2650 = vpop.f32.mrb[0].mxu0
    %2651 = vmatprep.mubr.bf16.mxu0 0
    %2652 = vmatmul.mubr.bf16.gmra.mrb[0].mxu0 %v2469
    %v2653 = vpop.f32.mrb[0].mxu0
    %v2654 = vadd.f32 0.0, %v2653
    %v2655 = vpop.f32.mrb[0].mxu0
    %v2656 = vpop.f32.mrb[0].mxu0
    %v2657 = vadd.f32 0.0, %v2656
    %v2658 = vpop.f32.mrb[0].mxu0
    %2659 = vmatprep.mubr.bf16.mxu0 0
    %2660 = vmatmul.mubr.bf16.gmra.mrb[0].mxu0 %v2470
    %v2661 = vpop.f32.mrb[0].mxu0
    %v2662 = vadd.f32 0.0, %v2661
    %v2663 = vpop.f32.mrb[0].mxu0
    %v2664 = vpop.f32.mrb[0].mxu0
    %v2665 = vadd.f32 0.0, %v2664
    %v2666 = vpop.f32.mrb[0].mxu0
    %2667 = vmatprep.mubr.bf16.mxu0 0
    %2668 = vmatmul.mubr.bf16.gmra.mrb[0].mxu0 %v2471
    %v2669 = vpop.f32.mrb[0].mxu0
    %v2670 = vadd.f32 0.0, %v2669
    %v2671 = vpop.f32.mrb[0].mxu0
    %v2672 = vpop.f32.mrb[0].mxu0
    %v2673 = vadd.f32 0.0, %v2672
    %v2674 = vpop.f32.mrb[0].mxu0
    %2675 = vmatprep.mubr.bf16.mxu0 0
    %2676 = vmatmul.mubr.bf16.gmra.mrb[0].mxu0 %v2472
    %v2677 = vpop.f32.mrb[0].mxu0
    %v2678 = vadd.f32 0.0, %v2677
    %v2679 = vpop.f32.mrb[0].mxu0
    %v2680 = vpop.f32.mrb[0].mxu0
    %v2681 = vadd.f32 0.0, %v2680
    %v2682 = vpop.f32.mrb[0].mxu0
    %2683 = vmatprep.mubr.bf16.mxu0 0
    %2684 = vmatmul.mubr.bf16.gmra.mrb[0].mxu0 %v2473
    %v2685 = vpop.f32.mrb[0].mxu0
    %v2686 = vadd.f32 0.0, %v2685
    %v2687 = vpop.f32.mrb[0].mxu0
    %v2688 = vpop.f32.mrb[0].mxu0
    %v2689 = vadd.f32 0.0, %v2688
    %v2690 = vpop.f32.mrb[0].mxu0
    %2691 = vmatprep.mubr.bf16.mxu0 0
    %2692 = vmatmul.mubr.bf16.gmra.mrb[0].mxu0 %v2474
    %v2693 = vpop.f32.mrb[0].mxu0
    %v2694 = vadd.f32 0.0, %v2693
    %v2695 = vpop.f32.mrb[0].mxu0
    %v2696 = vpop.f32.mrb[0].mxu0
    %v2697 = vadd.f32 0.0, %v2696
    %v2698 = vpop.f32.mrb[0].mxu0
    %2699 = vdwg.mxu0
    %v2700 = vpack.c.bf16 %v2577, %v2574
    %v2701 = vpack.c.bf16 %v2585, %v2582
    %v2702 = vpack.c.bf16 %v2593, %v2590
    %v2703 = vpack.c.bf16 %v2601, %v2598
    %v2704 = vpack.c.bf16 %v2609, %v2606
    %v2705 = vpack.c.bf16 %v2617, %v2614
    %v2706 = vpack.c.bf16 %v2625, %v2622
    %v2707 = vpack.c.bf16 %v2633, %v2630
    %v2708 = vpack.c.bf16 %v2641, %v2638
    %v2709 = vpack.c.bf16 %v2649, %v2646
    %v2710 = vpack.c.bf16 %v2657, %v2654
    %v2711 = vpack.c.bf16 %v2665, %v2662
    %v2712 = vpack.c.bf16 %v2673, %v2670
    %v2713 = vpack.c.bf16 %v2681, %v2678
    %v2714 = vpack.c.bf16 %v2689, %v2686
    %v2715 = vpack.c.bf16 %v2697, %v2694
    %v2716 = vld [vmem:[%s3] sm:$0xf]
    %v2717 = vld [vmem:[%s3 + $0x4] sm:$0xf]
    %v2718 = vld [vmem:[%s3 + $0x8] sm:$0xf]
    %v2719 = vld [vmem:[%s3 + $0xc] sm:$0xf]
    %v2720 = vld [vmem:[%s3 + $0x10] sm:$0xf]
    %v2721 = vld [vmem:[%s3 + $0x14] sm:$0xf]
    %v2722 = vld [vmem:[%s3 + $0x18] sm:$0xf]
    %v2723 = vld [vmem:[%s3 + $0x1c] sm:$0xf]
    %v2724 = vld [vmem:[%s3 + $0x20] sm:$0xf]
    %v2725 = vld [vmem:[%s3 + $0x24] sm:$0xf]
    %v2726 = vld [vmem:[%s3 + $0x28] sm:$0xf]
    %v2727 = vld [vmem:[%s3 + $0x2c] sm:$0xf]
    %v2728 = vld [vmem:[%s3 + $0x30] sm:$0xf]
    %v2729 = vld [vmem:[%s3 + $0x34] sm:$0xf]
    %v2730 = vld [vmem:[%s3 + $0x38] sm:$0xf]
    %v2731 = vld [vmem:[%s3 + $0x3c] sm:$0xf]
    %v2732 = vld [vmem:[%s4] sm:$0x1]
    %v2734 = vlaneseq
    %v2735 = vshrl.u32 %v2734, 7
    %v2736 = vsub.s32 0, %v2735
    %v2737 = vrot.slane %v2732, %v2736
    %v2755 = vunpack.c.l.b16 %v2716
    %v2756 = vunpack.c.l.b16 %v2717
    %v2757 = vunpack.c.l.b16 %v2718
    %v2758 = vunpack.c.l.b16 %v2719
    %v2759 = vunpack.c.l.b16 %v2720
    %v2760 = vunpack.c.l.b16 %v2721
    %v2761 = vunpack.c.l.b16 %v2722
    %v2762 = vunpack.c.l.b16 %v2723
    %v2763 = vunpack.c.l.b16 %v2724
    %v2764 = vunpack.c.l.b16 %v2725
    %v2765 = vunpack.c.l.b16 %v2726
    %v2766 = vunpack.c.l.b16 %v2727
    %v2767 = vunpack.c.l.b16 %v2728
    %v2768 = vunpack.c.l.b16 %v2729
    %v2769 = vunpack.c.l.b16 %v2730
    %v2770 = vunpack.c.l.b16 %v2731
    %v2771 = vpack.c.b16 %v2756, %v2755
    %v2772 = vpack.c.b16 %v2758, %v2757
    %v2773 = vpack.c.b16 %v2760, %v2759
    %v2774 = vpack.c.b16 %v2762, %v2761
    %v2775 = vpack.c.b16 %v2764, %v2763
    %v2776 = vpack.c.b16 %v2766, %v2765
    %v2777 = vpack.c.b16 %v2768, %v2767
    %v2778 = vpack.c.b16 %v2770, %v2769
    %2787 = vmatprep.subr.bf16.mxu0 0
    %2788 = vmatpush1.bf16.msra.mxu0 %v2771
    %2789 = vmatprep.subr.bf16.mxu0 0
    %2790 = vmatpush1.bf16.msra.mxu0 %v2772
    %2791 = vmatprep.subr.bf16.mxu0 0
    %2792 = vmatpush1.bf16.msra.mxu0 %v2773
    %2793 = vmatprep.subr.bf16.mxu0 0
    %2794 = vmatpush1.bf16.msra.mxu0 %v2774
    %2795 = vmatprep.subr.bf16.mxu0 0
    %2796 = vmatpush1.bf16.msra.mxu0 %v2775
    %2797 = vmatprep.subr.bf16.mxu0 0
    %2798 = vmatpush1.bf16.msra.mxu0 %v2776
    %2799 = vmatprep.subr.bf16.mxu0 0
    %2800 = vmatpush1.bf16.msra.mxu0 %v2777
    %2801 = vmatprep.subr.bf16.mxu0 0
    %2802 = vmatpush1.bf16.msra.mxu0 %v2778
    %2803 = vmatprep.subr.bf16.mxu0 0
    %2804 = vmatpush1.bf16.msra.mxu0 0
    %2805 = vmatprep.subr.bf16.mxu0 0
    %2806 = vmatpush1.bf16.msra.mxu0 0
    %2807 = vmatprep.subr.bf16.mxu0 0
    %2808 = vmatpush1.bf16.msra.mxu0 0
    %2809 = vmatprep.subr.bf16.mxu0 0
    %2810 = vmatpush1.bf16.msra.mxu0 0
    %2811 = vmatprep.subr.bf16.mxu0 0
    %2812 = vmatpush1.bf16.msra.mxu0 0
    %2813 = vmatprep.subr.bf16.mxu0 0
    %2814 = vmatpush1.bf16.msra.mxu0 0
    %2815 = vmatprep.subr.bf16.mxu0 0
    %2816 = vmatpush1.bf16.msra.mxu0 0
    %2817 = vmatprep.subr.bf16.mxu0 0
    %2818 = vmatpush1.bf16.msra.mxu0 0
    %2819 = vmatprep.mubr.bf16.mxu0 0
    %2820 = vmatmul.mubr.bf16.gmra.mrb[0].mxu0 %v2700
    %v2821 = vpop.f32.mrb[0].mxu0
    %v2822 = vadd.f32 %v2737, %v2821
    %v2823 = vpop.f32.mrb[0].mxu0
    %v2824 = vpop.f32.mrb[0].mxu0
    %v2825 = vadd.f32 %v2737, %v2824
    %v2826 = vpop.f32.mrb[0].mxu0
    %2827 = vmatprep.mubr.bf16.mxu0 0
    %2828 = vmatmul.mubr.bf16.gmra.mrb[0].mxu0 %v2701
    %v2829 = vpop.f32.mrb[0].mxu0
    %v2830 = vadd.f32 %v2737, %v2829
    %v2831 = vpop.f32.mrb[0].mxu0
    %v2832 = vpop.f32.mrb[0].mxu0
    %v2833 = vadd.f32 %v2737, %v2832
    %v2834 = vpop.f32.mrb[0].mxu0
    %2835 = vmatprep.mubr.bf16.mxu0 0
    %2836 = vmatmul.mubr.bf16.gmra.mrb[0].mxu0 %v2702
    %v2837 = vpop.f32.mrb[0].mxu0
    %v2838 = vadd.f32 %v2737, %v2837
    %v2839 = vpop.f32.mrb[0].mxu0
    %v2840 = vpop.f32.mrb[0].mxu0
    %v2841 = vadd.f32 %v2737, %v2840
    %v2842 = vpop.f32.mrb[0].mxu0
    %2843 = vmatprep.mubr.bf16.mxu0 0
    %2844 = vmatmul.mubr.bf16.gmra.mrb[0].mxu0 %v2703
    %v2845 = vpop.f32.mrb[0].mxu0
    %v2846 = vadd.f32 %v2737, %v2845
    %v2847 = vpop.f32.mrb[0].mxu0
    %v2848 = vpop.f32.mrb[0].mxu0
    %v2849 = vadd.f32 %v2737, %v2848
    %v2850 = vpop.f32.mrb[0].mxu0
    %2851 = vmatprep.mubr.bf16.mxu0 0
    %2852 = vmatmul.mubr.bf16.gmra.mrb[0].mxu0 %v2704
    %v2853 = vpop.f32.mrb[0].mxu0
    %v2854 = vadd.f32 %v2737, %v2853
    %v2855 = vpop.f32.mrb[0].mxu0
    %v2856 = vpop.f32.mrb[0].mxu0
    %v2857 = vadd.f32 %v2737, %v2856
    %v2858 = vpop.f32.mrb[0].mxu0
    %2859 = vmatprep.mubr.bf16.mxu0 0
    %2860 = vmatmul.mubr.bf16.gmra.mrb[0].mxu0 %v2705
    %v2861 = vpop.f32.mrb[0].mxu0
    %v2862 = vadd.f32 %v2737, %v2861
    %v2863 = vpop.f32.mrb[0].mxu0
    %v2864 = vpop.f32.mrb[0].mxu0
    %v2865 = vadd.f32 %v2737, %v2864
    %v2866 = vpop.f32.mrb[0].mxu0
    %2867 = vmatprep.mubr.bf16.mxu0 0
    %2868 = vmatmul.mubr.bf16.gmra.mrb[0].mxu0 %v2706
    %v2869 = vpop.f32.mrb[0].mxu0
    %v2870 = vadd.f32 %v2737, %v2869
    %v2871 = vpop.f32.mrb[0].mxu0
    %v2872 = vpop.f32.mrb[0].mxu0
    %v2873 = vadd.f32 %v2737, %v2872
    %v2874 = vpop.f32.mrb[0].mxu0
    %2875 = vmatprep.mubr.bf16.mxu0 0
    %2876 = vmatmul.mubr.bf16.gmra.mrb[0].mxu0 %v2707
    %v2877 = vpop.f32.mrb[0].mxu0
    %v2878 = vadd.f32 %v2737, %v2877
    %v2879 = vpop.f32.mrb[0].mxu0
    %v2880 = vpop.f32.mrb[0].mxu0
    %v2881 = vadd.f32 %v2737, %v2880
    %v2882 = vpop.f32.mrb[0].mxu0
    %2883 = vmatprep.mubr.bf16.mxu0 0
    %2884 = vmatmul.mubr.bf16.gmra.mrb[0].mxu0 %v2708
    %v2885 = vpop.f32.mrb[0].mxu0
    %v2886 = vadd.f32 %v2737, %v2885
    %v2887 = vpop.f32.mrb[0].mxu0
    %v2888 = vpop.f32.mrb[0].mxu0
    %v2889 = vadd.f32 %v2737, %v2888
    %v2890 = vpop.f32.mrb[0].mxu0
    %2891 = vmatprep.mubr.bf16.mxu0 0
    %2892 = vmatmul.mubr.bf16.gmra.mrb[0].mxu0 %v2709
    %v2893 = vpop.f32.mrb[0].mxu0
    %v2894 = vadd.f32 %v2737, %v2893
    %v2895 = vpop.f32.mrb[0].mxu0
    %v2896 = vpop.f32.mrb[0].mxu0
    %v2897 = vadd.f32 %v2737, %v2896
    %v2898 = vpop.f32.mrb[0].mxu0
    %2899 = vmatprep.mubr.bf16.mxu0 0
    %2900 = vmatmul.mubr.bf16.gmra.mrb[0].mxu0 %v2710
    %v2901 = vpop.f32.mrb[0].mxu0
    %v2902 = vadd.f32 %v2737, %v2901
    %v2903 = vpop.f32.mrb[0].mxu0
    %v2904 = vpop.f32.mrb[0].mxu0
    %v2905 = vadd.f32 %v2737, %v2904
    %v2906 = vpop.f32.mrb[0].mxu0
    %2907 = vmatprep.mubr.bf16.mxu0 0
    %2908 = vmatmul.mubr.bf16.gmra.mrb[0].mxu0 %v2711
    %v2909 = vpop.f32.mrb[0].mxu0
    %v2910 = vadd.f32 %v2737, %v2909
    %v2911 = vpop.f32.mrb[0].mxu0
    %v2912 = vpop.f32.mrb[0].mxu0
    %v2913 = vadd.f32 %v2737, %v2912
    %v2914 = vpop.f32.mrb[0].mxu0
    %2915 = vmatprep.mubr.bf16.mxu0 0
    %2916 = vmatmul.mubr.bf16.gmra.mrb[0].mxu0 %v2712
    %v2917 = vpop.f32.mrb[0].mxu0
    %v2918 = vadd.f32 %v2737, %v2917
    %v2919 = vpop.f32.mrb[0].mxu0
    %v2920 = vpop.f32.mrb[0].mxu0
    %v2921 = vadd.f32 %v2737, %v2920
    %v2922 = vpop.f32.mrb[0].mxu0
    %2923 = vmatprep.mubr.bf16.mxu0 0
    %2924 = vmatmul.mubr.bf16.gmra.mrb[0].mxu0 %v2713
    %v2925 = vpop.f32.mrb[0].mxu0
    %v2926 = vadd.f32 %v2737, %v2925
    %v2927 = vpop.f32.mrb[0].mxu0
    %v2928 = vpop.f32.mrb[0].mxu0
    %v2929 = vadd.f32 %v2737, %v2928
    %v2930 = vpop.f32.mrb[0].mxu0
    %2931 = vmatprep.mubr.bf16.mxu0 0
    %2932 = vmatmul.mubr.bf16.gmra.mrb[0].mxu0 %v2714
    %v2933 = vpop.f32.mrb[0].mxu0
    %v2934 = vadd.f32 %v2737, %v2933
    %v2935 = vpop.f32.mrb[0].mxu0
    %v2936 = vpop.f32.mrb[0].mxu0
    %v2937 = vadd.f32 %v2737, %v2936
    %v2938 = vpop.f32.mrb[0].mxu0
    %2939 = vmatprep.mubr.bf16.mxu0 0
    %2940 = vmatmul.mubr.bf16.gmra.mrb[0].mxu0 %v2715
    %v2941 = vpop.f32.mrb[0].mxu0
    %v2942 = vadd.f32 %v2737, %v2941
    %v2943 = vpop.f32.mrb[0].mxu0
    %v2944 = vpop.f32.mrb[0].mxu0
    %v2945 = vadd.f32 %v2737, %v2944
    %v2946 = vpop.f32.mrb[0].mxu0
    %2947 = vdwg.mxu0
    %v3012 = vunpack.c.l.b16 %v603
    %v3013 = vunpack.c.l.b16 %v604
    %v3014 = vunpack.c.l.b16 %v605
    %v3015 = vunpack.c.l.b16 %v606
    %v3016 = vunpack.c.l.b16 %v607
    %v3017 = vunpack.c.l.b16 %v608
    %v3018 = vunpack.c.l.b16 %v609
    %v3019 = vunpack.c.l.b16 %v610
    %v3020 = vunpack.c.l.b16 %v611
    %v3021 = vunpack.c.l.b16 %v612
    %v3022 = vunpack.c.l.b16 %v613
    %v3023 = vunpack.c.l.b16 %v614
    %v3024 = vunpack.c.l.b16 %v615
    %v3025 = vunpack.c.l.b16 %v616
    %v3026 = vunpack.c.l.b16 %v617
    %v3027 = vunpack.c.l.b16 %v618
    %v3028 = vunpack.c.l.b16 %v619
    %v3029 = vunpack.c.l.b16 %v620
    %v3030 = vunpack.c.l.b16 %v621
    %v3031 = vunpack.c.l.b16 %v622
    %v3032 = vunpack.c.l.b16 %v623
    %v3033 = vunpack.c.l.b16 %v624
    %v3034 = vunpack.c.l.b16 %v625
    %v3035 = vunpack.c.l.b16 %v626
    %v3036 = vunpack.c.l.b16 %v627
    %v3037 = vunpack.c.l.b16 %v628
    %v3038 = vunpack.c.l.b16 %v629
    %v3039 = vunpack.c.l.b16 %v630
    %v3040 = vunpack.c.l.b16 %v631
    %v3041 = vunpack.c.l.b16 %v632
    %v3042 = vunpack.c.l.b16 %v633
    %v3043 = vunpack.c.l.b16 %v634
    %v3044 = vunpack.c.l.b16 %v635
    %v3045 = vunpack.c.l.b16 %v636
    %v3046 = vunpack.c.l.b16 %v637
    %v3047 = vunpack.c.l.b16 %v638
    %v3048 = vunpack.c.l.b16 %v639
    %v3049 = vunpack.c.l.b16 %v640
    %v3050 = vunpack.c.l.b16 %v641
    %v3051 = vunpack.c.l.b16 %v642
    %v3052 = vunpack.c.l.b16 %v643
    %v3053 = vunpack.c.l.b16 %v644
    %v3054 = vunpack.c.l.b16 %v645
    %v3055 = vunpack.c.l.b16 %v646
    %v3056 = vunpack.c.l.b16 %v647
    %v3057 = vunpack.c.l.b16 %v648
    %v3058 = vunpack.c.l.b16 %v649
    %v3059 = vunpack.c.l.b16 %v650
    %v3060 = vunpack.c.l.b16 %v651
    %v3061 = vunpack.c.l.b16 %v652
    %v3062 = vunpack.c.l.b16 %v653
    %v3063 = vunpack.c.l.b16 %v654
    %v3064 = vunpack.c.l.b16 %v655
    %v3065 = vunpack.c.l.b16 %v656
    %v3066 = vunpack.c.l.b16 %v657
    %v3067 = vunpack.c.l.b16 %v658
    %v3068 = vunpack.c.l.b16 %v659
    %v3069 = vunpack.c.l.b16 %v660
    %v3070 = vunpack.c.l.b16 %v661
    %v3071 = vunpack.c.l.b16 %v662
    %v3072 = vunpack.c.l.b16 %v663
    %v3073 = vunpack.c.l.b16 %v664
    %v3074 = vunpack.c.l.b16 %v665
    %v3075 = vunpack.c.l.b16 %v666
    %v3076 = vpack.c.b16 %v3013, %v3012
    %v3077 = vpack.c.b16 %v3015, %v3014
    %v3078 = vpack.c.b16 %v3017, %v3016
    %v3079 = vpack.c.b16 %v3019, %v3018
    %v3080 = vpack.c.b16 %v3021, %v3020
    %v3081 = vpack.c.b16 %v3023, %v3022
    %v3082 = vpack.c.b16 %v3025, %v3024
    %v3083 = vpack.c.b16 %v3027, %v3026
    %v3084 = vpack.c.b16 %v3029, %v3028
    %v3085 = vpack.c.b16 %v3031, %v3030
    %v3086 = vpack.c.b16 %v3033, %v3032
    %v3087 = vpack.c.b16 %v3035, %v3034
    %v3088 = vpack.c.b16 %v3037, %v3036
    %v3089 = vpack.c.b16 %v3039, %v3038
    %v3090 = vpack.c.b16 %v3041, %v3040
    %v3091 = vpack.c.b16 %v3043, %v3042
    %v3092 = vpack.c.b16 %v3045, %v3044
    %v3093 = vpack.c.b16 %v3047, %v3046
    %v3094 = vpack.c.b16 %v3049, %v3048
    %v3095 = vpack.c.b16 %v3051, %v3050
    %v3096 = vpack.c.b16 %v3053, %v3052
    %v3097 = vpack.c.b16 %v3055, %v3054
    %v3098 = vpack.c.b16 %v3057, %v3056
    %v3099 = vpack.c.b16 %v3059, %v3058
    %v3100 = vpack.c.b16 %v3061, %v3060
    %v3101 = vpack.c.b16 %v3063, %v3062
    %v3102 = vpack.c.b16 %v3065, %v3064
    %v3103 = vpack.c.b16 %v3067, %v3066
    %v3104 = vpack.c.b16 %v3069, %v3068
    %v3105 = vpack.c.b16 %v3071, %v3070
    %v3106 = vpack.c.b16 %v3073, %v3072
    %v3107 = vpack.c.b16 %v3075, %v3074
    %3140 = vmatprep.subr.bf16.mxu0 0
    %3141 = vmatpush1.bf16.msra.mxu0 %v3076
    %3142 = vmatprep.subr.bf16.mxu0 0
    %3143 = vmatpush1.bf16.msra.mxu0 %v3077
    %3144 = vmatprep.subr.bf16.mxu0 0
    %3145 = vmatpush1.bf16.msra.mxu0 %v3078
    %3146 = vmatprep.subr.bf16.mxu0 0
    %3147 = vmatpush1.bf16.msra.mxu0 %v3079
    %3148 = vmatprep.subr.bf16.mxu0 0
    %3149 = vmatpush1.bf16.msra.mxu0 %v3080
    %3150 = vmatprep.subr.bf16.mxu0 0
    %3151 = vmatpush1.bf16.msra.mxu0 %v3081
    %3152 = vmatprep.subr.bf16.mxu0 0
    %3153 = vmatpush1.bf16.msra.mxu0 %v3082
    %3154 = vmatprep.subr.bf16.mxu0 0
    %3155 = vmatpush1.bf16.msra.mxu0 %v3083
    %3156 = vmatprep.subr.bf16.mxu0 0
    %3157 = vmatpush1.bf16.msra.mxu0 %v3084
    %3158 = vmatprep.subr.bf16.mxu0 0
    %3159 = vmatpush1.bf16.msra.mxu0 %v3085
    %3160 = vmatprep.subr.bf16.mxu0 0
    %3161 = vmatpush1.bf16.msra.mxu0 %v3086
    %3162 = vmatprep.subr.bf16.mxu0 0
    %3163 = vmatpush1.bf16.msra.mxu0 %v3087
    %3164 = vmatprep.subr.bf16.mxu0 0
    %3165 = vmatpush1.bf16.msra.mxu0 %v3088
    %3166 = vmatprep.subr.bf16.mxu0 0
    %3167 = vmatpush1.bf16.msra.mxu0 %v3089
    %3168 = vmatprep.subr.bf16.mxu0 0
    %3169 = vmatpush1.bf16.msra.mxu0 %v3090
    %3170 = vmatprep.subr.bf16.mxu0 0
    %3171 = vmatpush1.bf16.msra.mxu0 %v3091
    %3172 = vmatprep.mubr.bf16.mxu0 %v540
    %3173 = vmatmul.mubr.bf16.gmra.mrb[0].mxu0 %v539
    %v3174 = vpop.f32.mrb[0].mxu0
    %v3175 = vadd.f32 %v2822, %v3174
    %v3176 = vpop.f32.mrb[0].mxu0
    %v3177 = vpop.f32.mrb[0].mxu0
    %v3178 = vadd.f32 %v2825, %v3177
    %v3179 = vpop.f32.mrb[0].mxu0
    %3180 = vmatprep.mubr.bf16.mxu0 %v544
    %3181 = vmatmul.mubr.bf16.gmra.mrb[0].mxu0 %v543
    %v3182 = vpop.f32.mrb[0].mxu0
    %v3183 = vadd.f32 %v2830, %v3182
    %v3184 = vpop.f32.mrb[0].mxu0
    %v3185 = vpop.f32.mrb[0].mxu0
    %v3186 = vadd.f32 %v2833, %v3185
    %v3187 = vpop.f32.mrb[0].mxu0
    %3188 = vmatprep.mubr.bf16.mxu0 %v548
    %3189 = vmatmul.mubr.bf16.gmra.mrb[0].mxu0 %v547
    %v3190 = vpop.f32.mrb[0].mxu0
    %v3191 = vadd.f32 %v2838, %v3190
    %v3192 = vpop.f32.mrb[0].mxu0
    %v3193 = vpop.f32.mrb[0].mxu0
    %v3194 = vadd.f32 %v2841, %v3193
    %v3195 = vpop.f32.mrb[0].mxu0
    %3196 = vmatprep.mubr.bf16.mxu0 %v552
    %3197 = vmatmul.mubr.bf16.gmra.mrb[0].mxu0 %v551
    %v3198 = vpop.f32.mrb[0].mxu0
    %v3199 = vadd.f32 %v2846, %v3198
    %v3200 = vpop.f32.mrb[0].mxu0
    %v3201 = vpop.f32.mrb[0].mxu0
    %v3202 = vadd.f32 %v2849, %v3201
    %v3203 = vpop.f32.mrb[0].mxu0
    %3204 = vmatprep.mubr.bf16.mxu0 %v556
    %3205 = vmatmul.mubr.bf16.gmra.mrb[0].mxu0 %v555
    %v3206 = vpop.f32.mrb[0].mxu0
    %v3207 = vadd.f32 %v2854, %v3206
    %v3208 = vpop.f32.mrb[0].mxu0
    %v3209 = vpop.f32.mrb[0].mxu0
    %v3210 = vadd.f32 %v2857, %v3209
    %v3211 = vpop.f32.mrb[0].mxu0
    %3212 = vmatprep.mubr.bf16.mxu0 %v560
    %3213 = vmatmul.mubr.bf16.gmra.mrb[0].mxu0 %v559
    %v3214 = vpop.f32.mrb[0].mxu0
    %v3215 = vadd.f32 %v2862, %v3214
    %v3216 = vpop.f32.mrb[0].mxu0
    %v3217 = vpop.f32.mrb[0].mxu0
    %v3218 = vadd.f32 %v2865, %v3217
    %v3219 = vpop.f32.mrb[0].mxu0
    %3220 = vmatprep.mubr.bf16.mxu0 %v564
    %3221 = vmatmul.mubr.bf16.gmra.mrb[0].mxu0 %v563
    %v3222 = vpop.f32.mrb[0].mxu0
    %v3223 = vadd.f32 %v2870, %v3222
    %v3224 = vpop.f32.mrb[0].mxu0
    %v3225 = vpop.f32.mrb[0].mxu0
    %v3226 = vadd.f32 %v2873, %v3225
    %v3227 = vpop.f32.mrb[0].mxu0
    %3228 = vmatprep.mubr.bf16.mxu0 %v568
    %3229 = vmatmul.mubr.bf16.gmra.mrb[0].mxu0 %v567
    %v3230 = vpop.f32.mrb[0].mxu0
    %v3231 = vadd.f32 %v2878, %v3230
    %v3232 = vpop.f32.mrb[0].mxu0
    %v3233 = vpop.f32.mrb[0].mxu0
    %v3234 = vadd.f32 %v2881, %v3233
    %v3235 = vpop.f32.mrb[0].mxu0
    %3236 = vmatprep.mubr.bf16.mxu0 %v572
    %3237 = vmatmul.mubr.bf16.gmra.mrb[0].mxu0 %v571
    %v3238 = vpop.f32.mrb[0].mxu0
    %v3239 = vadd.f32 %v2886, %v3238
    %v3240 = vpop.f32.mrb[0].mxu0
    %v3241 = vpop.f32.mrb[0].mxu0
    %v3242 = vadd.f32 %v2889, %v3241
    %v3243 = vpop.f32.mrb[0].mxu0
    %3244 = vmatprep.mubr.bf16.mxu0 %v576
    %3245 = vmatmul.mubr.bf16.gmra.mrb[0].mxu0 %v575
    %v3246 = vpop.f32.mrb[0].mxu0
    %v3247 = vadd.f32 %v2894, %v3246
    %v3248 = vpop.f32.mrb[0].mxu0
    %v3249 = vpop.f32.mrb[0].mxu0
    %v3250 = vadd.f32 %v2897, %v3249
    %v3251 = vpop.f32.mrb[0].mxu0
    %3252 = vmatprep.mubr.bf16.mxu0 %v580
    %3253 = vmatmul.mubr.bf16.gmra.mrb[0].mxu0 %v579
    %v3254 = vpop.f32.mrb[0].mxu0
    %v3255 = vadd.f32 %v2902, %v3254
    %v3256 = vpop.f32.mrb[0].mxu0
    %v3257 = vpop.f32.mrb[0].mxu0
    %v3258 = vadd.f32 %v2905, %v3257
    %v3259 = vpop.f32.mrb[0].mxu0
    %3260 = vmatprep.mubr.bf16.mxu0 %v584
    %3261 = vmatmul.mubr.bf16.gmra.mrb[0].mxu0 %v583
    %v3262 = vpop.f32.mrb[0].mxu0
    %v3263 = vadd.f32 %v2910, %v3262
    %v3264 = vpop.f32.mrb[0].mxu0
    %v3265 = vpop.f32.mrb[0].mxu0
    %v3266 = vadd.f32 %v2913, %v3265
    %v3267 = vpop.f32.mrb[0].mxu0
    %3268 = vmatprep.mubr.bf16.mxu0 %v588
    %3269 = vmatmul.mubr.bf16.gmra.mrb[0].mxu0 %v587
    %v3270 = vpop.f32.mrb[0].mxu0
    %v3271 = vadd.f32 %v2918, %v3270
    %v3272 = vpop.f32.mrb[0].mxu0
    %v3273 = vpop.f32.mrb[0].mxu0
    %v3274 = vadd.f32 %v2921, %v3273
    %v3275 = vpop.f32.mrb[0].mxu0
    %3276 = vmatprep.mubr.bf16.mxu0 %v592
    %3277 = vmatmul.mubr.bf16.gmra.mrb[0].mxu0 %v591
    %v3278 = vpop.f32.mrb[0].mxu0
    %v3279 = vadd.f32 %v2926, %v3278
    %v3280 = vpop.f32.mrb[0].mxu0
    %v3281 = vpop.f32.mrb[0].mxu0
    %v3282 = vadd.f32 %v2929, %v3281
    %v3283 = vpop.f32.mrb[0].mxu0
    %3284 = vmatprep.mubr.bf16.mxu0 %v596
    %3285 = vmatmul.mubr.bf16.gmra.mrb[0].mxu0 %v595
    %v3286 = vpop.f32.mrb[0].mxu0
    %v3287 = vadd.f32 %v2934, %v3286
    %v3288 = vpop.f32.mrb[0].mxu0
    %v3289 = vpop.f32.mrb[0].mxu0
    %v3290 = vadd.f32 %v2937, %v3289
    %v3291 = vpop.f32.mrb[0].mxu0
    %3292 = vmatprep.mubr.bf16.mxu0 %v600
    %3293 = vmatmul.mubr.bf16.gmra.mrb[0].mxu0 %v599
    %v3294 = vpop.f32.mrb[0].mxu0
    %v3295 = vadd.f32 %v2942, %v3294
    %v3296 = vpop.f32.mrb[0].mxu0
    %v3297 = vpop.f32.mrb[0].mxu0
    %v3298 = vadd.f32 %v2945, %v3297
    %v3299 = vpop.f32.mrb[0].mxu0
    %3300 = vdwg.mxu0
    %3301 = vmatprep.subr.bf16.mxu0 0
    %3302 = vmatpush1.bf16.msra.mxu0 %v3092
    %3303 = vmatprep.subr.bf16.mxu0 0
    %3304 = vmatpush1.bf16.msra.mxu0 %v3093
    %3305 = vmatprep.subr.bf16.mxu0 0
    %3306 = vmatpush1.bf16.msra.mxu0 %v3094
    %3307 = vmatprep.subr.bf16.mxu0 0
    %3308 = vmatpush1.bf16.msra.mxu0 %v3095
    %3309 = vmatprep.subr.bf16.mxu0 0
    %3310 = vmatpush1.bf16.msra.mxu0 %v3096
    %3311 = vmatprep.subr.bf16.mxu0 0
    %3312 = vmatpush1.bf16.msra.mxu0 %v3097
    %3313 = vmatprep.subr.bf16.mxu0 0
    %3314 = vmatpush1.bf16.msra.mxu0 %v3098
    %3315 = vmatprep.subr.bf16.mxu0 0
    %3316 = vmatpush1.bf16.msra.mxu0 %v3099
    %3317 = vmatprep.subr.bf16.mxu0 0
    %3318 = vmatpush1.bf16.msra.mxu0 %v3100
    %3319 = vmatprep.subr.bf16.mxu0 0
    %3320 = vmatpush1.bf16.msra.mxu0 %v3101
    %3321 = vmatprep.subr.bf16.mxu0 0
    %3322 = vmatpush1.bf16.msra.mxu0 %v3102
    %3323 = vmatprep.subr.bf16.mxu0 0
    %3324 = vmatpush1.bf16.msra.mxu0 %v3103
    %3325 = vmatprep.subr.bf16.mxu0 0
    %3326 = vmatpush1.bf16.msra.mxu0 %v3104
    %3327 = vmatprep.subr.bf16.mxu0 0
    %3328 = vmatpush1.bf16.msra.mxu0 %v3105
    %3329 = vmatprep.subr.bf16.mxu0 0
    %3330 = vmatpush1.bf16.msra.mxu0 %v3106
    %3331 = vmatprep.subr.bf16.mxu0 0
    %3332 = vmatpush1.bf16.msra.mxu0 %v3107
    %3333 = vmatprep.mubr.bf16.mxu0 %v542
    %3334 = vmatmul.mubr.bf16.gmra.mrb[0].mxu0 %v541
    %v3335 = vpop.f32.mrb[0].mxu0
    %v3336 = vadd.f32 %v3175, %v3335
    %v3337 = vpop.f32.mrb[0].mxu0
    %v3338 = vpop.f32.mrb[0].mxu0
    %v3339 = vadd.f32 %v3178, %v3338
    %v3340 = vpop.f32.mrb[0].mxu0
    %3341 = vmatprep.mubr.bf16.mxu0 %v546
    %3342 = vmatmul.mubr.bf16.gmra.mrb[0].mxu0 %v545
    %v3343 = vpop.f32.mrb[0].mxu0
    %v3344 = vadd.f32 %v3183, %v3343
    %v3345 = vpop.f32.mrb[0].mxu0
    %v3346 = vpop.f32.mrb[0].mxu0
    %v3347 = vadd.f32 %v3186, %v3346
    %v3348 = vpop.f32.mrb[0].mxu0
    %3349 = vmatprep.mubr.bf16.mxu0 %v550
    %3350 = vmatmul.mubr.bf16.gmra.mrb[0].mxu0 %v549
    %v3351 = vpop.f32.mrb[0].mxu0
    %v3352 = vadd.f32 %v3191, %v3351
    %v3353 = vpop.f32.mrb[0].mxu0
    %v3354 = vpop.f32.mrb[0].mxu0
    %v3355 = vadd.f32 %v3194, %v3354
    %v3356 = vpop.f32.mrb[0].mxu0
    %3357 = vmatprep.mubr.bf16.mxu0 %v554
    %3358 = vmatmul.mubr.bf16.gmra.mrb[0].mxu0 %v553
    %v3359 = vpop.f32.mrb[0].mxu0
    %v3360 = vadd.f32 %v3199, %v3359
    %v3361 = vpop.f32.mrb[0].mxu0
    %v3362 = vpop.f32.mrb[0].mxu0
    %v3363 = vadd.f32 %v3202, %v3362
    %v3364 = vpop.f32.mrb[0].mxu0
    %3365 = vmatprep.mubr.bf16.mxu0 %v558
    %3366 = vmatmul.mubr.bf16.gmra.mrb[0].mxu0 %v557
    %v3367 = vpop.f32.mrb[0].mxu0
    %v3368 = vadd.f32 %v3207, %v3367
    %v3369 = vpop.f32.mrb[0].mxu0
    %v3370 = vpop.f32.mrb[0].mxu0
    %v3371 = vadd.f32 %v3210, %v3370
    %v3372 = vpop.f32.mrb[0].mxu0
    %3373 = vmatprep.mubr.bf16.mxu0 %v562
    %3374 = vmatmul.mubr.bf16.gmra.mrb[0].mxu0 %v561
    %v3375 = vpop.f32.mrb[0].mxu0
    %v3376 = vadd.f32 %v3215, %v3375
    %v3377 = vpop.f32.mrb[0].mxu0
    %v3378 = vpop.f32.mrb[0].mxu0
    %v3379 = vadd.f32 %v3218, %v3378
    %v3380 = vpop.f32.mrb[0].mxu0
    %3381 = vmatprep.mubr.bf16.mxu0 %v566
    %3382 = vmatmul.mubr.bf16.gmra.mrb[0].mxu0 %v565
    %v3383 = vpop.f32.mrb[0].mxu0
    %v3384 = vadd.f32 %v3223, %v3383
    %v3385 = vpop.f32.mrb[0].mxu0
    %v3386 = vpop.f32.mrb[0].mxu0
    %v3387 = vadd.f32 %v3226, %v3386
    %v3388 = vpop.f32.mrb[0].mxu0
    %3389 = vmatprep.mubr.bf16.mxu0 %v570
    %3390 = vmatmul.mubr.bf16.gmra.mrb[0].mxu0 %v569
    %v3391 = vpop.f32.mrb[0].mxu0
    %v3392 = vadd.f32 %v3231, %v3391
    %v3393 = vpop.f32.mrb[0].mxu0
    %v3394 = vpop.f32.mrb[0].mxu0
    %v3395 = vadd.f32 %v3234, %v3394
    %v3396 = vpop.f32.mrb[0].mxu0
    %3397 = vmatprep.mubr.bf16.mxu0 %v574
    %3398 = vmatmul.mubr.bf16.gmra.mrb[0].mxu0 %v573
    %v3399 = vpop.f32.mrb[0].mxu0
    %v3400 = vadd.f32 %v3239, %v3399
    %v3401 = vpop.f32.mrb[0].mxu0
    %v3402 = vpop.f32.mrb[0].mxu0
    %v3403 = vadd.f32 %v3242, %v3402
    %v3404 = vpop.f32.mrb[0].mxu0
    %3405 = vmatprep.mubr.bf16.mxu0 %v578
    %3406 = vmatmul.mubr.bf16.gmra.mrb[0].mxu0 %v577
    %v3407 = vpop.f32.mrb[0].mxu0
    %v3408 = vadd.f32 %v3247, %v3407
    %v3409 = vpop.f32.mrb[0].mxu0
    %v3410 = vpop.f32.mrb[0].mxu0
    %v3411 = vadd.f32 %v3250, %v3410
    %v3412 = vpop.f32.mrb[0].mxu0
    %3413 = vmatprep.mubr.bf16.mxu0 %v582
    %3414 = vmatmul.mubr.bf16.gmra.mrb[0].mxu0 %v581
    %v3415 = vpop.f32.mrb[0].mxu0
    %v3416 = vadd.f32 %v3255, %v3415
    %v3417 = vpop.f32.mrb[0].mxu0
    %v3418 = vpop.f32.mrb[0].mxu0
    %v3419 = vadd.f32 %v3258, %v3418
    %v3420 = vpop.f32.mrb[0].mxu0
    %3421 = vmatprep.mubr.bf16.mxu0 %v586
    %3422 = vmatmul.mubr.bf16.gmra.mrb[0].mxu0 %v585
    %v3423 = vpop.f32.mrb[0].mxu0
    %v3424 = vadd.f32 %v3263, %v3423
    %v3425 = vpop.f32.mrb[0].mxu0
    %v3426 = vpop.f32.mrb[0].mxu0
    %v3427 = vadd.f32 %v3266, %v3426
    %v3428 = vpop.f32.mrb[0].mxu0
    %3429 = vmatprep.mubr.bf16.mxu0 %v590
    %3430 = vmatmul.mubr.bf16.gmra.mrb[0].mxu0 %v589
    %v3431 = vpop.f32.mrb[0].mxu0
    %v3432 = vadd.f32 %v3271, %v3431
    %v3433 = vpop.f32.mrb[0].mxu0
    %v3434 = vpop.f32.mrb[0].mxu0
    %v3435 = vadd.f32 %v3274, %v3434
    %v3436 = vpop.f32.mrb[0].mxu0
    %3437 = vmatprep.mubr.bf16.mxu0 %v594
    %3438 = vmatmul.mubr.bf16.gmra.mrb[0].mxu0 %v593
    %v3439 = vpop.f32.mrb[0].mxu0
    %v3440 = vadd.f32 %v3279, %v3439
    %v3441 = vpop.f32.mrb[0].mxu0
    %v3442 = vpop.f32.mrb[0].mxu0
    %v3443 = vadd.f32 %v3282, %v3442
    %v3444 = vpop.f32.mrb[0].mxu0
    %3445 = vmatprep.mubr.bf16.mxu0 %v598
    %3446 = vmatmul.mubr.bf16.gmra.mrb[0].mxu0 %v597
    %v3447 = vpop.f32.mrb[0].mxu0
    %v3448 = vadd.f32 %v3287, %v3447
    %v3449 = vpop.f32.mrb[0].mxu0
    %v3450 = vpop.f32.mrb[0].mxu0
    %v3451 = vadd.f32 %v3290, %v3450
    %v3452 = vpop.f32.mrb[0].mxu0
    %3453 = vmatprep.mubr.bf16.mxu0 %v602
    %3454 = vmatmul.mubr.bf16.gmra.mrb[0].mxu0 %v601
    %v3455 = vpop.f32.mrb[0].mxu0
    %v3456 = vadd.f32 %v3295, %v3455
    %v3457 = vpop.f32.mrb[0].mxu0
    %v3458 = vpop.f32.mrb[0].mxu0
    %v3459 = vadd.f32 %v3298, %v3458
    %v3460 = vpop.f32.mrb[0].mxu0
    %3461 = vdwg.mxu0
    %v3462 = vpack.c.bf16 %v3339, %v3336
    %v3463 = vpack.c.bf16 %v3347, %v3344
    %v3464 = vpack.c.bf16 %v3355, %v3352
    %v3465 = vpack.c.bf16 %v3363, %v3360
    %v3466 = vpack.c.bf16 %v3371, %v3368
    %v3467 = vpack.c.bf16 %v3379, %v3376
    %v3468 = vpack.c.bf16 %v3387, %v3384
    %v3469 = vpack.c.bf16 %v3395, %v3392
    %v3470 = vpack.c.bf16 %v3403, %v3400
    %v3471 = vpack.c.bf16 %v3411, %v3408
    %v3472 = vpack.c.bf16 %v3419, %v3416
    %v3473 = vpack.c.bf16 %v3427, %v3424
    %v3474 = vpack.c.bf16 %v3435, %v3432
    %v3475 = vpack.c.bf16 %v3443, %v3440
    %v3476 = vpack.c.bf16 %v3451, %v3448
    %v3477 = vpack.c.bf16 %v3459, %v3456
    %v3494 = vunpack.c.l.b16 %v3462
    %v3495 = vunpack.c.h.b16 %v3462
    %v3496 = vunpack.c.l.b16 %v3463
    %v3497 = vunpack.c.h.b16 %v3463
    %v3498 = vunpack.c.l.b16 %v3464
    %v3499 = vunpack.c.h.b16 %v3464
    %v3500 = vunpack.c.l.b16 %v3465
    %v3501 = vunpack.c.h.b16 %v3465
    %v3502 = vunpack.c.l.b16 %v3466
    %v3503 = vunpack.c.h.b16 %v3466
    %v3504 = vunpack.c.l.b16 %v3467
    %v3505 = vunpack.c.h.b16 %v3467
    %v3506 = vunpack.c.l.b16 %v3468
    %v3507 = vunpack.c.h.b16 %v3468
    %v3508 = vunpack.c.l.b16 %v3469
    %v3509 = vunpack.c.h.b16 %v3469
    %v3510 = vunpack.c.l.b16 %v3470
    %v3511 = vunpack.c.h.b16 %v3470
    %v3512 = vunpack.c.l.b16 %v3471
    %v3513 = vunpack.c.h.b16 %v3471
    %v3514 = vunpack.c.l.b16 %v3472
    %v3515 = vunpack.c.h.b16 %v3472
    %v3516 = vunpack.c.l.b16 %v3473
    %v3517 = vunpack.c.h.b16 %v3473
    %v3518 = vunpack.c.l.b16 %v3474
    %v3519 = vunpack.c.h.b16 %v3474
    %v3520 = vunpack.c.l.b16 %v3475
    %v3521 = vunpack.c.h.b16 %v3475
    %v3522 = vunpack.c.l.b16 %v3476
    %v3523 = vunpack.c.h.b16 %v3476
    %v3524 = vunpack.c.l.b16 %v3477
    %v3525 = vunpack.c.h.b16 %v3477
    %v3526 = vpack.c.b16 %v3494, %v3494
    %v3527 = vpack.c.b16 %v3495, %v3495
    %v3528 = vpack.c.b16 %v3496, %v3496
    %v3529 = vpack.c.b16 %v3497, %v3497
    %v3530 = vpack.c.b16 %v3498, %v3498
    %v3531 = vpack.c.b16 %v3499, %v3499
    %v3532 = vpack.c.b16 %v3500, %v3500
    %v3533 = vpack.c.b16 %v3501, %v3501
    %v3534 = vpack.c.b16 %v3502, %v3502
    %v3535 = vpack.c.b16 %v3503, %v3503
    %v3536 = vpack.c.b16 %v3504, %v3504
    %v3537 = vpack.c.b16 %v3505, %v3505
    %v3538 = vpack.c.b16 %v3506, %v3506
    %v3539 = vpack.c.b16 %v3507, %v3507
    %v3540 = vpack.c.b16 %v3508, %v3508
    %v3541 = vpack.c.b16 %v3509, %v3509
    %v3542 = vpack.c.b16 %v3510, %v3510
    %v3543 = vpack.c.b16 %v3511, %v3511
    %v3544 = vpack.c.b16 %v3512, %v3512
    %v3545 = vpack.c.b16 %v3513, %v3513
    %v3546 = vpack.c.b16 %v3514, %v3514
    %v3547 = vpack.c.b16 %v3515, %v3515
    %v3548 = vpack.c.b16 %v3516, %v3516
    %v3549 = vpack.c.b16 %v3517, %v3517
    %v3550 = vpack.c.b16 %v3518, %v3518
    %v3551 = vpack.c.b16 %v3519, %v3519
    %v3552 = vpack.c.b16 %v3520, %v3520
    %v3553 = vpack.c.b16 %v3521, %v3521
    %v3554 = vpack.c.b16 %v3522, %v3522
    %v3555 = vpack.c.b16 %v3523, %v3523
    %v3556 = vpack.c.b16 %v3524, %v3524
    %v3557 = vpack.c.b16 %v3525, %v3525
    %3590 = vst [vmem:[#allocation2] sm:$0xf] %v3526
    %3591 = vst [vmem:[#allocation2 + $0x4] sm:$0xf] %v3527
    %3592 = vst [vmem:[#allocation2 + $0x8] sm:$0xf] %v3528
    %3593 = vst [vmem:[#allocation2 + $0xc] sm:$0xf] %v3529
    %3594 = vst [vmem:[#allocation2 + $0x10] sm:$0xf] %v3530
    %3595 = vst [vmem:[#allocation2 + $0x14] sm:$0xf] %v3531
    %3596 = vst [vmem:[#allocation2 + $0x18] sm:$0xf] %v3532
    %3597 = vst [vmem:[#allocation2 + $0x1c] sm:$0xf] %v3533
    %3598 = vst [vmem:[#allocation2 + $0x20] sm:$0xf] %v3534
    %3599 = vst [vmem:[#allocation2 + $0x24] sm:$0xf] %v3535
    %3600 = vst [vmem:[#allocation2 + $0x28] sm:$0xf] %v3536
    %3601 = vst [vmem:[#allocation2 + $0x2c] sm:$0xf] %v3537
    %3602 = vst [vmem:[#allocation2 + $0x30] sm:$0xf] %v3538
    %3603 = vst [vmem:[#allocation2 + $0x34] sm:$0xf] %v3539
    %3604 = vst [vmem:[#allocation2 + $0x38] sm:$0xf] %v3540
    %3605 = vst [vmem:[#allocation2 + $0x3c] sm:$0xf] %v3541
    %3606 = vst [vmem:[#allocation2 + $0x40] sm:$0xf] %v3542
    %3607 = vst [vmem:[#allocation2 + $0x44] sm:$0xf] %v3543
    %3608 = vst [vmem:[#allocation2 + $0x48] sm:$0xf] %v3544
    %3609 = vst [vmem:[#allocation2 + $0x4c] sm:$0xf] %v3545
    %3610 = vst [vmem:[#allocation2 + $0x50] sm:$0xf] %v3546
    %3611 = vst [vmem:[#allocation2 + $0x54] sm:$0xf] %v3547
    %3612 = vst [vmem:[#allocation2 + $0x58] sm:$0xf] %v3548
    %3613 = vst [vmem:[#allocation2 + $0x5c] sm:$0xf] %v3549
    %3614 = vst [vmem:[#allocation2 + $0x60] sm:$0xf] %v3550
    %3615 = vst [vmem:[#allocation2 + $0x64] sm:$0xf] %v3551
    %3616 = vst [vmem:[#allocation2 + $0x68] sm:$0xf] %v3552
    %3617 = vst [vmem:[#allocation2 + $0x6c] sm:$0xf] %v3553
    %3618 = vst [vmem:[#allocation2 + $0x70] sm:$0xf] %v3554
    %3619 = vst [vmem:[#allocation2 + $0x74] sm:$0xf] %v3555
    %3620 = vst [vmem:[#allocation2 + $0x78] sm:$0xf] %v3556
    %3621 = vst [vmem:[#allocation2 + $0x7c] sm:$0xf] %v3557
    // Predicated region
    $region22: #{word_char_embed.1} parent=1 // pred_check
      _
    $region23: #{word_char_embed.1} parent=1 // pred_check_branch
      %3623 = sbr.rel (0) target = $region25
    $region24: #{word_char_embed.1} parent=1 // pred_region
      %s3625 = ssub.s32 2048, 2048
      %3626 = vsyncadd [#allocation3], %s3625
      %s3627 = sshll.u32 [#allocation2], 4
      %s3628 = int_to_ptr.vmem [resolvable:$true] %s3627
      %3633 = dma.vmem_to_hbm [thread:$0]  %s3628, 2048, %s5, [#allocation3], 64, 64, 4
    $region25: #{word_char_embed.1} parent=1 // pred_fallthru
      _
    // Predicated region
    $region26: #{word_char_embed.1} parent=1 // pred_check
      _
    $region27: #{word_char_embed.1} parent=1 // pred_check_branch
      %3635 = sbr.rel (0) target = $region29
    $region28: #{word_char_embed.1} parent=1 // pred_region
      %3636 = dma.done [#allocation3], 2048
    $region29: #{word_char_embed.1} parent=1 // pred_fallthru
      _
    %3637 = vsyncpa [#allocation3], 1

</llo_original>
